<compile_context>
chip_gen: v6e
topology: v6e:2x2x1
jax: 0.10.0
libtpu: 0.0.40
codegen_flags: <defaults>
</compile_context>

<pallas_src>
import jax
import jax.numpy as jnp
from jax.experimental import pallas as pl
from jax.experimental.pallas import tpu as pltpu

KH = KW = 3
EPS = 1e-5


def _pad_hw(a):
    """Zero-pad (H, W, C) -> (H+2, W+2, C) entirely inside the kernel (no extra HBM pass)."""
    H, W, C = a.shape
    zrow = jnp.zeros((1, W, C), jnp.float32)
    a = jnp.concatenate([zrow, a, zrow], axis=0)          # (H+2, W, C)
    zcol = jnp.zeros((H + 2, 1, C), jnp.float32)
    return jnp.concatenate([zcol, a, zcol], axis=1)       # (H+2, W+2, C)


def _conv3x3_and_stats(a, w_ref, y_ref, stats_ref):
    """3x3 conv as a single K=9*C matmul + single-pass BN partial sums for this tile.

    a:         (H, W, C)        activation for this tile (already affine+ReLU'd if needed)
    w_ref:     (9*C, Cout)      conv taps stacked along the contraction axis
    y_ref:     (1, H, W, Cout)  raw (pre-BN) conv output block
    stats_ref: (1, 2, Cout)     per-tile [sum, sum-of-squares] over the H*W positions
    """
    H, W, C = a.shape
    Cout = w_ref.shape[-1]
    xp = _pad_hw(a)
    # Stack the 9 shifted windows along the contraction axis: one patch buffer, one MXU matmul
    # (K = 9*C) instead of nine tiny K=C matmuls.
    cols = [xp[kh:kh + H, kw:kw + W, :] for kh in range(KH) for kw in range(KW)]
    patches = jnp.concatenate(cols, axis=-1).reshape(H * W, KH * KW * C)
    acc = jnp.dot(patches, w_ref[...], preferred_element_type=jnp.float32)   # (H*W, Cout)

    # Single-pass batch-norm statistics (no second full read of acc in an epilogue).
    s1 = jnp.sum(acc, axis=0, keepdims=True)          # (1, Cout)
    s2 = jnp.sum(acc * acc, axis=0, keepdims=True)    # (1, Cout)

    y_ref[0] = acc.reshape(H, W, Cout)
    stats_ref[0] = jnp.concatenate([s1, s2], axis=0)  # (2, Cout)


def conv_stats_kernel(x_ref, w_ref, y_ref, stats_ref):
    """Conv1: raw conv output + BN partial sums."""
    _conv3x3_and_stats(x_ref[0], w_ref, y_ref, stats_ref)


def bnrelu_conv_stats_kernel(y_ref, scale_ref, shift_ref, w_ref, o_ref, stats_ref):
    """BN1 (finalized affine) + ReLU fused with Conv2: raw conv2 output + BN partial sums."""
    C = y_ref.shape[-1]
    a = y_ref[0] * scale_ref[...].reshape(1, 1, C) + shift_ref[...].reshape(1, 1, C)
    a = jnp.maximum(a, 0.0)
    _conv3x3_and_stats(a, w_ref, o_ref, stats_ref)


def bn_relu_kernel(y_ref, scale_ref, shift_ref, o_ref):
    """BN2 (finalized affine) + ReLU."""
    C = y_ref.shape[-1]
    o_ref[0] = jnp.maximum(
        y_ref[0] * scale_ref[...].reshape(1, 1, C) + shift_ref[...].reshape(1, 1, C), 0.0)


def _conv_stats_call(x, wk):
    N, H, W, Cin = x.shape
    Cout = wk.shape[-1]
    return pl.pallas_call(
        conv_stats_kernel,
        out_shape=(jax.ShapeDtypeStruct((N, H, W, Cout), jnp.float32),
                   jax.ShapeDtypeStruct((N, 2, Cout), jnp.float32)),
        grid=(N,),
        in_specs=[pl.BlockSpec((1, H, W, Cin), lambda n: (n, 0, 0, 0)),
                  pl.BlockSpec((KH * KW * Cin, Cout), lambda n: (0, 0))],
        out_specs=(pl.BlockSpec((1, H, W, Cout), lambda n: (n, 0, 0, 0)),
                   pl.BlockSpec((1, 2, Cout), lambda n: (n, 0, 0))),
        compiler_params=pltpu.CompilerParams(dimension_semantics=("parallel",)),
    )(x, wk)


def _bnrelu_conv_stats_call(y, scale, shift, wk):
    N, H, W, C = y.shape
    Cout = wk.shape[-1]
    return pl.pallas_call(
        bnrelu_conv_stats_kernel,
        out_shape=(jax.ShapeDtypeStruct((N, H, W, Cout), jnp.float32),
                   jax.ShapeDtypeStruct((N, 2, Cout), jnp.float32)),
        grid=(N,),
        in_specs=[pl.BlockSpec((1, H, W, C), lambda n: (n, 0, 0, 0)),
                  pl.BlockSpec((1, C), lambda n: (0, 0)),
                  pl.BlockSpec((1, C), lambda n: (0, 0)),
                  pl.BlockSpec((KH * KW * C, Cout), lambda n: (0, 0))],
        out_specs=(pl.BlockSpec((1, H, W, Cout), lambda n: (n, 0, 0, 0)),
                   pl.BlockSpec((1, 2, Cout), lambda n: (n, 0, 0))),
        compiler_params=pltpu.CompilerParams(dimension_semantics=("parallel",)),
    )(y, scale, shift, wk)


def _bn_relu_call(y, scale, shift):
    N, H, W, C = y.shape
    return pl.pallas_call(
        bn_relu_kernel,
        out_shape=jax.ShapeDtypeStruct((N, H, W, C), jnp.float32),
        grid=(N,),
        in_specs=[pl.BlockSpec((1, H, W, C), lambda n: (n, 0, 0, 0)),
                  pl.BlockSpec((1, C), lambda n: (0, 0)),
                  pl.BlockSpec((1, C), lambda n: (0, 0))],
        out_specs=pl.BlockSpec((1, H, W, C), lambda n: (n, 0, 0, 0)),
        compiler_params=pltpu.CompilerParams(dimension_semantics=("parallel",)),
    )(y, scale, shift)


def _finalize_bn(stats, gamma, beta, count):
    """Combine per-tile partial sums into BN training-mode affine (scale, shift)."""
    s = jnp.sum(stats, axis=0)                 # (2, Cout)
    mean = s[0] / count
    var = s[1] / count - mean * mean           # biased variance (PyTorch BN training forward)
    scale = gamma * jax.lax.rsqrt(var + EPS)
    shift = beta - mean * scale
    return scale.reshape(1, -1).astype(jnp.float32), shift.reshape(1, -1).astype(jnp.float32)


def _conv_weights_to_matmul(w_oihw):
    # (Cout, Cin, KH, KW) -> (KH, KW, Cin, Cout) -> (KH*KW*Cin, Cout); matches the in-kernel
    # (kh, kw, cin) stacking order of the patch buffer.
    cout, cin = w_oihw.shape[0], w_oihw.shape[1]
    return jnp.transpose(w_oihw, (2, 3, 1, 0)).reshape(KH * KW * cin, cout)


@jax.jit
def double_conv(x_nchw, w1, g1, b1, w2, g2, b2):
    N, Cin, H, W = x_nchw.shape
    count = N * H * W
    x = jnp.transpose(x_nchw, (0, 2, 3, 1))                 # NCHW -> NHWC
    wk1 = _conv_weights_to_matmul(w1)
    wk2 = _conv_weights_to_matmul(w2)

    y1, st1 = _conv_stats_call(x, wk1)                      # conv1 + partial BN stats
    sc1, sh1 = _finalize_bn(st1, g1, b1, count)
    y2, st2 = _bnrelu_conv_stats_call(y1, sc1, sh1, wk2)    # BN1+ReLU fused into conv2
    sc2, sh2 = _finalize_bn(st2, g2, b2, count)
    out = _bn_relu_call(y2, sc2, sh2)                       # BN2 + ReLU
    return jnp.transpose(out, (0, 3, 1, 2))                 # NHWC -> NCHW


if __name__ == "__main__":
    N, Cin, Cout, H, W = 2, 4, 8, 16, 16
    key = jax.random.PRNGKey(0)
    k = jax.random.split(key, 6)

    x = jax.random.normal(k[0], (N, Cin, H, W), jnp.float32)

    def kaiming_uniform(kk, cout, cin):
        # nn.init.kaiming_uniform_(nonlinearity='leaky_relu', a=0): gain = sqrt(2)
        fan_in = cin * KH * KW
        bound = (2.0 ** 0.5) * (3.0 / fan_in) ** 0.5
        return jax.random.uniform(kk, (cout, cin, KH, KW), jnp.float32, -bound, bound)

    w1 = kaiming_uniform(k[1], Cout, Cin)
    w2 = kaiming_uniform(k[2], Cout, Cout)
    # BatchNorm init: weight ~ N(1, 0.02), bias = 0
    g1 = 1.0 + 0.02 * jax.random.normal(k[3], (Cout,), jnp.float32)
    g2 = 1.0 + 0.02 * jax.random.normal(k[4], (Cout,), jnp.float32)
    b1 = jnp.zeros((Cout,), jnp.float32)
    b2 = jnp.zeros((Cout,), jnp.float32)

    out = jax.block_until_ready(double_conv(x, w1, g1, b1, w2, g2, b2))

    # Pure-JAX reference of the same semantics (conv -> BN(train, batch stats) -> ReLU, twice).
    def ref_block(x_nhwc, w, g, b):
        y = jax.lax.conv_general_dilated(
            x_nhwc, w, (1, 1), ((1, 1), (1, 1)),
            dimension_numbers=('NHWC', 'OIHW', 'NHWC'))
        m = y.mean(axis=(0, 1, 2))
        v = jnp.square(y - m).mean(axis=(0, 1, 2))
        return jnp.maximum((y - m) * jax.lax.rsqrt(v + EPS) * g + b, 0.0)

    xr = jnp.transpose(x, (0, 2, 3, 1))
    ref = jnp.transpose(ref_block(ref_block(xr, w1, g1, b1), w2, g2, b2), (0, 3, 1, 2))

    assert out.shape == (N, Cout, H, W), out.shape
    assert jnp.allclose(out, ref, atol=1e-4, rtol=1e-4), float(jnp.max(jnp.abs(out - ref)))
    print("KERNEL_OK")
</pallas_src>

<mosaic_0001>
module attributes {stable_mosaic.version = 11 : i64} {
  func.func @conv_stats_kernel(%arg0: i32, %arg1: memref<1x16x16x4xf32, #tpu.memory_space<vmem>>, %arg2: memref<36x8xf32, #tpu.memory_space<vmem>>, %arg3: memref<1x16x16x8xf32, #tpu.memory_space<vmem>>, %arg4: memref<1x2x8xf32, #tpu.memory_space<vmem>>) attributes {dimension_semantics = [#tpu.dimension_semantics<parallel>], iteration_bounds = array<i64: 2>, scalar_prefetch = 0 : i64, scratch_operands = 0 : i64, tpu.core_type = #tpu.core_type<tc>, window_params = [{transform_indices = @transform_0, window_bounds = array<i64: 1, 16, 16, 4>}, {pipeline_mode = #tpu.pipeline_mode<synchronous>, transform_indices = @transform_1, window_bounds = array<i64: 36, 8>}, {transform_indices = @transform_2, window_bounds = array<i64: 1, 16, 16, 8>}, {transform_indices = @transform_3, window_bounds = array<i64: 1, 2, 8>}]} {
    %c0 = arith.constant 0 : index
    %c0_0 = arith.constant 0 : index
    %c0_1 = arith.constant 0 : index
    %c0_2 = arith.constant 0 : index
    %0 = vector.load %arg1[%c0, %c0_0, %c0_1, %c0_2] : memref<1x16x16x4xf32, #tpu.memory_space<vmem>>, vector<1x16x16x4xf32>
    %1 = vector.shape_cast %0 : vector<1x16x16x4xf32> to vector<16x16x4xf32>
    %cst = arith.constant 0.000000e+00 : f32
    %2 = vector.broadcast %cst : f32 to vector<1x16x4xf32>
    %3 = tpu.concatenate %2, %1, %2 in 0 : vector<1x16x4xf32>, vector<16x16x4xf32>, vector<1x16x4xf32> -> vector<18x16x4xf32>
    %cst_3 = arith.constant 0.000000e+00 : f32
    %4 = vector.broadcast %cst_3 : f32 to vector<18x1x4xf32>
    %5 = tpu.concatenate %4, %3, %4 in 1 : vector<18x1x4xf32>, vector<18x16x4xf32>, vector<18x1x4xf32> -> vector<18x18x4xf32>
    %6 = vector.extract_strided_slice %5 {offsets = [0, 0, 0], sizes = [16, 16, 4], strides = [1, 1, 1]} : vector<18x18x4xf32> to vector<16x16x4xf32>
    %7 = vector.extract_strided_slice %5 {offsets = [0, 1, 0], sizes = [16, 16, 4], strides = [1, 1, 1]} : vector<18x18x4xf32> to vector<16x16x4xf32>
    %8 = vector.extract_strided_slice %5 {offsets = [0, 2, 0], sizes = [16, 16, 4], strides = [1, 1, 1]} : vector<18x18x4xf32> to vector<16x16x4xf32>
    %9 = vector.extract_strided_slice %5 {offsets = [1, 0, 0], sizes = [16, 16, 4], strides = [1, 1, 1]} : vector<18x18x4xf32> to vector<16x16x4xf32>
    %10 = vector.extract_strided_slice %5 {offsets = [1, 1, 0], sizes = [16, 16, 4], strides = [1, 1, 1]} : vector<18x18x4xf32> to vector<16x16x4xf32>
    %11 = vector.extract_strided_slice %5 {offsets = [1, 2, 0], sizes = [16, 16, 4], strides = [1, 1, 1]} : vector<18x18x4xf32> to vector<16x16x4xf32>
    %12 = vector.extract_strided_slice %5 {offsets = [2, 0, 0], sizes = [16, 16, 4], strides = [1, 1, 1]} : vector<18x18x4xf32> to vector<16x16x4xf32>
    %13 = vector.extract_strided_slice %5 {offsets = [2, 1, 0], sizes = [16, 16, 4], strides = [1, 1, 1]} : vector<18x18x4xf32> to vector<16x16x4xf32>
    %14 = vector.extract_strided_slice %5 {offsets = [2, 2, 0], sizes = [16, 16, 4], strides = [1, 1, 1]} : vector<18x18x4xf32> to vector<16x16x4xf32>
    %15 = tpu.concatenate %6, %7, %8, %9, %10, %11, %12, %13, %14 in 2 : vector<16x16x4xf32>, vector<16x16x4xf32>, vector<16x16x4xf32>, vector<16x16x4xf32>, vector<16x16x4xf32>, vector<16x16x4xf32>, vector<16x16x4xf32>, vector<16x16x4xf32>, vector<16x16x4xf32> -> vector<16x16x36xf32>
    %16 = vector.shape_cast %15 : vector<16x16x36xf32> to vector<256x36xf32>
    %c0_4 = arith.constant 0 : index
    %c0_5 = arith.constant 0 : index
    %17 = vector.load %arg2[%c0_4, %c0_5] : memref<36x8xf32, #tpu.memory_space<vmem>>, vector<36x8xf32>
    %cst_6 = arith.constant dense<0.000000e+00> : vector<256x8xf32>
    %18 = tpu.matmul %16, %17, %cst_6 {dimension_numbers = #tpu.dot_dimension_numbers<[1], [0], [0], [1], [0, 0, 1, 1], [], []>} : vector<256x36xf32>, vector<36x8xf32>, vector<256x8xf32> -> vector<256x8xf32>
    %cst_7 = arith.constant dense<0.000000e+00> : vector<8xf32>
    %19 = vector.multi_reduction <add>, %18, %cst_7 [0] : vector<256x8xf32> to vector<8xf32>
    %20 = vector.shape_cast %19 : vector<8xf32> to vector<1x8xf32>
    %21 = arith.mulf %18, %18 : vector<256x8xf32>
    %cst_8 = arith.constant dense<0.000000e+00> : vector<8xf32>
    %22 = vector.multi_reduction <add>, %21, %cst_8 [0] : vector<256x8xf32> to vector<8xf32>
    %23 = vector.shape_cast %22 : vector<8xf32> to vector<1x8xf32>
    %24 = vector.shape_cast %18 : vector<256x8xf32> to vector<16x16x8xf32>
    %c0_9 = arith.constant 0 : index
    %c0_10 = arith.constant 0 : index
    %c0_11 = arith.constant 0 : index
    %c0_12 = arith.constant 0 : index
    %25 = vector.load %arg3[%c0_9, %c0_10, %c0_11, %c0_12] : memref<1x16x16x8xf32, #tpu.memory_space<vmem>>, vector<1x16x16x8xf32>
    %26 = vector.shape_cast %25 : vector<1x16x16x8xf32> to vector<16x16x8xf32>
    %27 = vector.shape_cast %24 : vector<16x16x8xf32> to vector<1x16x16x8xf32>
    tpu.vector_store %arg3[%c0_9, %c0_10, %c0_11, %c0_12], %27 {strides = array<i32>} : memref<1x16x16x8xf32, #tpu.memory_space<vmem>>, vector<1x16x16x8xf32>,
    %28 = tpu.concatenate %20, %23 in 0 : vector<1x8xf32>, vector<1x8xf32> -> vector<2x8xf32>
    %c0_13 = arith.constant 0 : index
    %c0_14 = arith.constant 0 : index
    %c0_15 = arith.constant 0 : index
    %29 = vector.load %arg4[%c0_13, %c0_14, %c0_15] : memref<1x2x8xf32, #tpu.memory_space<vmem>>, vector<1x2x8xf32>
    %30 = vector.shape_cast %29 : vector<1x2x8xf32> to vector<2x8xf32>
    %31 = vector.shape_cast %28 : vector<2x8xf32> to vector<1x2x8xf32>
    tpu.vector_store %arg4[%c0_13, %c0_14, %c0_15], %31 {strides = array<i32>} : memref<1x2x8xf32, #tpu.memory_space<vmem>>, vector<1x2x8xf32>,
    return
  }
  func.func @transform_0(%arg0: i32) -> (i32, i32, i32, i32) {
    %c0_i32 = arith.constant 0 : i32
    %c0_i32_0 = arith.constant 0 : i32
    %c0_i32_1 = arith.constant 0 : i32
    %c0_i32_2 = arith.constant 0 : i32
    return %arg0, %c0_i32, %c0_i32_0, %c0_i32_1 : i32, i32, i32, i32
  }
  func.func @transform_1(%arg0: i32) -> (i32, i32) {
    %c0_i32 = arith.constant 0 : i32
    %c0_i32_0 = arith.constant 0 : i32
    %c0_i32_1 = arith.constant 0 : i32
    return %c0_i32, %c0_i32_0 : i32, i32
  }
  func.func @transform_2(%arg0: i32) -> (i32, i32, i32, i32) {
    %c0_i32 = arith.constant 0 : i32
    %c0_i32_0 = arith.constant 0 : i32
    %c0_i32_1 = arith.constant 0 : i32
    %c0_i32_2 = arith.constant 0 : i32
    return %arg0, %c0_i32, %c0_i32_0, %c0_i32_1 : i32, i32, i32, i32
  }
  func.func @transform_3(%arg0: i32) -> (i32, i32, i32) {
    %c0_i32 = arith.constant 0 : i32
    %c0_i32_0 = arith.constant 0 : i32
    %c0_i32_1 = arith.constant 0 : i32
    return %arg0, %c0_i32, %c0_i32_0 : i32, i32, i32
  }
}

module attributes {stable_mosaic.version = 11 : i64} {
  func.func @bn_relu_kernel(%arg0: i32, %arg1: memref<1x16x16x8xf32, #tpu.memory_space<vmem>>, %arg2: memref<1x8xf32, #tpu.memory_space<vmem>>, %arg3: memref<1x8xf32, #tpu.memory_space<vmem>>, %arg4: memref<1x16x16x8xf32, #tpu.memory_space<vmem>>) attributes {dimension_semantics = [#tpu.dimension_semantics<parallel>], iteration_bounds = array<i64: 2>, scalar_prefetch = 0 : i64, scratch_operands = 0 : i64, tpu.core_type = #tpu.core_type<tc>, window_params = [{transform_indices = @transform_0, window_bounds = array<i64: 1, 16, 16, 8>}, {pipeline_mode = #tpu.pipeline_mode<synchronous>, transform_indices = @transform_1, window_bounds = array<i64: 1, 8>}, {pipeline_mode = #tpu.pipeline_mode<synchronous>, transform_indices = @transform_2, window_bounds = array<i64: 1, 8>}, {transform_indices = @transform_3, window_bounds = array<i64: 1, 16, 16, 8>}]} {
    %c0 = arith.constant 0 : index
    %c0_0 = arith.constant 0 : index
    %c0_1 = arith.constant 0 : index
    %c0_2 = arith.constant 0 : index
    %0 = vector.load %arg1[%c0, %c0_0, %c0_1, %c0_2] : memref<1x16x16x8xf32, #tpu.memory_space<vmem>>, vector<1x16x16x8xf32>
    %1 = vector.shape_cast %0 : vector<1x16x16x8xf32> to vector<16x16x8xf32>
    %c0_3 = arith.constant 0 : index
    %c0_4 = arith.constant 0 : index
    %2 = vector.load %arg2[%c0_3, %c0_4] : memref<1x8xf32, #tpu.memory_space<vmem>>, vector<1x8xf32>
    %3 = vector.shape_cast %2 : vector<1x8xf32> to vector<1x1x8xf32>
    %4 = vector.broadcast %3 : vector<1x1x8xf32> to vector<16x16x8xf32>
    %5 = arith.mulf %1, %4 : vector<16x16x8xf32>
    %c0_5 = arith.constant 0 : index
    %c0_6 = arith.constant 0 : index
    %6 = vector.load %arg3[%c0_5, %c0_6] : memref<1x8xf32, #tpu.memory_space<vmem>>, vector<1x8xf32>
    %7 = vector.shape_cast %6 : vector<1x8xf32> to vector<1x1x8xf32>
    %8 = vector.broadcast %7 : vector<1x1x8xf32> to vector<16x16x8xf32>
    %9 = arith.addf %5, %8 : vector<16x16x8xf32>
    %cst = arith.constant 0.000000e+00 : f32
    %10 = vector.broadcast %cst : f32 to vector<16x16x8xf32>
    %11 = arith.maximumf %9, %10 : vector<16x16x8xf32>
    %c0_7 = arith.constant 0 : index
    %c0_8 = arith.constant 0 : index
    %c0_9 = arith.constant 0 : index
    %c0_10 = arith.constant 0 : index
    %12 = vector.load %arg4[%c0_7, %c0_8, %c0_9, %c0_10] : memref<1x16x16x8xf32, #tpu.memory_space<vmem>>, vector<1x16x16x8xf32>
    %13 = vector.shape_cast %12 : vector<1x16x16x8xf32> to vector<16x16x8xf32>
    %14 = vector.shape_cast %11 : vector<16x16x8xf32> to vector<1x16x16x8xf32>
    tpu.vector_store %arg4[%c0_7, %c0_8, %c0_9, %c0_10], %14 {strides = array<i32>} : memref<1x16x16x8xf32, #tpu.memory_space<vmem>>, vector<1x16x16x8xf32>,
    return
  }
  func.func @transform_0(%arg0: i32) -> (i32, i32, i32, i32) {
    %c0_i32 = arith.constant 0 : i32
    %c0_i32_0 = arith.constant 0 : i32
    %c0_i32_1 = arith.constant 0 : i32
    %c0_i32_2 = arith.constant 0 : i32
    return %arg0, %c0_i32, %c0_i32_0, %c0_i32_1 : i32, i32, i32, i32
  }
  func.func @transform_1(%arg0: i32) -> (i32, i32) {
    %c0_i32 = arith.constant 0 : i32
    %c0_i32_0 = arith.constant 0 : i32
    %c0_i32_1 = arith.constant 0 : i32
    return %c0_i32, %c0_i32_0 : i32, i32
  }
  func.func @transform_2(%arg0: i32) -> (i32, i32) {
    %c0_i32 = arith.constant 0 : i32
    %c0_i32_0 = arith.constant 0 : i32
    %c0_i32_1 = arith.constant 0 : i32
    return %c0_i32, %c0_i32_0 : i32, i32
  }
  func.func @transform_3(%arg0: i32) -> (i32, i32, i32, i32) {
    %c0_i32 = arith.constant 0 : i32
    %c0_i32_0 = arith.constant 0 : i32
    %c0_i32_1 = arith.constant 0 : i32
    %c0_i32_2 = arith.constant 0 : i32
    return %arg0, %c0_i32, %c0_i32_0, %c0_i32_1 : i32, i32, i32, i32
  }
}

module attributes {stable_mosaic.version = 11 : i64} {
  func.func @bnrelu_conv_stats_kernel(%arg0: i32, %arg1: memref<1x16x16x8xf32, #tpu.memory_space<vmem>>, %arg2: memref<1x8xf32, #tpu.memory_space<vmem>>, %arg3: memref<1x8xf32, #tpu.memory_space<vmem>>, %arg4: memref<72x8xf32, #tpu.memory_space<vmem>>, %arg5: memref<1x16x16x8xf32, #tpu.memory_space<vmem>>, %arg6: memref<1x2x8xf32, #tpu.memory_space<vmem>>) attributes {dimension_semantics = [#tpu.dimension_semantics<parallel>], iteration_bounds = array<i64: 2>, scalar_prefetch = 0 : i64, scratch_operands = 0 : i64, tpu.core_type = #tpu.core_type<tc>, window_params = [{transform_indices = @transform_0, window_bounds = array<i64: 1, 16, 16, 8>}, {pipeline_mode = #tpu.pipeline_mode<synchronous>, transform_indices = @transform_1, window_bounds = array<i64: 1, 8>}, {pipeline_mode = #tpu.pipeline_mode<synchronous>, transform_indices = @transform_2, window_bounds = array<i64: 1, 8>}, {pipeline_mode = #tpu.pipeline_mode<synchronous>, transform_indices = @transform_3, window_bounds = array<i64: 72, 8>}, {transform_indices = @transform_4, window_bounds = array<i64: 1, 16, 16, 8>}, {transform_indices = @transform_5, window_bounds = array<i64: 1, 2, 8>}]} {
    %c0 = arith.constant 0 : index
    %c0_0 = arith.constant 0 : index
    %c0_1 = arith.constant 0 : index
    %c0_2 = arith.constant 0 : index
    %0 = vector.load %arg1[%c0, %c0_0, %c0_1, %c0_2] : memref<1x16x16x8xf32, #tpu.memory_space<vmem>>, vector<1x16x16x8xf32>
    %1 = vector.shape_cast %0 : vector<1x16x16x8xf32> to vector<16x16x8xf32>
    %c0_3 = arith.constant 0 : index
    %c0_4 = arith.constant 0 : index
    %2 = vector.load %arg2[%c0_3, %c0_4] : memref<1x8xf32, #tpu.memory_space<vmem>>, vector<1x8xf32>
    %3 = vector.shape_cast %2 : vector<1x8xf32> to vector<1x1x8xf32>
    %4 = vector.broadcast %3 : vector<1x1x8xf32> to vector<16x16x8xf32>
    %5 = arith.mulf %1, %4 : vector<16x16x8xf32>
    %c0_5 = arith.constant 0 : index
    %c0_6 = arith.constant 0 : index
    %6 = vector.load %arg3[%c0_5, %c0_6] : memref<1x8xf32, #tpu.memory_space<vmem>>, vector<1x8xf32>
    %7 = vector.shape_cast %6 : vector<1x8xf32> to vector<1x1x8xf32>
    %8 = vector.broadcast %7 : vector<1x1x8xf32> to vector<16x16x8xf32>
    %9 = arith.addf %5, %8 : vector<16x16x8xf32>
    %cst = arith.constant 0.000000e+00 : f32
    %10 = vector.broadcast %cst : f32 to vector<16x16x8xf32>
    %11 = arith.maximumf %9, %10 : vector<16x16x8xf32>
    %cst_7 = arith.constant 0.000000e+00 : f32
    %12 = vector.broadcast %cst_7 : f32 to vector<1x16x8xf32>
    %13 = tpu.concatenate %12, %11, %12 in 0 : vector<1x16x8xf32>, vector<16x16x8xf32>, vector<1x16x8xf32> -> vector<18x16x8xf32>
    %cst_8 = arith.constant 0.000000e+00 : f32
    %14 = vector.broadcast %cst_8 : f32 to vector<18x1x8xf32>
    %15 = tpu.concatenate %14, %13, %14 in 1 : vector<18x1x8xf32>, vector<18x16x8xf32>, vector<18x1x8xf32> -> vector<18x18x8xf32>
    %16 = vector.extract_strided_slice %15 {offsets = [0, 0, 0], sizes = [16, 16, 8], strides = [1, 1, 1]} : vector<18x18x8xf32> to vector<16x16x8xf32>
    %17 = vector.extract_strided_slice %15 {offsets = [0, 1, 0], sizes = [16, 16, 8], strides = [1, 1, 1]} : vector<18x18x8xf32> to vector<16x16x8xf32>
    %18 = vector.extract_strided_slice %15 {offsets = [0, 2, 0], sizes = [16, 16, 8], strides = [1, 1, 1]} : vector<18x18x8xf32> to vector<16x16x8xf32>
    %19 = vector.extract_strided_slice %15 {offsets = [1, 0, 0], sizes = [16, 16, 8], strides = [1, 1, 1]} : vector<18x18x8xf32> to vector<16x16x8xf32>
    %20 = vector.extract_strided_slice %15 {offsets = [1, 1, 0], sizes = [16, 16, 8], strides = [1, 1, 1]} : vector<18x18x8xf32> to vector<16x16x8xf32>
    %21 = vector.extract_strided_slice %15 {offsets = [1, 2, 0], sizes = [16, 16, 8], strides = [1, 1, 1]} : vector<18x18x8xf32> to vector<16x16x8xf32>
    %22 = vector.extract_strided_slice %15 {offsets = [2, 0, 0], sizes = [16, 16, 8], strides = [1, 1, 1]} : vector<18x18x8xf32> to vector<16x16x8xf32>
    %23 = vector.extract_strided_slice %15 {offsets = [2, 1, 0], sizes = [16, 16, 8], strides = [1, 1, 1]} : vector<18x18x8xf32> to vector<16x16x8xf32>
    %24 = vector.extract_strided_slice %15 {offsets = [2, 2, 0], sizes = [16, 16, 8], strides = [1, 1, 1]} : vector<18x18x8xf32> to vector<16x16x8xf32>
    %25 = tpu.concatenate %16, %17, %18, %19, %20, %21, %22, %23, %24 in 2 : vector<16x16x8xf32>, vector<16x16x8xf32>, vector<16x16x8xf32>, vector<16x16x8xf32>, vector<16x16x8xf32>, vector<16x16x8xf32>, vector<16x16x8xf32>, vector<16x16x8xf32>, vector<16x16x8xf32> -> vector<16x16x72xf32>
    %26 = vector.shape_cast %25 : vector<16x16x72xf32> to vector<256x72xf32>
    %c0_9 = arith.constant 0 : index
    %c0_10 = arith.constant 0 : index
    %27 = vector.load %arg4[%c0_9, %c0_10] : memref<72x8xf32, #tpu.memory_space<vmem>>, vector<72x8xf32>
    %cst_11 = arith.constant dense<0.000000e+00> : vector<256x8xf32>
    %28 = tpu.matmul %26, %27, %cst_11 {dimension_numbers = #tpu.dot_dimension_numbers<[1], [0], [0], [1], [0, 0, 1, 1], [], []>} : vector<256x72xf32>, vector<72x8xf32>, vector<256x8xf32> -> vector<256x8xf32>
    %cst_12 = arith.constant dense<0.000000e+00> : vector<8xf32>
    %29 = vector.multi_reduction <add>, %28, %cst_12 [0] : vector<256x8xf32> to vector<8xf32>
    %30 = vector.shape_cast %29 : vector<8xf32> to vector<1x8xf32>
    %31 = arith.mulf %28, %28 : vector<256x8xf32>
    %cst_13 = arith.constant dense<0.000000e+00> : vector<8xf32>
    %32 = vector.multi_reduction <add>, %31, %cst_13 [0] : vector<256x8xf32> to vector<8xf32>
    %33 = vector.shape_cast %32 : vector<8xf32> to vector<1x8xf32>
    %34 = vector.shape_cast %28 : vector<256x8xf32> to vector<16x16x8xf32>
    %c0_14 = arith.constant 0 : index
    %c0_15 = arith.constant 0 : index
    %c0_16 = arith.constant 0 : index
    %c0_17 = arith.constant 0 : index
    %35 = vector.load %arg5[%c0_14, %c0_15, %c0_16, %c0_17] : memref<1x16x16x8xf32, #tpu.memory_space<vmem>>, vector<1x16x16x8xf32>
    %36 = vector.shape_cast %35 : vector<1x16x16x8xf32> to vector<16x16x8xf32>
    %37 = vector.shape_cast %34 : vector<16x16x8xf32> to vector<1x16x16x8xf32>
    tpu.vector_store %arg5[%c0_14, %c0_15, %c0_16, %c0_17], %37 {strides = array<i32>} : memref<1x16x16x8xf32, #tpu.memory_space<vmem>>, vector<1x16x16x8xf32>,
    %38 = tpu.concatenate %30, %33 in 0 : vector<1x8xf32>, vector<1x8xf32> -> vector<2x8xf32>
    %c0_18 = arith.constant 0 : index
    %c0_19 = arith.constant 0 : index
    %c0_20 = arith.constant 0 : index
    %39 = vector.load %arg6[%c0_18, %c0_19, %c0_20] : memref<1x2x8xf32, #tpu.memory_space<vmem>>, vector<1x2x8xf32>
    %40 = vector.shape_cast %39 : vector<1x2x8xf32> to vector<2x8xf32>
    %41 = vector.shape_cast %38 : vector<2x8xf32> to vector<1x2x8xf32>
    tpu.vector_store %arg6[%c0_18, %c0_19, %c0_20], %41 {strides = array<i32>} : memref<1x2x8xf32, #tpu.memory_space<vmem>>, vector<1x2x8xf32>,
    return
  }
  func.func @transform_0(%arg0: i32) -> (i32, i32, i32, i32) {
    %c0_i32 = arith.constant 0 : i32
    %c0_i32_0 = arith.constant 0 : i32
    %c0_i32_1 = arith.constant 0 : i32
    %c0_i32_2 = arith.constant 0 : i32
    return %arg0, %c0_i32, %c0_i32_0, %c0_i32_1 : i32, i32, i32, i32
  }
  func.func @transform_1(%arg0: i32) -> (i32, i32) {
    %c0_i32 = arith.constant 0 : i32
    %c0_i32_0 = arith.constant 0 : i32
    %c0_i32_1 = arith.constant 0 : i32
    return %c0_i32, %c0_i32_0 : i32, i32
  }
  func.func @transform_2(%arg0: i32) -> (i32, i32) {
    %c0_i32 = arith.constant 0 : i32
    %c0_i32_0 = arith.constant 0 : i32
    %c0_i32_1 = arith.constant 0 : i32
    return %c0_i32, %c0_i32_0 : i32, i32
  }
  func.func @transform_3(%arg0: i32) -> (i32, i32) {
    %c0_i32 = arith.constant 0 : i32
    %c0_i32_0 = arith.constant 0 : i32
    %c0_i32_1 = arith.constant 0 : i32
    return %c0_i32, %c0_i32_0 : i32, i32
  }
  func.func @transform_4(%arg0: i32) -> (i32, i32, i32, i32) {
    %c0_i32 = arith.constant 0 : i32
    %c0_i32_0 = arith.constant 0 : i32
    %c0_i32_1 = arith.constant 0 : i32
    %c0_i32_2 = arith.constant 0 : i32
    return %arg0, %c0_i32, %c0_i32_0, %c0_i32_1 : i32, i32, i32, i32
  }
  func.func @transform_5(%arg0: i32) -> (i32, i32, i32) {
    %c0_i32 = arith.constant 0 : i32
    %c0_i32_0 = arith.constant 0 : i32
    %c0_i32_1 = arith.constant 0 : i32
    return %arg0, %c0_i32, %c0_i32_0 : i32, i32, i32
  }
}

</mosaic_0001>

<llo_original>
// kernel: double_conv.5
$region0: #{double_conv.5}
  #allocation0 [shape = 'u32[]', space=smem, size = 0x4, offset = 0x4, fixed_abs, tag = 'smem constant byte address 0x4 - core index']
  #allocation1 [shape = 'u32[144,128]{1,0:T(1,128)}', space=vmem, size = 0x12000, scoped, tag = 'internal scratch']
  %s0 = inlined_call_operand.vmem [shape: f32[2,16,16,8], index: 0, kind: input, shape index: {}]
  %s1 = inlined_call_operand.vmem [shape: f32[1,8], index: 1, kind: input, shape index: {}]
  %s2 = inlined_call_operand.vmem [shape: f32[1,8], index: 2, kind: input, shape index: {}]
  %s3 = inlined_call_operand.vmem [shape: f32[2,16,16,8], index: 3, kind: output, shape index: {}]
  %s4 = sld [smem:[#allocation0]]
  $region45: #{double_conv.5} parent=0
    _
  %s6 = ssub.s32 1, %s4
  %s7 = scalar_select 0, %s6, %s4
  loop: start=0, step=1, limit=4
  $region2: #{double_conv.5} parent=0 // loop_pre_header
    _
  $region3: #{double_conv.5} parent=0 // loop_header
    %s9 = sphi 0, %s13
    %p10 = scmp.ge.s32.totalorder %s9, 4
    %s19 = sphi 0, %s21
    %s22 = sphi 0, %s19
    %s23 = sphi 0, %s22
    %s39 = sphi 0, %s23
    %s43 = sphi 0, %s43
    %s45 = sphi 0, %s43
    %s46 = sphi 0, %s45
    %s60 = sphi 0, %s46
    %s64 = sphi 0, %s64
    %s66 = sphi 0, %s64
    %s67 = sphi 0, %s66
    %s81 = sphi 0, %s67
    %s87 = sphi 0, %s89
    %s90 = sphi 0, %s87
    %s91 = sphi 0, %s90
    %s107 = sphi 0, %s91
  $region4: #{double_conv.5} parent=0 // loop_header_branch
    %12 = sbr.rel (%p10) target = $region8
  $region5: #{double_conv.5} parent=0 // loop_body
    %s14 = ssub.s32 %s9, 1
    %s15 = ssub.s32 %s9, 2
    %s16 = sadd.s32 %s9, 1
    %s17 = ssub.s32 %s9, %s16
    %p18 = scmp.eq.s32.totalorder %s17, 0
    %s20 = sadd.s32 %s19, 1
    %s21 = scalar_select %p18, %s19, %s20
    %p24 = pneg %p18
    %p25 = scmp.eq.s32.totalorder %s9, 1
    %p26 = por %p24, %p25
    %p27 = scmp.ne.s32.totalorder %s19, %s22
    %p28 = scmp.eq.s32.totalorder %s9, 0
    %p29 = por %p27, %p28
    %p30 = scmp.ne.s32.totalorder %s19, %s22
    %p31 = scmp.eq.s32.totalorder %s14, 1
    %p32 = por %p30, %p31
    %p33 = scmp.ne.s32.totalorder %s22, %s23
    %p34 = scmp.eq.s32.totalorder %s14, 0
    %p35 = por %p33, %p34
    %p36 = scmp.ne.s32.totalorder %s22, %s23
    %p37 = scmp.eq.s32.totalorder %s15, 1
    %p38 = por %p36, %p37
    %p40 = scmp.ne.s32.totalorder %s23, %s39
    %p41 = scmp.eq.s32.totalorder %s15, 0
    %p42 = por %p40, %p41
    %s44 = sadd.s32 %s43, 1
    %p47 = scmp.eq.s32.totalorder %s9, 1
    %p48 = scmp.ne.s32.totalorder %s43, %s45
    %p49 = scmp.eq.s32.totalorder %s9, 0
    %p50 = por %p48, %p49
    %p51 = scmp.ne.s32.totalorder %s43, %s45
    %p52 = scmp.eq.s32.totalorder %s14, 1
    %p53 = por %p51, %p52
    %p54 = scmp.ne.s32.totalorder %s45, %s46
    %p55 = scmp.eq.s32.totalorder %s14, 0
    %p56 = por %p54, %p55
    %p57 = scmp.ne.s32.totalorder %s45, %s46
    %p58 = scmp.eq.s32.totalorder %s15, 1
    %p59 = por %p57, %p58
    %p61 = scmp.ne.s32.totalorder %s46, %s60
    %p62 = scmp.eq.s32.totalorder %s15, 0
    %p63 = por %p61, %p62
    %s65 = sadd.s32 %s64, 1
    %p68 = scmp.eq.s32.totalorder %s9, 1
    %p69 = scmp.ne.s32.totalorder %s64, %s66
    %p70 = scmp.eq.s32.totalorder %s9, 0
    %p71 = por %p69, %p70
    %p72 = scmp.ne.s32.totalorder %s64, %s66
    %p73 = scmp.eq.s32.totalorder %s14, 1
    %p74 = por %p72, %p73
    %p75 = scmp.ne.s32.totalorder %s66, %s67
    %p76 = scmp.eq.s32.totalorder %s14, 0
    %p77 = por %p75, %p76
    %p78 = scmp.ne.s32.totalorder %s66, %s67
    %p79 = scmp.eq.s32.totalorder %s15, 1
    %p80 = por %p78, %p79
    %p82 = scmp.ne.s32.totalorder %s67, %s81
    %p83 = scmp.eq.s32.totalorder %s15, 0
    %p84 = por %p82, %p83
    %s85 = ssub.s32 %s9, %s16
    %p86 = scmp.eq.s32.totalorder %s85, 0
    %s88 = sadd.s32 %s87, 1
    %s89 = scalar_select %p86, %s87, %s88
    %p92 = pneg %p86
    %p93 = scmp.eq.s32.totalorder %s9, 1
    %p94 = por %p92, %p93
    %p95 = scmp.ne.s32.totalorder %s87, %s90
    %p96 = scmp.eq.s32.totalorder %s9, 0
    %p97 = por %p95, %p96
    %p98 = scmp.ne.s32.totalorder %s87, %s90
    %p99 = scmp.eq.s32.totalorder %s14, 1
    %p100 = por %p98, %p99
    %p101 = scmp.ne.s32.totalorder %s90, %s91
    %p102 = scmp.eq.s32.totalorder %s14, 0
    %p103 = por %p101, %p102
    %p104 = scmp.ne.s32.totalorder %s90, %s91
    %p105 = scmp.eq.s32.totalorder %s15, 1
    %p106 = por %p104, %p105
    %p108 = scmp.ne.s32.totalorder %s91, %s107
    %p109 = scmp.eq.s32.totalorder %s15, 0
    %p110 = por %p108, %p109
    %p111 = scmp.le.s32.totalorder 1, %s9
    %p112 = scmp.lt.s32.totalorder %s9, 3
    %p113 = pnand %p111, %p112
    %p114 = pneg %p113
    // Predicated region
    $region9: #{double_conv.5} parent=5 // pred_check
      _
    $region10: #{double_conv.5} parent=5 // pred_check_branch
      %116 = sbr.rel (%p113) target = $region12
    $region11: #{double_conv.5} parent=5 // pred_region
      %s117 = ssub.s32 %s9, 1
      // Predicated region
      $region13: #{double_conv.5} parent=11 // pred_check
        %p118 = pneg %p56
      $region14: #{double_conv.5} parent=11 // pred_check_branch
        %120 = sbr.rel (%p118) target = $region16
      $region15: #{double_conv.5} parent=11 // pred_region
        _
      $region16: #{double_conv.5} parent=11 // pred_fallthru
        _
      // Predicated region
      $region17: #{double_conv.5} parent=11 // pred_check
        %p121 = pneg %p77
      $region18: #{double_conv.5} parent=11 // pred_check_branch
        %123 = sbr.rel (%p121) target = $region20
      $region19: #{double_conv.5} parent=11 // pred_region
        _
      $region20: #{double_conv.5} parent=11 // pred_fallthru
        _
    $region12: #{double_conv.5} parent=5 // pred_fallthru
      _
    %p124 = scmp.lt.s32.totalorder %s9, 2
    // Predicated region
    $region21: #{double_conv.5} parent=5 // pred_check
      %p125 = pneg %p124
    $region22: #{double_conv.5} parent=5 // pred_check_branch
      %127 = sbr.rel (%p125) target = $region24
    $region23: #{double_conv.5} parent=5 // pred_region
      // Predicated region
      $region25: #{double_conv.5} parent=23 // pred_check
        %p128 = pneg %p29
      $region26: #{double_conv.5} parent=23 // pred_check_branch
        %130 = sbr.rel (%p128) target = $region28
      $region27: #{double_conv.5} parent=23 // pred_region
        %p131 = scmp.lt.s32.totalorder %s9, 1
        %s132 = scalar_select %p131, %s9, 1
        %s133 = smul.addr %s132, 32
        %s134 = smul.addr %s133, 8
        %s135 = scalar_lea.vmem %s0, %s134
      $region28: #{double_conv.5} parent=23 // pred_fallthru
        _
    $region24: #{double_conv.5} parent=5 // pred_fallthru
      _
    %p136 = scmp.le.s32.totalorder 1, %s9
    %p137 = scmp.lt.s32.totalorder %s9, 3
    %p138 = pnand %p136, %p137
    %p139 = pneg %p138
    // Predicated region
    $region29: #{double_conv.5} parent=5 // pred_check
      _
    $region30: #{double_conv.5} parent=5 // pred_check_branch
      %141 = sbr.rel (%p138) target = $region32
    $region31: #{double_conv.5} parent=5 // pred_region
      %s142 = ssub.s32 %s9, 1
      %p143 = scmp.lt.s32.totalorder %s14, 1
      %s144 = scalar_select %p143, %s14, 1
      %s145 = smul.addr %s144, 32
      %s146 = smul.addr %s145, 8
      %s147 = scalar_lea.vmem %s0, %s146
      %p148 = pneg %p35
      %p149 = pneg %p32
      %p150 = pneg %p56
      %p151 = pneg %p53
      %p152 = pneg %p77
      %p153 = pneg %p74
      %p154 = pneg %p103
      %p155 = pneg %p100
      %p156 = scmp.lt.s32.totalorder %s14, 1
      %s157 = scalar_select %p156, %s14, 1
      %s158 = smul.addr %s157, 32
      %s159 = smul.addr %s158, 8
      %s160 = scalar_lea.vmem %s3, %s159
      %p161 = scmp.lt.s32.totalorder %s14, 1
      %s162 = scalar_select %p161, %s14, 1
      %s163 = smul.addr %s162, 32
      %s164 = smul.addr %s163, 8
      %s165 = scalar_lea.vmem %s0, %s164
      %p166 = scmp.lt.s32.totalorder %s14, 1
      %s167 = scalar_select %p166, %s14, 1
      %s168 = smul.addr %s167, 32
      %s169 = smul.addr %s168, 8
      %s170 = scalar_lea.vmem %s3, %s169
      %v171 = vld [vmem:[%s165] sm:$0xff]
      %v172 = vld [vmem:[%s165 + $0x8] sm:$0xff]
      %v173 = vld [vmem:[%s165 + $0x10] sm:$0xff]
      %v174 = vld [vmem:[%s165 + $0x18] sm:$0xff]
      %v175 = vld [vmem:[%s165 + $0x20] sm:$0xff]
      %v176 = vld [vmem:[%s165 + $0x28] sm:$0xff]
      %v177 = vld [vmem:[%s165 + $0x30] sm:$0xff]
      %v178 = vld [vmem:[%s165 + $0x38] sm:$0xff]
      %v179 = vld [vmem:[%s165 + $0x40] sm:$0xff]
      %v180 = vld [vmem:[%s165 + $0x48] sm:$0xff]
      %v181 = vld [vmem:[%s165 + $0x50] sm:$0xff]
      %v182 = vld [vmem:[%s165 + $0x58] sm:$0xff]
      %v183 = vld [vmem:[%s165 + $0x60] sm:$0xff]
      %v184 = vld [vmem:[%s165 + $0x68] sm:$0xff]
      %v185 = vld [vmem:[%s165 + $0x70] sm:$0xff]
      %v186 = vld [vmem:[%s165 + $0x78] sm:$0xff]
      %v187 = vld [vmem:[%s165 + $0x80] sm:$0xff]
      %v188 = vld [vmem:[%s165 + $0x88] sm:$0xff]
      %v189 = vld [vmem:[%s165 + $0x90] sm:$0xff]
      %v190 = vld [vmem:[%s165 + $0x98] sm:$0xff]
      %v191 = vld [vmem:[%s165 + $0xa0] sm:$0xff]
      %v192 = vld [vmem:[%s165 + $0xa8] sm:$0xff]
      %v193 = vld [vmem:[%s165 + $0xb0] sm:$0xff]
      %v194 = vld [vmem:[%s165 + $0xb8] sm:$0xff]
      %v195 = vld [vmem:[%s165 + $0xc0] sm:$0xff]
      %v196 = vld [vmem:[%s165 + $0xc8] sm:$0xff]
      %v197 = vld [vmem:[%s165 + $0xd0] sm:$0xff]
      %v198 = vld [vmem:[%s165 + $0xd8] sm:$0xff]
      %v199 = vld [vmem:[%s165 + $0xe0] sm:$0xff]
      %v200 = vld [vmem:[%s165 + $0xe8] sm:$0xff]
      %v201 = vld [vmem:[%s165 + $0xf0] sm:$0xff]
      %v202 = vld [vmem:[%s165 + $0xf8] sm:$0xff]
      %v203 = vld [vmem:[%s1] sm:$0x1]
      %v205 = vlaneseq
      %v206 = vshrl.u32 %v205, 7
      %v207 = vsub.s32 0, %v206
      %v208 = vrot.slane %v203, %v207
      %v210 = vmul.f32 %v171, %v208
      %v211 = vmul.f32 %v172, %v208
      %v212 = vmul.f32 %v173, %v208
      %v213 = vmul.f32 %v174, %v208
      %v214 = vmul.f32 %v175, %v208
      %v215 = vmul.f32 %v176, %v208
      %v216 = vmul.f32 %v177, %v208
      %v217 = vmul.f32 %v178, %v208
      %v218 = vmul.f32 %v179, %v208
      %v219 = vmul.f32 %v180, %v208
      %v220 = vmul.f32 %v181, %v208
      %v221 = vmul.f32 %v182, %v208
      %v222 = vmul.f32 %v183, %v208
      %v223 = vmul.f32 %v184, %v208
      %v224 = vmul.f32 %v185, %v208
      %v225 = vmul.f32 %v186, %v208
      %v226 = vmul.f32 %v187, %v208
      %v227 = vmul.f32 %v188, %v208
      %v228 = vmul.f32 %v189, %v208
      %v229 = vmul.f32 %v190, %v208
      %v230 = vmul.f32 %v191, %v208
      %v231 = vmul.f32 %v192, %v208
      %v232 = vmul.f32 %v193, %v208
      %v233 = vmul.f32 %v194, %v208
      %v234 = vmul.f32 %v195, %v208
      %v235 = vmul.f32 %v196, %v208
      %v236 = vmul.f32 %v197, %v208
      %v237 = vmul.f32 %v198, %v208
      %v238 = vmul.f32 %v199, %v208
      %v239 = vmul.f32 %v200, %v208
      %v240 = vmul.f32 %v201, %v208
      %v241 = vmul.f32 %v202, %v208
      %v242 = vld [vmem:[%s2] sm:$0x1]
      %v244 = vlaneseq
      %v245 = vshrl.u32 %v244, 7
      %v246 = vsub.s32 0, %v245
      %v247 = vrot.slane %v242, %v246
      %v249 = vadd.f32 %v210, %v247
      %v250 = vadd.f32 %v211, %v247
      %v251 = vadd.f32 %v212, %v247
      %v252 = vadd.f32 %v213, %v247
      %v253 = vadd.f32 %v214, %v247
      %v254 = vadd.f32 %v215, %v247
      %v255 = vadd.f32 %v216, %v247
      %v256 = vadd.f32 %v217, %v247
      %v257 = vadd.f32 %v218, %v247
      %v258 = vadd.f32 %v219, %v247
      %v259 = vadd.f32 %v220, %v247
      %v260 = vadd.f32 %v221, %v247
      %v261 = vadd.f32 %v222, %v247
      %v262 = vadd.f32 %v223, %v247
      %v263 = vadd.f32 %v224, %v247
      %v264 = vadd.f32 %v225, %v247
      %v265 = vadd.f32 %v226, %v247
      %v266 = vadd.f32 %v227, %v247
      %v267 = vadd.f32 %v228, %v247
      %v268 = vadd.f32 %v229, %v247
      %v269 = vadd.f32 %v230, %v247
      %v270 = vadd.f32 %v231, %v247
      %v271 = vadd.f32 %v232, %v247
      %v272 = vadd.f32 %v233, %v247
      %v273 = vadd.f32 %v234, %v247
      %v274 = vadd.f32 %v235, %v247
      %v275 = vadd.f32 %v236, %v247
      %v276 = vadd.f32 %v237, %v247
      %v277 = vadd.f32 %v238, %v247
      %v278 = vadd.f32 %v239, %v247
      %v279 = vadd.f32 %v240, %v247
      %v280 = vadd.f32 %v241, %v247
      %v281 = vmax.f32 %v249, 0.0
      %v282 = vmax.f32 %v250, 0.0
      %v283 = vmax.f32 %v251, 0.0
      %v284 = vmax.f32 %v252, 0.0
      %v285 = vmax.f32 %v253, 0.0
      %v286 = vmax.f32 %v254, 0.0
      %v287 = vmax.f32 %v255, 0.0
      %v288 = vmax.f32 %v256, 0.0
      %v289 = vmax.f32 %v257, 0.0
      %v290 = vmax.f32 %v258, 0.0
      %v291 = vmax.f32 %v259, 0.0
      %v292 = vmax.f32 %v260, 0.0
      %v293 = vmax.f32 %v261, 0.0
      %v294 = vmax.f32 %v262, 0.0
      %v295 = vmax.f32 %v263, 0.0
      %v296 = vmax.f32 %v264, 0.0
      %v297 = vmax.f32 %v265, 0.0
      %v298 = vmax.f32 %v266, 0.0
      %v299 = vmax.f32 %v267, 0.0
      %v300 = vmax.f32 %v268, 0.0
      %v301 = vmax.f32 %v269, 0.0
      %v302 = vmax.f32 %v270, 0.0
      %v303 = vmax.f32 %v271, 0.0
      %v304 = vmax.f32 %v272, 0.0
      %v305 = vmax.f32 %v273, 0.0
      %v306 = vmax.f32 %v274, 0.0
      %v307 = vmax.f32 %v275, 0.0
      %v308 = vmax.f32 %v276, 0.0
      %v309 = vmax.f32 %v277, 0.0
      %v310 = vmax.f32 %v278, 0.0
      %v311 = vmax.f32 %v279, 0.0
      %v312 = vmax.f32 %v280, 0.0
      %vm313 = vcmask 64512
      %314 = vst.msk [vmem:[%s170] sm:$0xff] %vm313, %v281
      %315 = vst.msk [vmem:[%s170 + $0x8] sm:$0xff] %vm313, %v282
      %316 = vst.msk [vmem:[%s170 + $0x10] sm:$0xff] %vm313, %v283
      %317 = vst.msk [vmem:[%s170 + $0x18] sm:$0xff] %vm313, %v284
      %318 = vst.msk [vmem:[%s170 + $0x20] sm:$0xff] %vm313, %v285
      %319 = vst.msk [vmem:[%s170 + $0x28] sm:$0xff] %vm313, %v286
      %320 = vst.msk [vmem:[%s170 + $0x30] sm:$0xff] %vm313, %v287
      %321 = vst.msk [vmem:[%s170 + $0x38] sm:$0xff] %vm313, %v288
      %322 = vst.msk [vmem:[%s170 + $0x40] sm:$0xff] %vm313, %v289
      %323 = vst.msk [vmem:[%s170 + $0x48] sm:$0xff] %vm313, %v290
      %324 = vst.msk [vmem:[%s170 + $0x50] sm:$0xff] %vm313, %v291
      %325 = vst.msk [vmem:[%s170 + $0x58] sm:$0xff] %vm313, %v292
      %326 = vst.msk [vmem:[%s170 + $0x60] sm:$0xff] %vm313, %v293
      %327 = vst.msk [vmem:[%s170 + $0x68] sm:$0xff] %vm313, %v294
      %328 = vst.msk [vmem:[%s170 + $0x70] sm:$0xff] %vm313, %v295
      %329 = vst.msk [vmem:[%s170 + $0x78] sm:$0xff] %vm313, %v296
      %330 = vst.msk [vmem:[%s170 + $0x80] sm:$0xff] %vm313, %v297
      %331 = vst.msk [vmem:[%s170 + $0x88] sm:$0xff] %vm313, %v298
      %332 = vst.msk [vmem:[%s170 + $0x90] sm:$0xff] %vm313, %v299
      %333 = vst.msk [vmem:[%s170 + $0x98] sm:$0xff] %vm313, %v300
      %334 = vst.msk [vmem:[%s170 + $0xa0] sm:$0xff] %vm313, %v301
      %335 = vst.msk [vmem:[%s170 + $0xa8] sm:$0xff] %vm313, %v302
      %336 = vst.msk [vmem:[%s170 + $0xb0] sm:$0xff] %vm313, %v303
      %337 = vst.msk [vmem:[%s170 + $0xb8] sm:$0xff] %vm313, %v304
      %338 = vst.msk [vmem:[%s170 + $0xc0] sm:$0xff] %vm313, %v305
      %339 = vst.msk [vmem:[%s170 + $0xc8] sm:$0xff] %vm313, %v306
      %340 = vst.msk [vmem:[%s170 + $0xd0] sm:$0xff] %vm313, %v307
      %341 = vst.msk [vmem:[%s170 + $0xd8] sm:$0xff] %vm313, %v308
      %342 = vst.msk [vmem:[%s170 + $0xe0] sm:$0xff] %vm313, %v309
      %343 = vst.msk [vmem:[%s170 + $0xe8] sm:$0xff] %vm313, %v310
      %344 = vst.msk [vmem:[%s170 + $0xf0] sm:$0xff] %vm313, %v311
      %345 = vst.msk [vmem:[%s170 + $0xf8] sm:$0xff] %vm313, %v312
      %p346 = scmp.lt.s32.totalorder %s14, 1
      %s347 = scalar_select %p346, %s14, 1
      %s348 = smul.addr %s347, 32
      %s349 = smul.addr %s348, 8
      %s350 = scalar_lea.vmem %s3, %s349
      // Predicated region
      $region33: #{double_conv.5} parent=31 // pred_check
        %p351 = pneg %p100
      $region34: #{double_conv.5} parent=31 // pred_check_branch
        %353 = sbr.rel (%p351) target = $region36
      $region35: #{double_conv.5} parent=31 // pred_region
        _
      $region36: #{double_conv.5} parent=31 // pred_fallthru
        _
    $region32: #{double_conv.5} parent=5 // pred_fallthru
      _
    %p354 = scmp.le.s32.totalorder 2, %s9
    // Predicated region
    $region37: #{double_conv.5} parent=5 // pred_check
      %p355 = pneg %p354
    $region38: #{double_conv.5} parent=5 // pred_check_branch
      %357 = sbr.rel (%p355) target = $region40
    $region39: #{double_conv.5} parent=5 // pred_region
      %s358 = ssub.s32 %s9, 2
      // Predicated region
      $region41: #{double_conv.5} parent=39 // pred_check
        %p359 = pneg %p106
      $region42: #{double_conv.5} parent=39 // pred_check_branch
        %361 = sbr.rel (%p359) target = $region44
      $region43: #{double_conv.5} parent=39 // pred_region
        %p362 = scmp.lt.s32.totalorder %s15, 1
        %s363 = scalar_select %p362, %s15, 1
        %s364 = smul.addr %s363, 32
        %s365 = smul.addr %s364, 8
        %s366 = scalar_lea.vmem %s3, %s365
      $region44: #{double_conv.5} parent=39 // pred_fallthru
        _
    $region40: #{double_conv.5} parent=5 // pred_fallthru
      _
  $region6: #{double_conv.5} parent=0 // loop_footer
    %s13 = sadd.s32 1, %s9
  $region7: #{double_conv.5} parent=0 // loop_footer_branch
    %8 = sbr.rel target = $region3
  $region8: #{double_conv.5} parent=0 // loop_exit
    _

// kernel: double_conv.3
$region0: #{double_conv.3}
  #allocation0 [shape = 'u32[]', space=smem, size = 0x4, offset = 0x4, fixed_abs, tag = 'smem constant byte address 0x4 - core index']
  #allocation1 [shape = 'u32[144,128]{1,0:T(1,128)}', space=vmem, size = 0x12000, scoped, tag = 'internal scratch']
  %s0 = inlined_call_operand.vmem [shape: f32[2,16,16,4], index: 0, kind: input, shape index: {}]
  %s1 = inlined_call_operand.vmem [shape: f32[36,8], index: 1, kind: input, shape index: {}]
  %s2 = inlined_call_operand.vmem [shape: f32[2,16,16,8], index: 2, kind: output, shape index: {0}]
  %s3 = inlined_call_operand.vmem [shape: f32[2,2,8], index: 3, kind: output, shape index: {1}]
  %4 = xla_tuple %s2, %s3
  %s5 = sld [smem:[#allocation0]]
  $region49: #{double_conv.3} parent=0
    _
  %s7 = ssub.s32 1, %s5
  %s8 = scalar_select 0, %s7, %s5
  loop: start=0, step=1, limit=4
  $region2: #{double_conv.3} parent=0 // loop_pre_header
    _
  $region3: #{double_conv.3} parent=0 // loop_header
    %s10 = sphi 0, %s14
    %p11 = scmp.ge.s32.totalorder %s10, 4
    %s20 = sphi 0, %s22
    %s23 = sphi 0, %s20
    %s24 = sphi 0, %s23
    %s40 = sphi 0, %s24
    %s44 = sphi 0, %s44
    %s46 = sphi 0, %s44
    %s47 = sphi 0, %s46
    %s61 = sphi 0, %s47
    %s67 = sphi 0, %s69
    %s70 = sphi 0, %s67
    %s71 = sphi 0, %s70
    %s87 = sphi 0, %s71
    %s93 = sphi 0, %s95
    %s96 = sphi 0, %s93
    %s97 = sphi 0, %s96
    %s113 = sphi 0, %s97
  $region4: #{double_conv.3} parent=0 // loop_header_branch
    %13 = sbr.rel (%p11) target = $region8
  $region5: #{double_conv.3} parent=0 // loop_body
    %s15 = ssub.s32 %s10, 1
    %s16 = ssub.s32 %s10, 2
    %s17 = sadd.s32 %s10, 1
    %s18 = ssub.s32 %s10, %s17
    %p19 = scmp.eq.s32.totalorder %s18, 0
    %s21 = sadd.s32 %s20, 1
    %s22 = scalar_select %p19, %s20, %s21
    %p25 = pneg %p19
    %p26 = scmp.eq.s32.totalorder %s10, 1
    %p27 = por %p25, %p26
    %p28 = scmp.ne.s32.totalorder %s20, %s23
    %p29 = scmp.eq.s32.totalorder %s10, 0
    %p30 = por %p28, %p29
    %p31 = scmp.ne.s32.totalorder %s20, %s23
    %p32 = scmp.eq.s32.totalorder %s15, 1
    %p33 = por %p31, %p32
    %p34 = scmp.ne.s32.totalorder %s23, %s24
    %p35 = scmp.eq.s32.totalorder %s15, 0
    %p36 = por %p34, %p35
    %p37 = scmp.ne.s32.totalorder %s23, %s24
    %p38 = scmp.eq.s32.totalorder %s16, 1
    %p39 = por %p37, %p38
    %p41 = scmp.ne.s32.totalorder %s24, %s40
    %p42 = scmp.eq.s32.totalorder %s16, 0
    %p43 = por %p41, %p42
    %s45 = sadd.s32 %s44, 1
    %p48 = scmp.eq.s32.totalorder %s10, 1
    %p49 = scmp.ne.s32.totalorder %s44, %s46
    %p50 = scmp.eq.s32.totalorder %s10, 0
    %p51 = por %p49, %p50
    %p52 = scmp.ne.s32.totalorder %s44, %s46
    %p53 = scmp.eq.s32.totalorder %s15, 1
    %p54 = por %p52, %p53
    %p55 = scmp.ne.s32.totalorder %s46, %s47
    %p56 = scmp.eq.s32.totalorder %s15, 0
    %p57 = por %p55, %p56
    %p58 = scmp.ne.s32.totalorder %s46, %s47
    %p59 = scmp.eq.s32.totalorder %s16, 1
    %p60 = por %p58, %p59
    %p62 = scmp.ne.s32.totalorder %s47, %s61
    %p63 = scmp.eq.s32.totalorder %s16, 0
    %p64 = por %p62, %p63
    %s65 = ssub.s32 %s10, %s17
    %p66 = scmp.eq.s32.totalorder %s65, 0
    %s68 = sadd.s32 %s67, 1
    %s69 = scalar_select %p66, %s67, %s68
    %p72 = pneg %p66
    %p73 = scmp.eq.s32.totalorder %s10, 1
    %p74 = por %p72, %p73
    %p75 = scmp.ne.s32.totalorder %s67, %s70
    %p76 = scmp.eq.s32.totalorder %s10, 0
    %p77 = por %p75, %p76
    %p78 = scmp.ne.s32.totalorder %s67, %s70
    %p79 = scmp.eq.s32.totalorder %s15, 1
    %p80 = por %p78, %p79
    %p81 = scmp.ne.s32.totalorder %s70, %s71
    %p82 = scmp.eq.s32.totalorder %s15, 0
    %p83 = por %p81, %p82
    %p84 = scmp.ne.s32.totalorder %s70, %s71
    %p85 = scmp.eq.s32.totalorder %s16, 1
    %p86 = por %p84, %p85
    %p88 = scmp.ne.s32.totalorder %s71, %s87
    %p89 = scmp.eq.s32.totalorder %s16, 0
    %p90 = por %p88, %p89
    %s91 = ssub.s32 %s10, %s17
    %p92 = scmp.eq.s32.totalorder %s91, 0
    %s94 = sadd.s32 %s93, 1
    %s95 = scalar_select %p92, %s93, %s94
    %p98 = pneg %p92
    %p99 = scmp.eq.s32.totalorder %s10, 1
    %p100 = por %p98, %p99
    %p101 = scmp.ne.s32.totalorder %s93, %s96
    %p102 = scmp.eq.s32.totalorder %s10, 0
    %p103 = por %p101, %p102
    %p104 = scmp.ne.s32.totalorder %s93, %s96
    %p105 = scmp.eq.s32.totalorder %s15, 1
    %p106 = por %p104, %p105
    %p107 = scmp.ne.s32.totalorder %s96, %s97
    %p108 = scmp.eq.s32.totalorder %s15, 0
    %p109 = por %p107, %p108
    %p110 = scmp.ne.s32.totalorder %s96, %s97
    %p111 = scmp.eq.s32.totalorder %s16, 1
    %p112 = por %p110, %p111
    %p114 = scmp.ne.s32.totalorder %s97, %s113
    %p115 = scmp.eq.s32.totalorder %s16, 0
    %p116 = por %p114, %p115
    %p117 = scmp.le.s32.totalorder 1, %s10
    %p118 = scmp.lt.s32.totalorder %s10, 3
    %p119 = pnand %p117, %p118
    %p120 = pneg %p119
    // Predicated region
    $region9: #{double_conv.3} parent=5 // pred_check
      _
    $region10: #{double_conv.3} parent=5 // pred_check_branch
      %122 = sbr.rel (%p119) target = $region12
    $region11: #{double_conv.3} parent=5 // pred_region
      %s123 = ssub.s32 %s10, 1
      // Predicated region
      $region13: #{double_conv.3} parent=11 // pred_check
        %p124 = pneg %p57
      $region14: #{double_conv.3} parent=11 // pred_check_branch
        %126 = sbr.rel (%p124) target = $region16
      $region15: #{double_conv.3} parent=11 // pred_region
        _
      $region16: #{double_conv.3} parent=11 // pred_fallthru
        _
    $region12: #{double_conv.3} parent=5 // pred_fallthru
      _
    %p127 = scmp.lt.s32.totalorder %s10, 2
    // Predicated region
    $region17: #{double_conv.3} parent=5 // pred_check
      %p128 = pneg %p127
    $region18: #{double_conv.3} parent=5 // pred_check_branch
      %130 = sbr.rel (%p128) target = $region20
    $region19: #{double_conv.3} parent=5 // pred_region
      // Predicated region
      $region21: #{double_conv.3} parent=19 // pred_check
        %p131 = pneg %p30
      $region22: #{double_conv.3} parent=19 // pred_check_branch
        %133 = sbr.rel (%p131) target = $region24
      $region23: #{double_conv.3} parent=19 // pred_region
        %p134 = scmp.lt.s32.totalorder %s10, 1
        %s135 = scalar_select %p134, %s10, 1
        %s136 = smul.addr %s135, 32
        %s137 = smul.addr %s136, 8
        %s138 = scalar_lea.vmem %s0, %s137
      $region24: #{double_conv.3} parent=19 // pred_fallthru
        _
    $region20: #{double_conv.3} parent=5 // pred_fallthru
      _
    %p139 = scmp.le.s32.totalorder 1, %s10
    %p140 = scmp.lt.s32.totalorder %s10, 3
    %p141 = pnand %p139, %p140
    %p142 = pneg %p141
    // Predicated region
    $region25: #{double_conv.3} parent=5 // pred_check
      _
    $region26: #{double_conv.3} parent=5 // pred_check_branch
      %144 = sbr.rel (%p141) target = $region28
    $region27: #{double_conv.3} parent=5 // pred_region
      %s145 = ssub.s32 %s10, 1
      %p146 = scmp.lt.s32.totalorder %s15, 1
      %s147 = scalar_select %p146, %s15, 1
      %s148 = smul.addr %s147, 32
      %s149 = smul.addr %s148, 8
      %s150 = scalar_lea.vmem %s0, %s149
      %p151 = pneg %p36
      %p152 = pneg %p33
      %p153 = pneg %p57
      %p154 = pneg %p54
      %p155 = pneg %p83
      %p156 = pneg %p80
      %p157 = scmp.lt.s32.totalorder %s15, 1
      %s158 = scalar_select %p157, %s15, 1
      %s159 = smul.addr %s158, 32
      %s160 = smul.addr %s159, 8
      %s161 = scalar_lea.vmem %s2, %s160
      %p162 = pneg %p109
      %p163 = pneg %p106
      %p164 = scmp.lt.s32.totalorder %s15, 1
      %s165 = scalar_select %p164, %s15, 1
      %s166 = smul.addr %s165, 2
      %s167 = scalar_lea.vmem %s3, %s166
      %p168 = scmp.lt.s32.totalorder %s15, 1
      %s169 = scalar_select %p168, %s15, 1
      %s170 = smul.addr %s169, 32
      %s171 = smul.addr %s170, 8
      %s172 = scalar_lea.vmem %s0, %s171
      %p173 = scmp.lt.s32.totalorder %s15, 1
      %s174 = scalar_select %p173, %s15, 1
      %s175 = smul.addr %s174, 32
      %s176 = smul.addr %s175, 8
      %s177 = scalar_lea.vmem %s2, %s176
      %p178 = scmp.lt.s32.totalorder %s15, 1
      %s179 = scalar_select %p178, %s15, 1
      %s180 = smul.addr %s179, 2
      %s181 = scalar_lea.vmem %s3, %s180
      %v182 = vld [vmem:[%s172] sm:$0xff]
      %v183 = vld [vmem:[%s172 + $0x8] sm:$0xff]
      %v184 = vld [vmem:[%s172 + $0x10] sm:$0xff]
      %v185 = vld [vmem:[%s172 + $0x18] sm:$0xff]
      %v186 = vld [vmem:[%s172 + $0x20] sm:$0xff]
      %v187 = vld [vmem:[%s172 + $0x28] sm:$0xff]
      %v188 = vld [vmem:[%s172 + $0x30] sm:$0xff]
      %v189 = vld [vmem:[%s172 + $0x38] sm:$0xff]
      %v190 = vld [vmem:[%s172 + $0x40] sm:$0xff]
      %v191 = vld [vmem:[%s172 + $0x48] sm:$0xff]
      %v192 = vld [vmem:[%s172 + $0x50] sm:$0xff]
      %v193 = vld [vmem:[%s172 + $0x58] sm:$0xff]
      %v194 = vld [vmem:[%s172 + $0x60] sm:$0xff]
      %v195 = vld [vmem:[%s172 + $0x68] sm:$0xff]
      %v196 = vld [vmem:[%s172 + $0x70] sm:$0xff]
      %v197 = vld [vmem:[%s172 + $0x78] sm:$0xff]
      %v198 = vld [vmem:[%s172 + $0x80] sm:$0xff]
      %v199 = vld [vmem:[%s172 + $0x88] sm:$0xff]
      %v200 = vld [vmem:[%s172 + $0x90] sm:$0xff]
      %v201 = vld [vmem:[%s172 + $0x98] sm:$0xff]
      %v202 = vld [vmem:[%s172 + $0xa0] sm:$0xff]
      %v203 = vld [vmem:[%s172 + $0xa8] sm:$0xff]
      %v204 = vld [vmem:[%s172 + $0xb0] sm:$0xff]
      %v205 = vld [vmem:[%s172 + $0xb8] sm:$0xff]
      %v206 = vld [vmem:[%s172 + $0xc0] sm:$0xff]
      %v207 = vld [vmem:[%s172 + $0xc8] sm:$0xff]
      %v208 = vld [vmem:[%s172 + $0xd0] sm:$0xff]
      %v209 = vld [vmem:[%s172 + $0xd8] sm:$0xff]
      %v210 = vld [vmem:[%s172 + $0xe0] sm:$0xff]
      %v211 = vld [vmem:[%s172 + $0xe8] sm:$0xff]
      %v212 = vld [vmem:[%s172 + $0xf0] sm:$0xff]
      %v213 = vld [vmem:[%s172 + $0xf8] sm:$0xff]
      %vm247 = vcmask 1040384
      %v248 = vrot.slane 0.0, 7
      %v249 = vsel %vm247, %v248, %v248
      %v250 = vrot.slane %v182, 7
      %v251 = vrot.slane %v183, 7
      %v252 = vsel %vm247, %v250, %v251
      %v253 = vrot.slane %v184, 7
      %v254 = vrot.slane %v185, 7
      %v255 = vsel %vm247, %v253, %v254
      %v256 = vrot.slane %v186, 7
      %v257 = vrot.slane %v187, 7
      %v258 = vsel %vm247, %v256, %v257
      %v259 = vrot.slane %v188, 7
      %v260 = vrot.slane %v189, 7
      %v261 = vsel %vm247, %v259, %v260
      %v262 = vrot.slane %v190, 7
      %v263 = vrot.slane %v191, 7
      %v264 = vsel %vm247, %v262, %v263
      %v265 = vrot.slane %v192, 7
      %v266 = vrot.slane %v193, 7
      %v267 = vsel %vm247, %v265, %v266
      %v268 = vrot.slane %v194, 7
      %v269 = vrot.slane %v195, 7
      %v270 = vsel %vm247, %v268, %v269
      %v271 = vrot.slane %v196, 7
      %v272 = vrot.slane %v197, 7
      %v273 = vsel %vm247, %v271, %v272
      %v274 = vrot.slane %v198, 7
      %v275 = vrot.slane %v199, 7
      %v276 = vsel %vm247, %v274, %v275
      %v277 = vrot.slane %v200, 7
      %v278 = vrot.slane %v201, 7
      %v279 = vsel %vm247, %v277, %v278
      %v280 = vrot.slane %v202, 7
      %v281 = vrot.slane %v203, 7
      %v282 = vsel %vm247, %v280, %v281
      %v283 = vrot.slane %v204, 7
      %v284 = vrot.slane %v205, 7
      %v285 = vsel %vm247, %v283, %v284
      %v286 = vrot.slane %v206, 7
      %v287 = vrot.slane %v207, 7
      %v288 = vsel %vm247, %v286, %v287
      %v289 = vrot.slane %v208, 7
      %v290 = vrot.slane %v209, 7
      %v291 = vsel %vm247, %v289, %v290
      %v292 = vrot.slane %v210, 7
      %v293 = vrot.slane %v211, 7
      %v294 = vsel %vm247, %v292, %v293
      %v295 = vrot.slane %v212, 7
      %v296 = vrot.slane %v213, 7
      %v297 = vsel %vm247, %v295, %v296
      %v347 = vsel %vm247, 0.0, %v248
      %v348 = vsel %vm247, 0.0, %v250
      %v349 = vsel %vm247, 0.0, %v253
      %v350 = vsel %vm247, 0.0, %v256
      %v351 = vsel %vm247, 0.0, %v259
      %v352 = vsel %vm247, 0.0, %v262
      %v353 = vsel %vm247, 0.0, %v265
      %v354 = vsel %vm247, 0.0, %v268
      %v355 = vsel %vm247, 0.0, %v271
      %v356 = vsel %vm247, 0.0, %v274
      %v357 = vsel %vm247, 0.0, %v277
      %v358 = vsel %vm247, 0.0, %v280
      %v359 = vsel %vm247, 0.0, %v283
      %v360 = vsel %vm247, 0.0, %v286
      %v361 = vsel %vm247, 0.0, %v289
      %v362 = vsel %vm247, 0.0, %v292
      %v363 = vsel %vm247, 0.0, %v295
      %v364 = vsel %vm247, %v248, 0.0
      %v365 = vsel %vm247, %v251, 0.0
      %v366 = vsel %vm247, %v254, 0.0
      %v367 = vsel %vm247, %v257, 0.0
      %v368 = vsel %vm247, %v260, 0.0
      %v369 = vsel %vm247, %v263, 0.0
      %v370 = vsel %vm247, %v266, 0.0
      %v371 = vsel %vm247, %v269, 0.0
      %v372 = vsel %vm247, %v272, 0.0
      %v373 = vsel %vm247, %v275, 0.0
      %v374 = vsel %vm247, %v278, 0.0
      %v375 = vsel %vm247, %v281, 0.0
      %v376 = vsel %vm247, %v284, 0.0
      %v377 = vsel %vm247, %v287, 0.0
      %v378 = vsel %vm247, %v290, 0.0
      %v379 = vsel %vm247, %v293, 0.0
      %v380 = vsel %vm247, %v296, 0.0
      %vm413 = vcmask 1046528
      %v414 = vrot.slane %v347, 1
      %v415 = vrot.slane %v249, 1
      %v416 = vsel %vm413, %v414, %v415
      %v417 = vrot.slane %v364, 1
      %v418 = vsel %vm413, %v415, %v417
      %v419 = vrot.slane %v348, 1
      %v420 = vrot.slane %v252, 1
      %v421 = vsel %vm413, %v419, %v420
      %v422 = vrot.slane %v365, 1
      %v423 = vsel %vm413, %v420, %v422
      %v424 = vrot.slane %v349, 1
      %v425 = vrot.slane %v255, 1
      %v426 = vsel %vm413, %v424, %v425
      %v427 = vrot.slane %v366, 1
      %v428 = vsel %vm413, %v425, %v427
      %v429 = vrot.slane %v350, 1
      %v430 = vrot.slane %v258, 1
      %v431 = vsel %vm413, %v429, %v430
      %v432 = vrot.slane %v367, 1
      %v433 = vsel %vm413, %v430, %v432
      %v434 = vrot.slane %v351, 1
      %v435 = vrot.slane %v261, 1
      %v436 = vsel %vm413, %v434, %v435
      %v437 = vrot.slane %v368, 1
      %v438 = vsel %vm413, %v435, %v437
      %v439 = vrot.slane %v352, 1
      %v440 = vrot.slane %v264, 1
      %v441 = vsel %vm413, %v439, %v440
      %v442 = vrot.slane %v369, 1
      %v443 = vsel %vm413, %v440, %v442
      %v444 = vrot.slane %v353, 1
      %v445 = vrot.slane %v267, 1
      %v446 = vsel %vm413, %v444, %v445
      %v447 = vrot.slane %v370, 1
      %v448 = vsel %vm413, %v445, %v447
      %v449 = vrot.slane %v354, 1
      %v450 = vrot.slane %v270, 1
      %v451 = vsel %vm413, %v449, %v450
      %v452 = vrot.slane %v371, 1
      %v453 = vsel %vm413, %v450, %v452
      %v454 = vrot.slane %v355, 1
      %v455 = vrot.slane %v273, 1
      %v456 = vsel %vm413, %v454, %v455
      %v457 = vrot.slane %v372, 1
      %v458 = vsel %vm413, %v455, %v457
      %v459 = vrot.slane %v356, 1
      %v460 = vrot.slane %v276, 1
      %v461 = vsel %vm413, %v459, %v460
      %v462 = vrot.slane %v373, 1
      %v463 = vsel %vm413, %v460, %v462
      %v464 = vrot.slane %v357, 1
      %v465 = vrot.slane %v279, 1
      %v466 = vsel %vm413, %v464, %v465
      %v467 = vrot.slane %v374, 1
      %v468 = vsel %vm413, %v465, %v467
      %v469 = vrot.slane %v358, 1
      %v470 = vrot.slane %v282, 1
      %v471 = vsel %vm413, %v469, %v470
      %v472 = vrot.slane %v375, 1
      %v473 = vsel %vm413, %v470, %v472
      %v474 = vrot.slane %v359, 1
      %v475 = vrot.slane %v285, 1
      %v476 = vsel %vm413, %v474, %v475
      %v477 = vrot.slane %v376, 1
      %v478 = vsel %vm413, %v475, %v477
      %v479 = vrot.slane %v360, 1
      %v480 = vrot.slane %v288, 1
      %v481 = vsel %vm413, %v479, %v480
      %v482 = vrot.slane %v377, 1
      %v483 = vsel %vm413, %v480, %v482
      %v484 = vrot.slane %v361, 1
      %v485 = vrot.slane %v291, 1
      %v486 = vsel %vm413, %v484, %v485
      %v487 = vrot.slane %v378, 1
      %v488 = vsel %vm413, %v485, %v487
      %v489 = vrot.slane %v362, 1
      %v490 = vrot.slane %v294, 1
      %v491 = vsel %vm413, %v489, %v490
      %v492 = vrot.slane %v379, 1
      %v493 = vsel %vm413, %v490, %v492
      %494 = vrot.lane.b32.xlu0 %v416, 4
      %v495 = vpop.permute.xlu0 %494
      %496 = vrot.lane.b32.xlu0 %v418, 4
      %v497 = vpop.permute.xlu0 %496
      %498 = vrot.lane.b32.xlu0 %v421, 4
      %v499 = vpop.permute.xlu0 %498
      %500 = vrot.lane.b32.xlu0 %v423, 4
      %v501 = vpop.permute.xlu0 %500
      %502 = vrot.lane.b32.xlu0 %v426, 4
      %v503 = vpop.permute.xlu0 %502
      %504 = vrot.lane.b32.xlu0 %v428, 4
      %v505 = vpop.permute.xlu0 %504
      %506 = vrot.lane.b32.xlu0 %v431, 4
      %v507 = vpop.permute.xlu0 %506
      %508 = vrot.lane.b32.xlu0 %v433, 4
      %v509 = vpop.permute.xlu0 %508
      %510 = vrot.lane.b32.xlu0 %v436, 4
      %v511 = vpop.permute.xlu0 %510
      %512 = vrot.lane.b32.xlu0 %v438, 4
      %v513 = vpop.permute.xlu0 %512
      %514 = vrot.lane.b32.xlu0 %v441, 4
      %v515 = vpop.permute.xlu0 %514
      %516 = vrot.lane.b32.xlu0 %v443, 4
      %v517 = vpop.permute.xlu0 %516
      %518 = vrot.lane.b32.xlu0 %v446, 4
      %v519 = vpop.permute.xlu0 %518
      %520 = vrot.lane.b32.xlu0 %v448, 4
      %v521 = vpop.permute.xlu0 %520
      %522 = vrot.lane.b32.xlu0 %v451, 4
      %v523 = vpop.permute.xlu0 %522
      %524 = vrot.lane.b32.xlu0 %v453, 4
      %v525 = vpop.permute.xlu0 %524
      %526 = vrot.lane.b32.xlu0 %v456, 4
      %v527 = vpop.permute.xlu0 %526
      %528 = vrot.lane.b32.xlu0 %v458, 4
      %v529 = vpop.permute.xlu0 %528
      %530 = vrot.lane.b32.xlu0 %v461, 4
      %v531 = vpop.permute.xlu0 %530
      %532 = vrot.lane.b32.xlu0 %v463, 4
      %v533 = vpop.permute.xlu0 %532
      %534 = vrot.lane.b32.xlu0 %v466, 4
      %v535 = vpop.permute.xlu0 %534
      %536 = vrot.lane.b32.xlu0 %v468, 4
      %v537 = vpop.permute.xlu0 %536
      %538 = vrot.lane.b32.xlu0 %v471, 4
      %v539 = vpop.permute.xlu0 %538
      %540 = vrot.lane.b32.xlu0 %v473, 4
      %v541 = vpop.permute.xlu0 %540
      %542 = vrot.lane.b32.xlu0 %v476, 4
      %v543 = vpop.permute.xlu0 %542
      %544 = vrot.lane.b32.xlu0 %v478, 4
      %v545 = vpop.permute.xlu0 %544
      %546 = vrot.lane.b32.xlu0 %v481, 4
      %v547 = vpop.permute.xlu0 %546
      %548 = vrot.lane.b32.xlu0 %v483, 4
      %v549 = vpop.permute.xlu0 %548
      %550 = vrot.lane.b32.xlu0 %v486, 4
      %v551 = vpop.permute.xlu0 %550
      %552 = vrot.lane.b32.xlu0 %v488, 4
      %v553 = vpop.permute.xlu0 %552
      %554 = vrot.lane.b32.xlu0 %v491, 4
      %v555 = vpop.permute.xlu0 %554
      %556 = vrot.lane.b32.xlu0 %v493, 4
      %v557 = vpop.permute.xlu0 %556
      %vm590 = vcmask 1045504
      %v591 = vrot.slane %v347, 2
      %v592 = vrot.slane %v249, 2
      %v593 = vsel %vm590, %v591, %v592
      %v594 = vrot.slane %v364, 2
      %v595 = vsel %vm590, %v592, %v594
      %v596 = vrot.slane %v348, 2
      %v597 = vrot.slane %v252, 2
      %v598 = vsel %vm590, %v596, %v597
      %v599 = vrot.slane %v365, 2
      %v600 = vsel %vm590, %v597, %v599
      %v601 = vrot.slane %v349, 2
      %v602 = vrot.slane %v255, 2
      %v603 = vsel %vm590, %v601, %v602
      %v604 = vrot.slane %v366, 2
      %v605 = vsel %vm590, %v602, %v604
      %v606 = vrot.slane %v350, 2
      %v607 = vrot.slane %v258, 2
      %v608 = vsel %vm590, %v606, %v607
      %v609 = vrot.slane %v367, 2
      %v610 = vsel %vm590, %v607, %v609
      %v611 = vrot.slane %v351, 2
      %v612 = vrot.slane %v261, 2
      %v613 = vsel %vm590, %v611, %v612
      %v614 = vrot.slane %v368, 2
      %v615 = vsel %vm590, %v612, %v614
      %v616 = vrot.slane %v352, 2
      %v617 = vrot.slane %v264, 2
      %v618 = vsel %vm590, %v616, %v617
      %v619 = vrot.slane %v369, 2
      %v620 = vsel %vm590, %v617, %v619
      %v621 = vrot.slane %v353, 2
      %v622 = vrot.slane %v267, 2
      %v623 = vsel %vm590, %v621, %v622
      %v624 = vrot.slane %v370, 2
      %v625 = vsel %vm590, %v622, %v624
      %v626 = vrot.slane %v354, 2
      %v627 = vrot.slane %v270, 2
      %v628 = vsel %vm590, %v626, %v627
      %v629 = vrot.slane %v371, 2
      %v630 = vsel %vm590, %v627, %v629
      %v631 = vrot.slane %v355, 2
      %v632 = vrot.slane %v273, 2
      %v633 = vsel %vm590, %v631, %v632
      %v634 = vrot.slane %v372, 2
      %v635 = vsel %vm590, %v632, %v634
      %v636 = vrot.slane %v356, 2
      %v637 = vrot.slane %v276, 2
      %v638 = vsel %vm590, %v636, %v637
      %v639 = vrot.slane %v373, 2
      %v640 = vsel %vm590, %v637, %v639
      %v641 = vrot.slane %v357, 2
      %v642 = vrot.slane %v279, 2
      %v643 = vsel %vm590, %v641, %v642
      %v644 = vrot.slane %v374, 2
      %v645 = vsel %vm590, %v642, %v644
      %v646 = vrot.slane %v358, 2
      %v647 = vrot.slane %v282, 2
      %v648 = vsel %vm590, %v646, %v647
      %v649 = vrot.slane %v375, 2
      %v650 = vsel %vm590, %v647, %v649
      %v651 = vrot.slane %v359, 2
      %v652 = vrot.slane %v285, 2
      %v653 = vsel %vm590, %v651, %v652
      %v654 = vrot.slane %v376, 2
      %v655 = vsel %vm590, %v652, %v654
      %v656 = vrot.slane %v360, 2
      %v657 = vrot.slane %v288, 2
      %v658 = vsel %vm590, %v656, %v657
      %v659 = vrot.slane %v377, 2
      %v660 = vsel %vm590, %v657, %v659
      %v661 = vrot.slane %v361, 2
      %v662 = vrot.slane %v291, 2
      %v663 = vsel %vm590, %v661, %v662
      %v664 = vrot.slane %v378, 2
      %v665 = vsel %vm590, %v662, %v664
      %v666 = vrot.slane %v362, 2
      %v667 = vrot.slane %v294, 2
      %v668 = vsel %vm590, %v666, %v667
      %v669 = vrot.slane %v379, 2
      %v670 = vsel %vm590, %v667, %v669
      %671 = vrot.lane.b32.xlu0 %v593, 8
      %v672 = vpop.permute.xlu0 %671
      %673 = vrot.lane.b32.xlu0 %v595, 8
      %v674 = vpop.permute.xlu0 %673
      %675 = vrot.lane.b32.xlu0 %v598, 8
      %v676 = vpop.permute.xlu0 %675
      %677 = vrot.lane.b32.xlu0 %v600, 8
      %v678 = vpop.permute.xlu0 %677
      %679 = vrot.lane.b32.xlu0 %v603, 8
      %v680 = vpop.permute.xlu0 %679
      %681 = vrot.lane.b32.xlu0 %v605, 8
      %v682 = vpop.permute.xlu0 %681
      %683 = vrot.lane.b32.xlu0 %v608, 8
      %v684 = vpop.permute.xlu0 %683
      %685 = vrot.lane.b32.xlu0 %v610, 8
      %v686 = vpop.permute.xlu0 %685
      %687 = vrot.lane.b32.xlu0 %v613, 8
      %v688 = vpop.permute.xlu0 %687
      %689 = vrot.lane.b32.xlu0 %v615, 8
      %v690 = vpop.permute.xlu0 %689
      %691 = vrot.lane.b32.xlu0 %v618, 8
      %v692 = vpop.permute.xlu0 %691
      %693 = vrot.lane.b32.xlu0 %v620, 8
      %v694 = vpop.permute.xlu0 %693
      %695 = vrot.lane.b32.xlu0 %v623, 8
      %v696 = vpop.permute.xlu0 %695
      %697 = vrot.lane.b32.xlu0 %v625, 8
      %v698 = vpop.permute.xlu0 %697
      %699 = vrot.lane.b32.xlu0 %v628, 8
      %v700 = vpop.permute.xlu0 %699
      %701 = vrot.lane.b32.xlu0 %v630, 8
      %v702 = vpop.permute.xlu0 %701
      %703 = vrot.lane.b32.xlu0 %v633, 8
      %v704 = vpop.permute.xlu0 %703
      %705 = vrot.lane.b32.xlu0 %v635, 8
      %v706 = vpop.permute.xlu0 %705
      %707 = vrot.lane.b32.xlu0 %v638, 8
      %v708 = vpop.permute.xlu0 %707
      %709 = vrot.lane.b32.xlu0 %v640, 8
      %v710 = vpop.permute.xlu0 %709
      %711 = vrot.lane.b32.xlu0 %v643, 8
      %v712 = vpop.permute.xlu0 %711
      %713 = vrot.lane.b32.xlu0 %v645, 8
      %v714 = vpop.permute.xlu0 %713
      %715 = vrot.lane.b32.xlu0 %v648, 8
      %v716 = vpop.permute.xlu0 %715
      %717 = vrot.lane.b32.xlu0 %v650, 8
      %v718 = vpop.permute.xlu0 %717
      %719 = vrot.lane.b32.xlu0 %v653, 8
      %v720 = vpop.permute.xlu0 %719
      %721 = vrot.lane.b32.xlu0 %v655, 8
      %v722 = vpop.permute.xlu0 %721
      %723 = vrot.lane.b32.xlu0 %v658, 8
      %v724 = vpop.permute.xlu0 %723
      %725 = vrot.lane.b32.xlu0 %v660, 8
      %v726 = vpop.permute.xlu0 %725
      %727 = vrot.lane.b32.xlu0 %v663, 8
      %v728 = vpop.permute.xlu0 %727
      %729 = vrot.lane.b32.xlu0 %v665, 8
      %v730 = vpop.permute.xlu0 %729
      %731 = vrot.lane.b32.xlu0 %v668, 8
      %v732 = vpop.permute.xlu0 %731
      %733 = vrot.lane.b32.xlu0 %v670, 8
      %v734 = vpop.permute.xlu0 %733
      %768 = vrot.lane.b32.xlu0 %v348, 12
      %v769 = vpop.permute.xlu0 %768
      %770 = vrot.lane.b32.xlu0 %v252, 12
      %v771 = vpop.permute.xlu0 %770
      %772 = vrot.lane.b32.xlu0 %v349, 12
      %v773 = vpop.permute.xlu0 %772
      %774 = vrot.lane.b32.xlu0 %v255, 12
      %v775 = vpop.permute.xlu0 %774
      %776 = vrot.lane.b32.xlu0 %v350, 12
      %v777 = vpop.permute.xlu0 %776
      %778 = vrot.lane.b32.xlu0 %v258, 12
      %v779 = vpop.permute.xlu0 %778
      %780 = vrot.lane.b32.xlu0 %v351, 12
      %v781 = vpop.permute.xlu0 %780
      %782 = vrot.lane.b32.xlu0 %v261, 12
      %v783 = vpop.permute.xlu0 %782
      %784 = vrot.lane.b32.xlu0 %v352, 12
      %v785 = vpop.permute.xlu0 %784
      %786 = vrot.lane.b32.xlu0 %v264, 12
      %v787 = vpop.permute.xlu0 %786
      %788 = vrot.lane.b32.xlu0 %v353, 12
      %v789 = vpop.permute.xlu0 %788
      %790 = vrot.lane.b32.xlu0 %v267, 12
      %v791 = vpop.permute.xlu0 %790
      %792 = vrot.lane.b32.xlu0 %v354, 12
      %v793 = vpop.permute.xlu0 %792
      %794 = vrot.lane.b32.xlu0 %v270, 12
      %v795 = vpop.permute.xlu0 %794
      %796 = vrot.lane.b32.xlu0 %v355, 12
      %v797 = vpop.permute.xlu0 %796
      %798 = vrot.lane.b32.xlu0 %v273, 12
      %v799 = vpop.permute.xlu0 %798
      %800 = vrot.lane.b32.xlu0 %v356, 12
      %v801 = vpop.permute.xlu0 %800
      %802 = vrot.lane.b32.xlu0 %v276, 12
      %v803 = vpop.permute.xlu0 %802
      %804 = vrot.lane.b32.xlu0 %v357, 12
      %v805 = vpop.permute.xlu0 %804
      %806 = vrot.lane.b32.xlu0 %v279, 12
      %v807 = vpop.permute.xlu0 %806
      %808 = vrot.lane.b32.xlu0 %v358, 12
      %v809 = vpop.permute.xlu0 %808
      %810 = vrot.lane.b32.xlu0 %v282, 12
      %v811 = vpop.permute.xlu0 %810
      %812 = vrot.lane.b32.xlu0 %v359, 12
      %v813 = vpop.permute.xlu0 %812
      %814 = vrot.lane.b32.xlu0 %v285, 12
      %v815 = vpop.permute.xlu0 %814
      %816 = vrot.lane.b32.xlu0 %v360, 12
      %v817 = vpop.permute.xlu0 %816
      %818 = vrot.lane.b32.xlu0 %v288, 12
      %v819 = vpop.permute.xlu0 %818
      %820 = vrot.lane.b32.xlu0 %v361, 12
      %v821 = vpop.permute.xlu0 %820
      %822 = vrot.lane.b32.xlu0 %v291, 12
      %v823 = vpop.permute.xlu0 %822
      %824 = vrot.lane.b32.xlu0 %v362, 12
      %v825 = vpop.permute.xlu0 %824
      %826 = vrot.lane.b32.xlu0 %v294, 12
      %v827 = vpop.permute.xlu0 %826
      %828 = vrot.lane.b32.xlu0 %v363, 12
      %v829 = vpop.permute.xlu0 %828
      %830 = vrot.lane.b32.xlu0 %v297, 12
      %v831 = vpop.permute.xlu0 %830
      %v865 = vrot.slane %v363, 1
      %v866 = vrot.slane %v297, 1
      %v867 = vsel %vm413, %v865, %v866
      %v868 = vrot.slane %v380, 1
      %v869 = vsel %vm413, %v866, %v868
      %870 = vrot.lane.b32.xlu0 %v421, 16
      %v871 = vpop.permute.xlu0 %870
      %872 = vrot.lane.b32.xlu0 %v423, 16
      %v873 = vpop.permute.xlu0 %872
      %874 = vrot.lane.b32.xlu0 %v426, 16
      %v875 = vpop.permute.xlu0 %874
      %876 = vrot.lane.b32.xlu0 %v428, 16
      %v877 = vpop.permute.xlu0 %876
      %878 = vrot.lane.b32.xlu0 %v431, 16
      %v879 = vpop.permute.xlu0 %878
      %880 = vrot.lane.b32.xlu0 %v433, 16
      %v881 = vpop.permute.xlu0 %880
      %882 = vrot.lane.b32.xlu0 %v436, 16
      %v883 = vpop.permute.xlu0 %882
      %884 = vrot.lane.b32.xlu0 %v438, 16
      %v885 = vpop.permute.xlu0 %884
      %886 = vrot.lane.b32.xlu0 %v441, 16
      %v887 = vpop.permute.xlu0 %886
      %888 = vrot.lane.b32.xlu0 %v443, 16
      %v889 = vpop.permute.xlu0 %888
      %890 = vrot.lane.b32.xlu0 %v446, 16
      %v891 = vpop.permute.xlu0 %890
      %892 = vrot.lane.b32.xlu0 %v448, 16
      %v893 = vpop.permute.xlu0 %892
      %894 = vrot.lane.b32.xlu0 %v451, 16
      %v895 = vpop.permute.xlu0 %894
      %896 = vrot.lane.b32.xlu0 %v453, 16
      %v897 = vpop.permute.xlu0 %896
      %898 = vrot.lane.b32.xlu0 %v456, 16
      %v899 = vpop.permute.xlu0 %898
      %900 = vrot.lane.b32.xlu0 %v458, 16
      %v901 = vpop.permute.xlu0 %900
      %902 = vrot.lane.b32.xlu0 %v461, 16
      %v903 = vpop.permute.xlu0 %902
      %904 = vrot.lane.b32.xlu0 %v463, 16
      %v905 = vpop.permute.xlu0 %904
      %906 = vrot.lane.b32.xlu0 %v466, 16
      %v907 = vpop.permute.xlu0 %906
      %908 = vrot.lane.b32.xlu0 %v468, 16
      %v909 = vpop.permute.xlu0 %908
      %910 = vrot.lane.b32.xlu0 %v471, 16
      %v911 = vpop.permute.xlu0 %910
      %912 = vrot.lane.b32.xlu0 %v473, 16
      %v913 = vpop.permute.xlu0 %912
      %914 = vrot.lane.b32.xlu0 %v476, 16
      %v915 = vpop.permute.xlu0 %914
      %916 = vrot.lane.b32.xlu0 %v478, 16
      %v917 = vpop.permute.xlu0 %916
      %918 = vrot.lane.b32.xlu0 %v481, 16
      %v919 = vpop.permute.xlu0 %918
      %920 = vrot.lane.b32.xlu0 %v483, 16
      %v921 = vpop.permute.xlu0 %920
      %922 = vrot.lane.b32.xlu0 %v486, 16
      %v923 = vpop.permute.xlu0 %922
      %924 = vrot.lane.b32.xlu0 %v488, 16
      %v925 = vpop.permute.xlu0 %924
      %926 = vrot.lane.b32.xlu0 %v491, 16
      %v927 = vpop.permute.xlu0 %926
      %928 = vrot.lane.b32.xlu0 %v493, 16
      %v929 = vpop.permute.xlu0 %928
      %930 = vrot.lane.b32.xlu0 %v867, 16
      %v931 = vpop.permute.xlu0 %930
      %932 = vrot.lane.b32.xlu0 %v869, 16
      %v933 = vpop.permute.xlu0 %932
      %v966 = vrot.slane %v363, 2
      %v967 = vrot.slane %v297, 2
      %v968 = vsel %vm590, %v966, %v967
      %v969 = vrot.slane %v380, 2
      %v970 = vsel %vm590, %v967, %v969
      %971 = vrot.lane.b32.xlu0 %v598, 20
      %v972 = vpop.permute.xlu0 %971
      %973 = vrot.lane.b32.xlu0 %v600, 20
      %v974 = vpop.permute.xlu0 %973
      %975 = vrot.lane.b32.xlu0 %v603, 20
      %v976 = vpop.permute.xlu0 %975
      %977 = vrot.lane.b32.xlu0 %v605, 20
      %v978 = vpop.permute.xlu0 %977
      %979 = vrot.lane.b32.xlu0 %v608, 20
      %v980 = vpop.permute.xlu0 %979
      %981 = vrot.lane.b32.xlu0 %v610, 20
      %v982 = vpop.permute.xlu0 %981
      %983 = vrot.lane.b32.xlu0 %v613, 20
      %v984 = vpop.permute.xlu0 %983
      %985 = vrot.lane.b32.xlu0 %v615, 20
      %v986 = vpop.permute.xlu0 %985
      %987 = vrot.lane.b32.xlu0 %v618, 20
      %v988 = vpop.permute.xlu0 %987
      %989 = vrot.lane.b32.xlu0 %v620, 20
      %v990 = vpop.permute.xlu0 %989
      %991 = vrot.lane.b32.xlu0 %v623, 20
      %v992 = vpop.permute.xlu0 %991
      %993 = vrot.lane.b32.xlu0 %v625, 20
      %v994 = vpop.permute.xlu0 %993
      %995 = vrot.lane.b32.xlu0 %v628, 20
      %v996 = vpop.permute.xlu0 %995
      %997 = vrot.lane.b32.xlu0 %v630, 20
      %v998 = vpop.permute.xlu0 %997
      %999 = vrot.lane.b32.xlu0 %v633, 20
      %v1000 = vpop.permute.xlu0 %999
      %1001 = vrot.lane.b32.xlu0 %v635, 20
      %v1002 = vpop.permute.xlu0 %1001
      %1003 = vrot.lane.b32.xlu0 %v638, 20
      %v1004 = vpop.permute.xlu0 %1003
      %1005 = vrot.lane.b32.xlu0 %v640, 20
      %v1006 = vpop.permute.xlu0 %1005
      %1007 = vrot.lane.b32.xlu0 %v643, 20
      %v1008 = vpop.permute.xlu0 %1007
      %1009 = vrot.lane.b32.xlu0 %v645, 20
      %v1010 = vpop.permute.xlu0 %1009
      %1011 = vrot.lane.b32.xlu0 %v648, 20
      %v1012 = vpop.permute.xlu0 %1011
      %1013 = vrot.lane.b32.xlu0 %v650, 20
      %v1014 = vpop.permute.xlu0 %1013
      %1015 = vrot.lane.b32.xlu0 %v653, 20
      %v1016 = vpop.permute.xlu0 %1015
      %1017 = vrot.lane.b32.xlu0 %v655, 20
      %v1018 = vpop.permute.xlu0 %1017
      %1019 = vrot.lane.b32.xlu0 %v658, 20
      %v1020 = vpop.permute.xlu0 %1019
      %1021 = vrot.lane.b32.xlu0 %v660, 20
      %v1022 = vpop.permute.xlu0 %1021
      %1023 = vrot.lane.b32.xlu0 %v663, 20
      %v1024 = vpop.permute.xlu0 %1023
      %1025 = vrot.lane.b32.xlu0 %v665, 20
      %v1026 = vpop.permute.xlu0 %1025
      %1027 = vrot.lane.b32.xlu0 %v668, 20
      %v1028 = vpop.permute.xlu0 %1027
      %1029 = vrot.lane.b32.xlu0 %v670, 20
      %v1030 = vpop.permute.xlu0 %1029
      %1031 = vrot.lane.b32.xlu0 %v968, 20
      %v1032 = vpop.permute.xlu0 %1031
      %1033 = vrot.lane.b32.xlu0 %v970, 20
      %v1034 = vpop.permute.xlu0 %1033
      %1067 = vrot.lane.b32.xlu0 %v349, 24
      %v1068 = vpop.permute.xlu0 %1067
      %1069 = vrot.lane.b32.xlu0 %v255, 24
      %v1070 = vpop.permute.xlu0 %1069
      %1071 = vrot.lane.b32.xlu0 %v350, 24
      %v1072 = vpop.permute.xlu0 %1071
      %1073 = vrot.lane.b32.xlu0 %v258, 24
      %v1074 = vpop.permute.xlu0 %1073
      %1075 = vrot.lane.b32.xlu0 %v351, 24
      %v1076 = vpop.permute.xlu0 %1075
      %1077 = vrot.lane.b32.xlu0 %v261, 24
      %v1078 = vpop.permute.xlu0 %1077
      %1079 = vrot.lane.b32.xlu0 %v352, 24
      %v1080 = vpop.permute.xlu0 %1079
      %1081 = vrot.lane.b32.xlu0 %v264, 24
      %v1082 = vpop.permute.xlu0 %1081
      %1083 = vrot.lane.b32.xlu0 %v353, 24
      %v1084 = vpop.permute.xlu0 %1083
      %1085 = vrot.lane.b32.xlu0 %v267, 24
      %v1086 = vpop.permute.xlu0 %1085
      %1087 = vrot.lane.b32.xlu0 %v354, 24
      %v1088 = vpop.permute.xlu0 %1087
      %1089 = vrot.lane.b32.xlu0 %v270, 24
      %v1090 = vpop.permute.xlu0 %1089
      %1091 = vrot.lane.b32.xlu0 %v355, 24
      %v1092 = vpop.permute.xlu0 %1091
      %1093 = vrot.lane.b32.xlu0 %v273, 24
      %v1094 = vpop.permute.xlu0 %1093
      %1095 = vrot.lane.b32.xlu0 %v356, 24
      %v1096 = vpop.permute.xlu0 %1095
      %1097 = vrot.lane.b32.xlu0 %v276, 24
      %v1098 = vpop.permute.xlu0 %1097
      %1099 = vrot.lane.b32.xlu0 %v357, 24
      %v1100 = vpop.permute.xlu0 %1099
      %1101 = vrot.lane.b32.xlu0 %v279, 24
      %v1102 = vpop.permute.xlu0 %1101
      %1103 = vrot.lane.b32.xlu0 %v358, 24
      %v1104 = vpop.permute.xlu0 %1103
      %1105 = vrot.lane.b32.xlu0 %v282, 24
      %v1106 = vpop.permute.xlu0 %1105
      %1107 = vrot.lane.b32.xlu0 %v359, 24
      %v1108 = vpop.permute.xlu0 %1107
      %1109 = vrot.lane.b32.xlu0 %v285, 24
      %v1110 = vpop.permute.xlu0 %1109
      %1111 = vrot.lane.b32.xlu0 %v360, 24
      %v1112 = vpop.permute.xlu0 %1111
      %1113 = vrot.lane.b32.xlu0 %v288, 24
      %v1114 = vpop.permute.xlu0 %1113
      %1115 = vrot.lane.b32.xlu0 %v361, 24
      %v1116 = vpop.permute.xlu0 %1115
      %1117 = vrot.lane.b32.xlu0 %v291, 24
      %v1118 = vpop.permute.xlu0 %1117
      %1119 = vrot.lane.b32.xlu0 %v362, 24
      %v1120 = vpop.permute.xlu0 %1119
      %1121 = vrot.lane.b32.xlu0 %v294, 24
      %v1122 = vpop.permute.xlu0 %1121
      %1123 = vrot.lane.b32.xlu0 %v363, 24
      %v1124 = vpop.permute.xlu0 %1123
      %1125 = vrot.lane.b32.xlu0 %v297, 24
      %v1126 = vpop.permute.xlu0 %1125
      %1127 = vrot.lane.b32.xlu0 %v347, 24
      %v1128 = vpop.permute.xlu0 %1127
      %1129 = vrot.lane.b32.xlu0 %v249, 24
      %v1130 = vpop.permute.xlu0 %1129
      %1163 = vrot.lane.b32.xlu0 %v426, 28
      %v1164 = vpop.permute.xlu0 %1163
      %1165 = vrot.lane.b32.xlu0 %v428, 28
      %v1166 = vpop.permute.xlu0 %1165
      %1167 = vrot.lane.b32.xlu0 %v431, 28
      %v1168 = vpop.permute.xlu0 %1167
      %1169 = vrot.lane.b32.xlu0 %v433, 28
      %v1170 = vpop.permute.xlu0 %1169
      %1171 = vrot.lane.b32.xlu0 %v436, 28
      %v1172 = vpop.permute.xlu0 %1171
      %1173 = vrot.lane.b32.xlu0 %v438, 28
      %v1174 = vpop.permute.xlu0 %1173
      %1175 = vrot.lane.b32.xlu0 %v441, 28
      %v1176 = vpop.permute.xlu0 %1175
      %1177 = vrot.lane.b32.xlu0 %v443, 28
      %v1178 = vpop.permute.xlu0 %1177
      %1179 = vrot.lane.b32.xlu0 %v446, 28
      %v1180 = vpop.permute.xlu0 %1179
      %1181 = vrot.lane.b32.xlu0 %v448, 28
      %v1182 = vpop.permute.xlu0 %1181
      %1183 = vrot.lane.b32.xlu0 %v451, 28
      %v1184 = vpop.permute.xlu0 %1183
      %1185 = vrot.lane.b32.xlu0 %v453, 28
      %v1186 = vpop.permute.xlu0 %1185
      %1187 = vrot.lane.b32.xlu0 %v456, 28
      %v1188 = vpop.permute.xlu0 %1187
      %1189 = vrot.lane.b32.xlu0 %v458, 28
      %v1190 = vpop.permute.xlu0 %1189
      %1191 = vrot.lane.b32.xlu0 %v461, 28
      %v1192 = vpop.permute.xlu0 %1191
      %1193 = vrot.lane.b32.xlu0 %v463, 28
      %v1194 = vpop.permute.xlu0 %1193
      %1195 = vrot.lane.b32.xlu0 %v466, 28
      %v1196 = vpop.permute.xlu0 %1195
      %1197 = vrot.lane.b32.xlu0 %v468, 28
      %v1198 = vpop.permute.xlu0 %1197
      %1199 = vrot.lane.b32.xlu0 %v471, 28
      %v1200 = vpop.permute.xlu0 %1199
      %1201 = vrot.lane.b32.xlu0 %v473, 28
      %v1202 = vpop.permute.xlu0 %1201
      %1203 = vrot.lane.b32.xlu0 %v476, 28
      %v1204 = vpop.permute.xlu0 %1203
      %1205 = vrot.lane.b32.xlu0 %v478, 28
      %v1206 = vpop.permute.xlu0 %1205
      %1207 = vrot.lane.b32.xlu0 %v481, 28
      %v1208 = vpop.permute.xlu0 %1207
      %1209 = vrot.lane.b32.xlu0 %v483, 28
      %v1210 = vpop.permute.xlu0 %1209
      %1211 = vrot.lane.b32.xlu0 %v486, 28
      %v1212 = vpop.permute.xlu0 %1211
      %1213 = vrot.lane.b32.xlu0 %v488, 28
      %v1214 = vpop.permute.xlu0 %1213
      %1215 = vrot.lane.b32.xlu0 %v491, 28
      %v1216 = vpop.permute.xlu0 %1215
      %1217 = vrot.lane.b32.xlu0 %v493, 28
      %v1218 = vpop.permute.xlu0 %1217
      %1219 = vrot.lane.b32.xlu0 %v867, 28
      %v1220 = vpop.permute.xlu0 %1219
      %1221 = vrot.lane.b32.xlu0 %v869, 28
      %v1222 = vpop.permute.xlu0 %1221
      %1223 = vrot.lane.b32.xlu0 %v416, 28
      %v1224 = vpop.permute.xlu0 %1223
      %1225 = vrot.lane.b32.xlu0 %v418, 28
      %v1226 = vpop.permute.xlu0 %1225
      %1259 = vrot.lane.b32.xlu0 %v603, 32
      %v1260 = vpop.permute.xlu0 %1259
      %1261 = vrot.lane.b32.xlu0 %v605, 32
      %v1262 = vpop.permute.xlu0 %1261
      %1263 = vrot.lane.b32.xlu0 %v608, 32
      %v1264 = vpop.permute.xlu0 %1263
      %1265 = vrot.lane.b32.xlu0 %v610, 32
      %v1266 = vpop.permute.xlu0 %1265
      %1267 = vrot.lane.b32.xlu0 %v613, 32
      %v1268 = vpop.permute.xlu0 %1267
      %1269 = vrot.lane.b32.xlu0 %v615, 32
      %v1270 = vpop.permute.xlu0 %1269
      %1271 = vrot.lane.b32.xlu0 %v618, 32
      %v1272 = vpop.permute.xlu0 %1271
      %1273 = vrot.lane.b32.xlu0 %v620, 32
      %v1274 = vpop.permute.xlu0 %1273
      %1275 = vrot.lane.b32.xlu0 %v623, 32
      %v1276 = vpop.permute.xlu0 %1275
      %1277 = vrot.lane.b32.xlu0 %v625, 32
      %v1278 = vpop.permute.xlu0 %1277
      %1279 = vrot.lane.b32.xlu0 %v628, 32
      %v1280 = vpop.permute.xlu0 %1279
      %1281 = vrot.lane.b32.xlu0 %v630, 32
      %v1282 = vpop.permute.xlu0 %1281
      %1283 = vrot.lane.b32.xlu0 %v633, 32
      %v1284 = vpop.permute.xlu0 %1283
      %1285 = vrot.lane.b32.xlu0 %v635, 32
      %v1286 = vpop.permute.xlu0 %1285
      %1287 = vrot.lane.b32.xlu0 %v638, 32
      %v1288 = vpop.permute.xlu0 %1287
      %1289 = vrot.lane.b32.xlu0 %v640, 32
      %v1290 = vpop.permute.xlu0 %1289
      %1291 = vrot.lane.b32.xlu0 %v643, 32
      %v1292 = vpop.permute.xlu0 %1291
      %1293 = vrot.lane.b32.xlu0 %v645, 32
      %v1294 = vpop.permute.xlu0 %1293
      %1295 = vrot.lane.b32.xlu0 %v648, 32
      %v1296 = vpop.permute.xlu0 %1295
      %1297 = vrot.lane.b32.xlu0 %v650, 32
      %v1298 = vpop.permute.xlu0 %1297
      %1299 = vrot.lane.b32.xlu0 %v653, 32
      %v1300 = vpop.permute.xlu0 %1299
      %1301 = vrot.lane.b32.xlu0 %v655, 32
      %v1302 = vpop.permute.xlu0 %1301
      %1303 = vrot.lane.b32.xlu0 %v658, 32
      %v1304 = vpop.permute.xlu0 %1303
      %1305 = vrot.lane.b32.xlu0 %v660, 32
      %v1306 = vpop.permute.xlu0 %1305
      %1307 = vrot.lane.b32.xlu0 %v663, 32
      %v1308 = vpop.permute.xlu0 %1307
      %1309 = vrot.lane.b32.xlu0 %v665, 32
      %v1310 = vpop.permute.xlu0 %1309
      %1311 = vrot.lane.b32.xlu0 %v668, 32
      %v1312 = vpop.permute.xlu0 %1311
      %1313 = vrot.lane.b32.xlu0 %v670, 32
      %v1314 = vpop.permute.xlu0 %1313
      %1315 = vrot.lane.b32.xlu0 %v968, 32
      %v1316 = vpop.permute.xlu0 %1315
      %1317 = vrot.lane.b32.xlu0 %v970, 32
      %v1318 = vpop.permute.xlu0 %1317
      %1319 = vrot.lane.b32.xlu0 %v593, 32
      %v1320 = vpop.permute.xlu0 %1319
      %1321 = vrot.lane.b32.xlu0 %v595, 32
      %v1322 = vpop.permute.xlu0 %1321
      %vm1355 = vcmask 31744
      %v1356 = vsel %vm1355, %v347, %v495
      %v1357 = vsel %vm1355, %v249, %v497
      %v1358 = vsel %vm1355, %v348, %v499
      %v1359 = vsel %vm1355, %v252, %v501
      %v1360 = vsel %vm1355, %v349, %v503
      %v1361 = vsel %vm1355, %v255, %v505
      %v1362 = vsel %vm1355, %v350, %v507
      %v1363 = vsel %vm1355, %v258, %v509
      %v1364 = vsel %vm1355, %v351, %v511
      %v1365 = vsel %vm1355, %v261, %v513
      %v1366 = vsel %vm1355, %v352, %v515
      %v1367 = vsel %vm1355, %v264, %v517
      %v1368 = vsel %vm1355, %v353, %v519
      %v1369 = vsel %vm1355, %v267, %v521
      %v1370 = vsel %vm1355, %v354, %v523
      %v1371 = vsel %vm1355, %v270, %v525
      %v1372 = vsel %vm1355, %v355, %v527
      %v1373 = vsel %vm1355, %v273, %v529
      %v1374 = vsel %vm1355, %v356, %v531
      %v1375 = vsel %vm1355, %v276, %v533
      %v1376 = vsel %vm1355, %v357, %v535
      %v1377 = vsel %vm1355, %v279, %v537
      %v1378 = vsel %vm1355, %v358, %v539
      %v1379 = vsel %vm1355, %v282, %v541
      %v1380 = vsel %vm1355, %v359, %v543
      %v1381 = vsel %vm1355, %v285, %v545
      %v1382 = vsel %vm1355, %v360, %v547
      %v1383 = vsel %vm1355, %v288, %v549
      %v1384 = vsel %vm1355, %v361, %v551
      %v1385 = vsel %vm1355, %v291, %v553
      %v1386 = vsel %vm1355, %v362, %v555
      %v1387 = vsel %vm1355, %v294, %v557
      %vm1388 = vcmask 64512
      %v1389 = vsel %vm1388, %v1356, %v672
      %v1390 = vsel %vm1388, %v1357, %v674
      %v1391 = vsel %vm1388, %v1358, %v676
      %v1392 = vsel %vm1388, %v1359, %v678
      %v1393 = vsel %vm1388, %v1360, %v680
      %v1394 = vsel %vm1388, %v1361, %v682
      %v1395 = vsel %vm1388, %v1362, %v684
      %v1396 = vsel %vm1388, %v1363, %v686
      %v1397 = vsel %vm1388, %v1364, %v688
      %v1398 = vsel %vm1388, %v1365, %v690
      %v1399 = vsel %vm1388, %v1366, %v692
      %v1400 = vsel %vm1388, %v1367, %v694
      %v1401 = vsel %vm1388, %v1368, %v696
      %v1402 = vsel %vm1388, %v1369, %v698
      %v1403 = vsel %vm1388, %v1370, %v700
      %v1404 = vsel %vm1388, %v1371, %v702
      %v1405 = vsel %vm1388, %v1372, %v704
      %v1406 = vsel %vm1388, %v1373, %v706
      %v1407 = vsel %vm1388, %v1374, %v708
      %v1408 = vsel %vm1388, %v1375, %v710
      %v1409 = vsel %vm1388, %v1376, %v712
      %v1410 = vsel %vm1388, %v1377, %v714
      %v1411 = vsel %vm1388, %v1378, %v716
      %v1412 = vsel %vm1388, %v1379, %v718
      %v1413 = vsel %vm1388, %v1380, %v720
      %v1414 = vsel %vm1388, %v1381, %v722
      %v1415 = vsel %vm1388, %v1382, %v724
      %v1416 = vsel %vm1388, %v1383, %v726
      %v1417 = vsel %vm1388, %v1384, %v728
      %v1418 = vsel %vm1388, %v1385, %v730
      %v1419 = vsel %vm1388, %v1386, %v732
      %v1420 = vsel %vm1388, %v1387, %v734
      %vm1421 = vcmask 97280
      %v1422 = vsel %vm1421, %v1389, %v769
      %v1423 = vsel %vm1421, %v1390, %v771
      %v1424 = vsel %vm1421, %v1391, %v773
      %v1425 = vsel %vm1421, %v1392, %v775
      %v1426 = vsel %vm1421, %v1393, %v777
      %v1427 = vsel %vm1421, %v1394, %v779
      %v1428 = vsel %vm1421, %v1395, %v781
      %v1429 = vsel %vm1421, %v1396, %v783
      %v1430 = vsel %vm1421, %v1397, %v785
      %v1431 = vsel %vm1421, %v1398, %v787
      %v1432 = vsel %vm1421, %v1399, %v789
      %v1433 = vsel %vm1421, %v1400, %v791
      %v1434 = vsel %vm1421, %v1401, %v793
      %v1435 = vsel %vm1421, %v1402, %v795
      %v1436 = vsel %vm1421, %v1403, %v797
      %v1437 = vsel %vm1421, %v1404, %v799
      %v1438 = vsel %vm1421, %v1405, %v801
      %v1439 = vsel %vm1421, %v1406, %v803
      %v1440 = vsel %vm1421, %v1407, %v805
      %v1441 = vsel %vm1421, %v1408, %v807
      %v1442 = vsel %vm1421, %v1409, %v809
      %v1443 = vsel %vm1421, %v1410, %v811
      %v1444 = vsel %vm1421, %v1411, %v813
      %v1445 = vsel %vm1421, %v1412, %v815
      %v1446 = vsel %vm1421, %v1413, %v817
      %v1447 = vsel %vm1421, %v1414, %v819
      %v1448 = vsel %vm1421, %v1415, %v821
      %v1449 = vsel %vm1421, %v1416, %v823
      %v1450 = vsel %vm1421, %v1417, %v825
      %v1451 = vsel %vm1421, %v1418, %v827
      %v1452 = vsel %vm1421, %v1419, %v829
      %v1453 = vsel %vm1421, %v1420, %v831
      %vm1454 = vcmask 130048
      %v1455 = vsel %vm1454, %v1422, %v871
      %v1456 = vsel %vm1454, %v1423, %v873
      %v1457 = vsel %vm1454, %v1424, %v875
      %v1458 = vsel %vm1454, %v1425, %v877
      %v1459 = vsel %vm1454, %v1426, %v879
      %v1460 = vsel %vm1454, %v1427, %v881
      %v1461 = vsel %vm1454, %v1428, %v883
      %v1462 = vsel %vm1454, %v1429, %v885
      %v1463 = vsel %vm1454, %v1430, %v887
      %v1464 = vsel %vm1454, %v1431, %v889
      %v1465 = vsel %vm1454, %v1432, %v891
      %v1466 = vsel %vm1454, %v1433, %v893
      %v1467 = vsel %vm1454, %v1434, %v895
      %v1468 = vsel %vm1454, %v1435, %v897
      %v1469 = vsel %vm1454, %v1436, %v899
      %v1470 = vsel %vm1454, %v1437, %v901
      %v1471 = vsel %vm1454, %v1438, %v903
      %v1472 = vsel %vm1454, %v1439, %v905
      %v1473 = vsel %vm1454, %v1440, %v907
      %v1474 = vsel %vm1454, %v1441, %v909
      %v1475 = vsel %vm1454, %v1442, %v911
      %v1476 = vsel %vm1454, %v1443, %v913
      %v1477 = vsel %vm1454, %v1444, %v915
      %v1478 = vsel %vm1454, %v1445, %v917
      %v1479 = vsel %vm1454, %v1446, %v919
      %v1480 = vsel %vm1454, %v1447, %v921
      %v1481 = vsel %vm1454, %v1448, %v923
      %v1482 = vsel %vm1454, %v1449, %v925
      %v1483 = vsel %vm1454, %v1450, %v927
      %v1484 = vsel %vm1454, %v1451, %v929
      %v1485 = vsel %vm1454, %v1452, %v931
      %v1486 = vsel %vm1454, %v1453, %v933
      %vm1487 = vcmask 162816
      %v1488 = vsel %vm1487, %v1455, %v972
      %v1489 = vsel %vm1487, %v1456, %v974
      %v1490 = vsel %vm1487, %v1457, %v976
      %v1491 = vsel %vm1487, %v1458, %v978
      %v1492 = vsel %vm1487, %v1459, %v980
      %v1493 = vsel %vm1487, %v1460, %v982
      %v1494 = vsel %vm1487, %v1461, %v984
      %v1495 = vsel %vm1487, %v1462, %v986
      %v1496 = vsel %vm1487, %v1463, %v988
      %v1497 = vsel %vm1487, %v1464, %v990
      %v1498 = vsel %vm1487, %v1465, %v992
      %v1499 = vsel %vm1487, %v1466, %v994
      %v1500 = vsel %vm1487, %v1467, %v996
      %v1501 = vsel %vm1487, %v1468, %v998
      %v1502 = vsel %vm1487, %v1469, %v1000
      %v1503 = vsel %vm1487, %v1470, %v1002
      %v1504 = vsel %vm1487, %v1471, %v1004
      %v1505 = vsel %vm1487, %v1472, %v1006
      %v1506 = vsel %vm1487, %v1473, %v1008
      %v1507 = vsel %vm1487, %v1474, %v1010
      %v1508 = vsel %vm1487, %v1475, %v1012
      %v1509 = vsel %vm1487, %v1476, %v1014
      %v1510 = vsel %vm1487, %v1477, %v1016
      %v1511 = vsel %vm1487, %v1478, %v1018
      %v1512 = vsel %vm1487, %v1479, %v1020
      %v1513 = vsel %vm1487, %v1480, %v1022
      %v1514 = vsel %vm1487, %v1481, %v1024
      %v1515 = vsel %vm1487, %v1482, %v1026
      %v1516 = vsel %vm1487, %v1483, %v1028
      %v1517 = vsel %vm1487, %v1484, %v1030
      %v1518 = vsel %vm1487, %v1485, %v1032
      %v1519 = vsel %vm1487, %v1486, %v1034
      %vm1520 = vcmask 195584
      %v1521 = vsel %vm1520, %v1488, %v1068
      %v1522 = vsel %vm1520, %v1489, %v1070
      %v1523 = vsel %vm1520, %v1490, %v1072
      %v1524 = vsel %vm1520, %v1491, %v1074
      %v1525 = vsel %vm1520, %v1492, %v1076
      %v1526 = vsel %vm1520, %v1493, %v1078
      %v1527 = vsel %vm1520, %v1494, %v1080
      %v1528 = vsel %vm1520, %v1495, %v1082
      %v1529 = vsel %vm1520, %v1496, %v1084
      %v1530 = vsel %vm1520, %v1497, %v1086
      %v1531 = vsel %vm1520, %v1498, %v1088
      %v1532 = vsel %vm1520, %v1499, %v1090
      %v1533 = vsel %vm1520, %v1500, %v1092
      %v1534 = vsel %vm1520, %v1501, %v1094
      %v1535 = vsel %vm1520, %v1502, %v1096
      %v1536 = vsel %vm1520, %v1503, %v1098
      %v1537 = vsel %vm1520, %v1504, %v1100
      %v1538 = vsel %vm1520, %v1505, %v1102
      %v1539 = vsel %vm1520, %v1506, %v1104
      %v1540 = vsel %vm1520, %v1507, %v1106
      %v1541 = vsel %vm1520, %v1508, %v1108
      %v1542 = vsel %vm1520, %v1509, %v1110
      %v1543 = vsel %vm1520, %v1510, %v1112
      %v1544 = vsel %vm1520, %v1511, %v1114
      %v1545 = vsel %vm1520, %v1512, %v1116
      %v1546 = vsel %vm1520, %v1513, %v1118
      %v1547 = vsel %vm1520, %v1514, %v1120
      %v1548 = vsel %vm1520, %v1515, %v1122
      %v1549 = vsel %vm1520, %v1516, %v1124
      %v1550 = vsel %vm1520, %v1517, %v1126
      %v1551 = vsel %vm1520, %v1518, %v1128
      %v1552 = vsel %vm1520, %v1519, %v1130
      %vm1553 = vcmask 228352
      %v1554 = vsel %vm1553, %v1521, %v1164
      %v1555 = vsel %vm1553, %v1522, %v1166
      %v1556 = vsel %vm1553, %v1523, %v1168
      %v1557 = vsel %vm1553, %v1524, %v1170
      %v1558 = vsel %vm1553, %v1525, %v1172
      %v1559 = vsel %vm1553, %v1526, %v1174
      %v1560 = vsel %vm1553, %v1527, %v1176
      %v1561 = vsel %vm1553, %v1528, %v1178
      %v1562 = vsel %vm1553, %v1529, %v1180
      %v1563 = vsel %vm1553, %v1530, %v1182
      %v1564 = vsel %vm1553, %v1531, %v1184
      %v1565 = vsel %vm1553, %v1532, %v1186
      %v1566 = vsel %vm1553, %v1533, %v1188
      %v1567 = vsel %vm1553, %v1534, %v1190
      %v1568 = vsel %vm1553, %v1535, %v1192
      %v1569 = vsel %vm1553, %v1536, %v1194
      %v1570 = vsel %vm1553, %v1537, %v1196
      %v1571 = vsel %vm1553, %v1538, %v1198
      %v1572 = vsel %vm1553, %v1539, %v1200
      %v1573 = vsel %vm1553, %v1540, %v1202
      %v1574 = vsel %vm1553, %v1541, %v1204
      %v1575 = vsel %vm1553, %v1542, %v1206
      %v1576 = vsel %vm1553, %v1543, %v1208
      %v1577 = vsel %vm1553, %v1544, %v1210
      %v1578 = vsel %vm1553, %v1545, %v1212
      %v1579 = vsel %vm1553, %v1546, %v1214
      %v1580 = vsel %vm1553, %v1547, %v1216
      %v1581 = vsel %vm1553, %v1548, %v1218
      %v1582 = vsel %vm1553, %v1549, %v1220
      %v1583 = vsel %vm1553, %v1550, %v1222
      %v1584 = vsel %vm1553, %v1551, %v1224
      %v1585 = vsel %vm1553, %v1552, %v1226
      %vm1586 = vcmask 261120
      %v1587 = vsel %vm1586, %v1554, %v1260
      %v1588 = vsel %vm1586, %v1555, %v1262
      %v1589 = vsel %vm1586, %v1556, %v1264
      %v1590 = vsel %vm1586, %v1557, %v1266
      %v1591 = vsel %vm1586, %v1558, %v1268
      %v1592 = vsel %vm1586, %v1559, %v1270
      %v1593 = vsel %vm1586, %v1560, %v1272
      %v1594 = vsel %vm1586, %v1561, %v1274
      %v1595 = vsel %vm1586, %v1562, %v1276
      %v1596 = vsel %vm1586, %v1563, %v1278
      %v1597 = vsel %vm1586, %v1564, %v1280
      %v1598 = vsel %vm1586, %v1565, %v1282
      %v1599 = vsel %vm1586, %v1566, %v1284
      %v1600 = vsel %vm1586, %v1567, %v1286
      %v1601 = vsel %vm1586, %v1568, %v1288
      %v1602 = vsel %vm1586, %v1569, %v1290
      %v1603 = vsel %vm1586, %v1570, %v1292
      %v1604 = vsel %vm1586, %v1571, %v1294
      %v1605 = vsel %vm1586, %v1572, %v1296
      %v1606 = vsel %vm1586, %v1573, %v1298
      %v1607 = vsel %vm1586, %v1574, %v1300
      %v1608 = vsel %vm1586, %v1575, %v1302
      %v1609 = vsel %vm1586, %v1576, %v1304
      %v1610 = vsel %vm1586, %v1577, %v1306
      %v1611 = vsel %vm1586, %v1578, %v1308
      %v1612 = vsel %vm1586, %v1579, %v1310
      %v1613 = vsel %vm1586, %v1580, %v1312
      %v1614 = vsel %vm1586, %v1581, %v1314
      %v1615 = vsel %vm1586, %v1582, %v1316
      %v1616 = vsel %vm1586, %v1583, %v1318
      %v1617 = vsel %vm1586, %v1584, %v1320
      %v1618 = vsel %vm1586, %v1585, %v1322
      %v1619 = vld [vmem:[%s1] sm:$0xff]
      %v1620 = vld [vmem:[%s1 + $0x8] sm:$0xff]
      %v1621 = vld [vmem:[%s1 + $0x10] sm:$0xff]
      %v1622 = vld [vmem:[%s1 + $0x18] sm:$0xff]
      %v1623 = vld [vmem:[%s1 + $0x20] sm:$0xf]
      %vm1624 = vcmask 293888
      %v1626 = vsel %vm1624, %v1587, 0
      %v1629 = vsel %vm1624, %v1588, 0
      %v1632 = vsel %vm1624, %v1589, 0
      %v1635 = vsel %vm1624, %v1590, 0
      %v1638 = vsel %vm1624, %v1591, 0
      %v1641 = vsel %vm1624, %v1592, 0
      %v1644 = vsel %vm1624, %v1593, 0
      %v1647 = vsel %vm1624, %v1594, 0
      %v1650 = vsel %vm1624, %v1595, 0
      %v1653 = vsel %vm1624, %v1596, 0
      %v1656 = vsel %vm1624, %v1597, 0
      %v1659 = vsel %vm1624, %v1598, 0
      %v1662 = vsel %vm1624, %v1599, 0
      %v1665 = vsel %vm1624, %v1600, 0
      %v1668 = vsel %vm1624, %v1601, 0
      %v1671 = vsel %vm1624, %v1602, 0
      %v1674 = vsel %vm1624, %v1603, 0
      %v1677 = vsel %vm1624, %v1604, 0
      %v1680 = vsel %vm1624, %v1605, 0
      %v1683 = vsel %vm1624, %v1606, 0
      %v1686 = vsel %vm1624, %v1607, 0
      %v1689 = vsel %vm1624, %v1608, 0
      %v1692 = vsel %vm1624, %v1609, 0
      %v1695 = vsel %vm1624, %v1610, 0
      %v1698 = vsel %vm1624, %v1611, 0
      %v1701 = vsel %vm1624, %v1612, 0
      %v1704 = vsel %vm1624, %v1613, 0
      %v1707 = vsel %vm1624, %v1614, 0
      %v1710 = vsel %vm1624, %v1615, 0
      %v1713 = vsel %vm1624, %v1616, 0
      %v1716 = vsel %vm1624, %v1617, 0
      %v1719 = vsel %vm1624, %v1618, 0
      %vm1721 = vcmask 1043456
      %v1723 = vsel %vm1721, %v1623, 0
      %1725 = vmatprep.subr.mxu0 0.0
      %1726 = vmatpush1.msra.mxu0 0.0
      %1727 = vmatprep.subr.mxu0 0.0
      %1728 = vmatpush1.msra.mxu0 0.0
      %1729 = vmatprep.subr.mxu0 0.0
      %1730 = vmatpush1.msra.mxu0 0.0
      %1731 = vmatprep.subr.mxu0 0.0
      %1732 = vmatpush1.msra.mxu0 0.0
      %1733 = vmatprep.subr.mxu0 0.0
      %1734 = vmatpush1.msra.mxu0 0.0
      %1735 = vmatprep.subr.mxu0 0.0
      %1736 = vmatpush1.msra.mxu0 0.0
      %1737 = vmatprep.subr.mxu0 0.0
      %1738 = vmatpush1.msra.mxu0 0.0
      %1739 = vmatprep.subr.mxu0 0.0
      %1740 = vmatpush1.msra.mxu0 0.0
      %1741 = vmatprep.subr.mxu0 0.0
      %1742 = vmatpush1.msra.mxu0 0.0
      %1743 = vmatprep.subr.mxu0 0.0
      %1744 = vmatpush1.msra.mxu0 0.0
      %1745 = vmatprep.subr.mxu0 0.0
      %1746 = vmatpush1.msra.mxu0 0.0
      %1747 = vmatprep.subr.mxu0 0.0
      %1748 = vmatpush1.msra.mxu0 %v1723
      %1749 = vmatprep.subr.mxu0 0.0
      %1750 = vmatpush1.msra.mxu0 %v1622
      %1751 = vmatprep.subr.mxu0 0.0
      %1752 = vmatpush1.msra.mxu0 %v1621
      %1753 = vmatprep.subr.mxu0 0.0
      %1754 = vmatpush1.msra.mxu0 %v1620
      %1755 = vmatprep.subr.mxu0 0.0
      %1756 = vmatpush1.msra.mxu0 %v1619
      %1757 = vmatprep.subr.mxu0 0.0
      %1758 = vmatpush2.msra.mxu0 0.0
      %1759 = vmatprep.subr.mxu0 0.0
      %1760 = vmatpush2.msra.mxu0 0.0
      %1761 = vmatprep.subr.mxu0 0.0
      %1762 = vmatpush2.msra.mxu0 0.0
      %1763 = vmatprep.subr.mxu0 0.0
      %1764 = vmatpush2.msra.mxu0 0.0
      %1765 = vmatprep.subr.mxu0 0.0
      %1766 = vmatpush2.msra.mxu0 0.0
      %1767 = vmatprep.subr.mxu0 0.0
      %1768 = vmatpush2.msra.mxu0 0.0
      %1769 = vmatprep.subr.mxu0 0.0
      %1770 = vmatpush2.msra.mxu0 0.0
      %1771 = vmatprep.subr.mxu0 0.0
      %1772 = vmatpush2.msra.mxu0 0.0
      %1773 = vmatprep.subr.mxu0 0.0
      %1774 = vmatpush2.msra.mxu0 0.0
      %1775 = vmatprep.subr.mxu0 0.0
      %1776 = vmatpush2.msra.mxu0 0.0
      %1777 = vmatprep.subr.mxu0 0.0
      %1778 = vmatpush2.msra.mxu0 0.0
      %1779 = vmatprep.subr.mxu0 0.0
      %1780 = vmatpush2.msra.mxu0 0.0
      %1781 = vmatprep.subr.mxu0 0.0
      %1782 = vmatpush2.msra.mxu0 0.0
      %1783 = vmatprep.subr.mxu0 0.0
      %1784 = vmatpush2.msra.mxu0 0.0
      %1785 = vmatprep.subr.mxu0 0.0
      %1786 = vmatpush2.msra.mxu0 0.0
      %1787 = vmatprep.subr.mxu0 0.0
      %1788 = vmatpush2.msra.mxu0 0.0
      %1789 = vmatprep.mubr.f32.mxu0 0.0
      %1790 = vmatmul.mubr.f32.gmra.mxu0 %v1626
      %v1791 = vpop.f32.mrf.mxu0
      %v1792 = vadd.f32 0.0, %v1791
      %v1793 = vpop.f32.mrf.mxu0
      %1794 = vmatprep.mubr.f32.mxu0 0.0
      %1795 = vmatmul.mubr.f32.gmra.mxu0 %v1629
      %v1796 = vpop.f32.mrf.mxu0
      %v1797 = vadd.f32 0.0, %v1796
      %v1798 = vpop.f32.mrf.mxu0
      %1799 = vmatprep.mubr.f32.mxu0 0.0
      %1800 = vmatmul.mubr.f32.gmra.mxu0 %v1632
      %v1801 = vpop.f32.mrf.mxu0
      %v1802 = vadd.f32 0.0, %v1801
      %v1803 = vpop.f32.mrf.mxu0
      %1804 = vmatprep.mubr.f32.mxu0 0.0
      %1805 = vmatmul.mubr.f32.gmra.mxu0 %v1635
      %v1806 = vpop.f32.mrf.mxu0
      %v1807 = vadd.f32 0.0, %v1806
      %v1808 = vpop.f32.mrf.mxu0
      %1809 = vmatprep.mubr.f32.mxu0 0.0
      %1810 = vmatmul.mubr.f32.gmra.mxu0 %v1638
      %v1811 = vpop.f32.mrf.mxu0
      %v1812 = vadd.f32 0.0, %v1811
      %v1813 = vpop.f32.mrf.mxu0
      %1814 = vmatprep.mubr.f32.mxu0 0.0
      %1815 = vmatmul.mubr.f32.gmra.mxu0 %v1641
      %v1816 = vpop.f32.mrf.mxu0
      %v1817 = vadd.f32 0.0, %v1816
      %v1818 = vpop.f32.mrf.mxu0
      %1819 = vmatprep.mubr.f32.mxu0 0.0
      %1820 = vmatmul.mubr.f32.gmra.mxu0 %v1644
      %v1821 = vpop.f32.mrf.mxu0
      %v1822 = vadd.f32 0.0, %v1821
      %v1823 = vpop.f32.mrf.mxu0
      %1824 = vmatprep.mubr.f32.mxu0 0.0
      %1825 = vmatmul.mubr.f32.gmra.mxu0 %v1647
      %v1826 = vpop.f32.mrf.mxu0
      %v1827 = vadd.f32 0.0, %v1826
      %v1828 = vpop.f32.mrf.mxu0
      %1829 = vmatprep.mubr.f32.mxu0 0.0
      %1830 = vmatmul.mubr.f32.gmra.mxu0 %v1650
      %v1831 = vpop.f32.mrf.mxu0
      %v1832 = vadd.f32 0.0, %v1831
      %v1833 = vpop.f32.mrf.mxu0
      %1834 = vmatprep.mubr.f32.mxu0 0.0
      %1835 = vmatmul.mubr.f32.gmra.mxu0 %v1653
      %v1836 = vpop.f32.mrf.mxu0
      %v1837 = vadd.f32 0.0, %v1836
      %v1838 = vpop.f32.mrf.mxu0
      %1839 = vmatprep.mubr.f32.mxu0 0.0
      %1840 = vmatmul.mubr.f32.gmra.mxu0 %v1656
      %v1841 = vpop.f32.mrf.mxu0
      %v1842 = vadd.f32 0.0, %v1841
      %v1843 = vpop.f32.mrf.mxu0
      %1844 = vmatprep.mubr.f32.mxu0 0.0
      %1845 = vmatmul.mubr.f32.gmra.mxu0 %v1659
      %v1846 = vpop.f32.mrf.mxu0
      %v1847 = vadd.f32 0.0, %v1846
      %v1848 = vpop.f32.mrf.mxu0
      %1849 = vmatprep.mubr.f32.mxu0 0.0
      %1850 = vmatmul.mubr.f32.gmra.mxu0 %v1662
      %v1851 = vpop.f32.mrf.mxu0
      %v1852 = vadd.f32 0.0, %v1851
      %v1853 = vpop.f32.mrf.mxu0
      %1854 = vmatprep.mubr.f32.mxu0 0.0
      %1855 = vmatmul.mubr.f32.gmra.mxu0 %v1665
      %v1856 = vpop.f32.mrf.mxu0
      %v1857 = vadd.f32 0.0, %v1856
      %v1858 = vpop.f32.mrf.mxu0
      %1859 = vmatprep.mubr.f32.mxu0 0.0
      %1860 = vmatmul.mubr.f32.gmra.mxu0 %v1668
      %v1861 = vpop.f32.mrf.mxu0
      %v1862 = vadd.f32 0.0, %v1861
      %v1863 = vpop.f32.mrf.mxu0
      %1864 = vmatprep.mubr.f32.mxu0 0.0
      %1865 = vmatmul.mubr.f32.gmra.mxu0 %v1671
      %v1866 = vpop.f32.mrf.mxu0
      %v1867 = vadd.f32 0.0, %v1866
      %v1868 = vpop.f32.mrf.mxu0
      %1869 = vmatprep.mubr.f32.mxu0 0.0
      %1870 = vmatmul.mubr.f32.gmra.mxu0 %v1674
      %v1871 = vpop.f32.mrf.mxu0
      %v1872 = vadd.f32 0.0, %v1871
      %v1873 = vpop.f32.mrf.mxu0
      %1874 = vmatprep.mubr.f32.mxu0 0.0
      %1875 = vmatmul.mubr.f32.gmra.mxu0 %v1677
      %v1876 = vpop.f32.mrf.mxu0
      %v1877 = vadd.f32 0.0, %v1876
      %v1878 = vpop.f32.mrf.mxu0
      %1879 = vmatprep.mubr.f32.mxu0 0.0
      %1880 = vmatmul.mubr.f32.gmra.mxu0 %v1680
      %v1881 = vpop.f32.mrf.mxu0
      %v1882 = vadd.f32 0.0, %v1881
      %v1883 = vpop.f32.mrf.mxu0
      %1884 = vmatprep.mubr.f32.mxu0 0.0
      %1885 = vmatmul.mubr.f32.gmra.mxu0 %v1683
      %v1886 = vpop.f32.mrf.mxu0
      %v1887 = vadd.f32 0.0, %v1886
      %v1888 = vpop.f32.mrf.mxu0
      %1889 = vmatprep.mubr.f32.mxu0 0.0
      %1890 = vmatmul.mubr.f32.gmra.mxu0 %v1686
      %v1891 = vpop.f32.mrf.mxu0
      %v1892 = vadd.f32 0.0, %v1891
      %v1893 = vpop.f32.mrf.mxu0
      %1894 = vmatprep.mubr.f32.mxu0 0.0
      %1895 = vmatmul.mubr.f32.gmra.mxu0 %v1689
      %v1896 = vpop.f32.mrf.mxu0
      %v1897 = vadd.f32 0.0, %v1896
      %v1898 = vpop.f32.mrf.mxu0
      %1899 = vmatprep.mubr.f32.mxu0 0.0
      %1900 = vmatmul.mubr.f32.gmra.mxu0 %v1692
      %v1901 = vpop.f32.mrf.mxu0
      %v1902 = vadd.f32 0.0, %v1901
      %v1903 = vpop.f32.mrf.mxu0
      %1904 = vmatprep.mubr.f32.mxu0 0.0
      %1905 = vmatmul.mubr.f32.gmra.mxu0 %v1695
      %v1906 = vpop.f32.mrf.mxu0
      %v1907 = vadd.f32 0.0, %v1906
      %v1908 = vpop.f32.mrf.mxu0
      %1909 = vmatprep.mubr.f32.mxu0 0.0
      %1910 = vmatmul.mubr.f32.gmra.mxu0 %v1698
      %v1911 = vpop.f32.mrf.mxu0
      %v1912 = vadd.f32 0.0, %v1911
      %v1913 = vpop.f32.mrf.mxu0
      %1914 = vmatprep.mubr.f32.mxu0 0.0
      %1915 = vmatmul.mubr.f32.gmra.mxu0 %v1701
      %v1916 = vpop.f32.mrf.mxu0
      %v1917 = vadd.f32 0.0, %v1916
      %v1918 = vpop.f32.mrf.mxu0
      %1919 = vmatprep.mubr.f32.mxu0 0.0
      %1920 = vmatmul.mubr.f32.gmra.mxu0 %v1704
      %v1921 = vpop.f32.mrf.mxu0
      %v1922 = vadd.f32 0.0, %v1921
      %v1923 = vpop.f32.mrf.mxu0
      %1924 = vmatprep.mubr.f32.mxu0 0.0
      %1925 = vmatmul.mubr.f32.gmra.mxu0 %v1707
      %v1926 = vpop.f32.mrf.mxu0
      %v1927 = vadd.f32 0.0, %v1926
      %v1928 = vpop.f32.mrf.mxu0
      %1929 = vmatprep.mubr.f32.mxu0 0.0
      %1930 = vmatmul.mubr.f32.gmra.mxu0 %v1710
      %v1931 = vpop.f32.mrf.mxu0
      %v1932 = vadd.f32 0.0, %v1931
      %v1933 = vpop.f32.mrf.mxu0
      %1934 = vmatprep.mubr.f32.mxu0 0.0
      %1935 = vmatmul.mubr.f32.gmra.mxu0 %v1713
      %v1936 = vpop.f32.mrf.mxu0
      %v1937 = vadd.f32 0.0, %v1936
      %v1938 = vpop.f32.mrf.mxu0
      %1939 = vmatprep.mubr.f32.mxu0 0.0
      %1940 = vmatmul.mubr.f32.gmra.mxu0 %v1716
      %v1941 = vpop.f32.mrf.mxu0
      %v1942 = vadd.f32 0.0, %v1941
      %v1943 = vpop.f32.mrf.mxu0
      %1944 = vmatprep.mubr.f32.mxu0 0.0
      %1945 = vmatmul.mubr.f32.gmra.mxu0 %v1719
      %v1946 = vpop.f32.mrf.mxu0
      %v1947 = vadd.f32 0.0, %v1946
      %v1948 = vpop.f32.mrf.mxu0
      %1949 = vdwg.mxu0
      %v1950 = vsel %vm1388, %v1792, 0.0
      %v1951 = vsel %vm1388, %v1797, 0.0
      %v1952 = vadd.f32 %v1950, %v1951
      %v1953 = vsel %vm1388, %v1802, 0.0
      %v1954 = vadd.f32 %v1952, %v1953
      %v1955 = vsel %vm1388, %v1807, 0.0
      %v1956 = vadd.f32 %v1954, %v1955
      %v1957 = vsel %vm1388, %v1812, 0.0
      %v1958 = vadd.f32 %v1956, %v1957
      %v1959 = vsel %vm1388, %v1817, 0.0
      %v1960 = vadd.f32 %v1958, %v1959
      %v1961 = vsel %vm1388, %v1822, 0.0
      %v1962 = vadd.f32 %v1960, %v1961
      %v1963 = vsel %vm1388, %v1827, 0.0
      %v1964 = vadd.f32 %v1962, %v1963
      %v1965 = vsel %vm1388, %v1832, 0.0
      %v1966 = vadd.f32 %v1964, %v1965
      %v1967 = vsel %vm1388, %v1837, 0.0
      %v1968 = vadd.f32 %v1966, %v1967
      %v1969 = vsel %vm1388, %v1842, 0.0
      %v1970 = vadd.f32 %v1968, %v1969
      %v1971 = vsel %vm1388, %v1847, 0.0
      %v1972 = vadd.f32 %v1970, %v1971
      %v1973 = vsel %vm1388, %v1852, 0.0
      %v1974 = vadd.f32 %v1972, %v1973
      %v1975 = vsel %vm1388, %v1857, 0.0
      %v1976 = vadd.f32 %v1974, %v1975
      %v1977 = vsel %vm1388, %v1862, 0.0
      %v1978 = vadd.f32 %v1976, %v1977
      %v1979 = vsel %vm1388, %v1867, 0.0
      %v1980 = vadd.f32 %v1978, %v1979
      %v1981 = vsel %vm1388, %v1872, 0.0
      %v1982 = vadd.f32 %v1980, %v1981
      %v1983 = vsel %vm1388, %v1877, 0.0
      %v1984 = vadd.f32 %v1982, %v1983
      %v1985 = vsel %vm1388, %v1882, 0.0
      %v1986 = vadd.f32 %v1984, %v1985
      %v1987 = vsel %vm1388, %v1887, 0.0
      %v1988 = vadd.f32 %v1986, %v1987
      %v1989 = vsel %vm1388, %v1892, 0.0
      %v1990 = vadd.f32 %v1988, %v1989
      %v1991 = vsel %vm1388, %v1897, 0.0
      %v1992 = vadd.f32 %v1990, %v1991
      %v1993 = vsel %vm1388, %v1902, 0.0
      %v1994 = vadd.f32 %v1992, %v1993
      %v1995 = vsel %vm1388, %v1907, 0.0
      %v1996 = vadd.f32 %v1994, %v1995
      %v1997 = vsel %vm1388, %v1912, 0.0
      %v1998 = vadd.f32 %v1996, %v1997
      %v1999 = vsel %vm1388, %v1917, 0.0
      %v2000 = vadd.f32 %v1998, %v1999
      %v2001 = vsel %vm1388, %v1922, 0.0
      %v2002 = vadd.f32 %v2000, %v2001
      %v2003 = vsel %vm1388, %v1927, 0.0
      %v2004 = vadd.f32 %v2002, %v2003
      %v2005 = vsel %vm1388, %v1932, 0.0
      %v2006 = vadd.f32 %v2004, %v2005
      %v2007 = vsel %vm1388, %v1937, 0.0
      %v2008 = vadd.f32 %v2006, %v2007
      %v2009 = vsel %vm1388, %v1942, 0.0
      %v2010 = vadd.f32 %v2008, %v2009
      %v2011 = vsel %vm1388, %v1947, 0.0
      %v2012 = vadd.f32 %v2010, %v2011
      %v2013 = vrot.slane %v2012, 4
      %v2014 = vadd.f32 %v2012, %v2013
      %v2015 = vrot.slane %v2014, 2
      %v2016 = vadd.f32 %v2014, %v2015
      %v2017 = vrot.slane %v2016, 1
      %v2018 = vadd.f32 %v2016, %v2017
      %v2019 = vmul.f32 %v1792, %v1792
      %v2020 = vmul.f32 %v1797, %v1797
      %v2021 = vmul.f32 %v1802, %v1802
      %v2022 = vmul.f32 %v1807, %v1807
      %v2023 = vmul.f32 %v1812, %v1812
      %v2024 = vmul.f32 %v1817, %v1817
      %v2025 = vmul.f32 %v1822, %v1822
      %v2026 = vmul.f32 %v1827, %v1827
      %v2027 = vmul.f32 %v1832, %v1832
      %v2028 = vmul.f32 %v1837, %v1837
      %v2029 = vmul.f32 %v1842, %v1842
      %v2030 = vmul.f32 %v1847, %v1847
      %v2031 = vmul.f32 %v1852, %v1852
      %v2032 = vmul.f32 %v1857, %v1857
      %v2033 = vmul.f32 %v1862, %v1862
      %v2034 = vmul.f32 %v1867, %v1867
      %v2035 = vmul.f32 %v1872, %v1872
      %v2036 = vmul.f32 %v1877, %v1877
      %v2037 = vmul.f32 %v1882, %v1882
      %v2038 = vmul.f32 %v1887, %v1887
      %v2039 = vmul.f32 %v1892, %v1892
      %v2040 = vmul.f32 %v1897, %v1897
      %v2041 = vmul.f32 %v1902, %v1902
      %v2042 = vmul.f32 %v1907, %v1907
      %v2043 = vmul.f32 %v1912, %v1912
      %v2044 = vmul.f32 %v1917, %v1917
      %v2045 = vmul.f32 %v1922, %v1922
      %v2046 = vmul.f32 %v1927, %v1927
      %v2047 = vmul.f32 %v1932, %v1932
      %v2048 = vmul.f32 %v1937, %v1937
      %v2049 = vmul.f32 %v1942, %v1942
      %v2050 = vmul.f32 %v1947, %v1947
      %v2051 = vsel %vm1388, %v2019, 0.0
      %v2052 = vsel %vm1388, %v2020, 0.0
      %v2053 = vadd.f32 %v2051, %v2052
      %v2054 = vsel %vm1388, %v2021, 0.0
      %v2055 = vadd.f32 %v2053, %v2054
      %v2056 = vsel %vm1388, %v2022, 0.0
      %v2057 = vadd.f32 %v2055, %v2056
      %v2058 = vsel %vm1388, %v2023, 0.0
      %v2059 = vadd.f32 %v2057, %v2058
      %v2060 = vsel %vm1388, %v2024, 0.0
      %v2061 = vadd.f32 %v2059, %v2060
      %v2062 = vsel %vm1388, %v2025, 0.0
      %v2063 = vadd.f32 %v2061, %v2062
      %v2064 = vsel %vm1388, %v2026, 0.0
      %v2065 = vadd.f32 %v2063, %v2064
      %v2066 = vsel %vm1388, %v2027, 0.0
      %v2067 = vadd.f32 %v2065, %v2066
      %v2068 = vsel %vm1388, %v2028, 0.0
      %v2069 = vadd.f32 %v2067, %v2068
      %v2070 = vsel %vm1388, %v2029, 0.0
      %v2071 = vadd.f32 %v2069, %v2070
      %v2072 = vsel %vm1388, %v2030, 0.0
      %v2073 = vadd.f32 %v2071, %v2072
      %v2074 = vsel %vm1388, %v2031, 0.0
      %v2075 = vadd.f32 %v2073, %v2074
      %v2076 = vsel %vm1388, %v2032, 0.0
      %v2077 = vadd.f32 %v2075, %v2076
      %v2078 = vsel %vm1388, %v2033, 0.0
      %v2079 = vadd.f32 %v2077, %v2078
      %v2080 = vsel %vm1388, %v2034, 0.0
      %v2081 = vadd.f32 %v2079, %v2080
      %v2082 = vsel %vm1388, %v2035, 0.0
      %v2083 = vadd.f32 %v2081, %v2082
      %v2084 = vsel %vm1388, %v2036, 0.0
      %v2085 = vadd.f32 %v2083, %v2084
      %v2086 = vsel %vm1388, %v2037, 0.0
      %v2087 = vadd.f32 %v2085, %v2086
      %v2088 = vsel %vm1388, %v2038, 0.0
      %v2089 = vadd.f32 %v2087, %v2088
      %v2090 = vsel %vm1388, %v2039, 0.0
      %v2091 = vadd.f32 %v2089, %v2090
      %v2092 = vsel %vm1388, %v2040, 0.0
      %v2093 = vadd.f32 %v2091, %v2092
      %v2094 = vsel %vm1388, %v2041, 0.0
      %v2095 = vadd.f32 %v2093, %v2094
      %v2096 = vsel %vm1388, %v2042, 0.0
      %v2097 = vadd.f32 %v2095, %v2096
      %v2098 = vsel %vm1388, %v2043, 0.0
      %v2099 = vadd.f32 %v2097, %v2098
      %v2100 = vsel %vm1388, %v2044, 0.0
      %v2101 = vadd.f32 %v2099, %v2100
      %v2102 = vsel %vm1388, %v2045, 0.0
      %v2103 = vadd.f32 %v2101, %v2102
      %v2104 = vsel %vm1388, %v2046, 0.0
      %v2105 = vadd.f32 %v2103, %v2104
      %v2106 = vsel %vm1388, %v2047, 0.0
      %v2107 = vadd.f32 %v2105, %v2106
      %v2108 = vsel %vm1388, %v2048, 0.0
      %v2109 = vadd.f32 %v2107, %v2108
      %v2110 = vsel %vm1388, %v2049, 0.0
      %v2111 = vadd.f32 %v2109, %v2110
      %v2112 = vsel %vm1388, %v2050, 0.0
      %v2113 = vadd.f32 %v2111, %v2112
      %v2114 = vrot.slane %v2113, 4
      %v2115 = vadd.f32 %v2113, %v2114
      %v2116 = vrot.slane %v2115, 2
      %v2117 = vadd.f32 %v2115, %v2116
      %v2118 = vrot.slane %v2117, 1
      %v2119 = vadd.f32 %v2117, %v2118
      %2120 = vst.msk [vmem:[%s177] sm:$0xff] %vm1388, %v1792
      %2121 = vst.msk [vmem:[%s177 + $0x8] sm:$0xff] %vm1388, %v1797
      %2122 = vst.msk [vmem:[%s177 + $0x10] sm:$0xff] %vm1388, %v1802
      %2123 = vst.msk [vmem:[%s177 + $0x18] sm:$0xff] %vm1388, %v1807
      %2124 = vst.msk [vmem:[%s177 + $0x20] sm:$0xff] %vm1388, %v1812
      %2125 = vst.msk [vmem:[%s177 + $0x28] sm:$0xff] %vm1388, %v1817
      %2126 = vst.msk [vmem:[%s177 + $0x30] sm:$0xff] %vm1388, %v1822
      %2127 = vst.msk [vmem:[%s177 + $0x38] sm:$0xff] %vm1388, %v1827
      %2128 = vst.msk [vmem:[%s177 + $0x40] sm:$0xff] %vm1388, %v1832
      %2129 = vst.msk [vmem:[%s177 + $0x48] sm:$0xff] %vm1388, %v1837
      %2130 = vst.msk [vmem:[%s177 + $0x50] sm:$0xff] %vm1388, %v1842
      %2131 = vst.msk [vmem:[%s177 + $0x58] sm:$0xff] %vm1388, %v1847
      %2132 = vst.msk [vmem:[%s177 + $0x60] sm:$0xff] %vm1388, %v1852
      %2133 = vst.msk [vmem:[%s177 + $0x68] sm:$0xff] %vm1388, %v1857
      %2134 = vst.msk [vmem:[%s177 + $0x70] sm:$0xff] %vm1388, %v1862
      %2135 = vst.msk [vmem:[%s177 + $0x78] sm:$0xff] %vm1388, %v1867
      %2136 = vst.msk [vmem:[%s177 + $0x80] sm:$0xff] %vm1388, %v1872
      %2137 = vst.msk [vmem:[%s177 + $0x88] sm:$0xff] %vm1388, %v1877
      %2138 = vst.msk [vmem:[%s177 + $0x90] sm:$0xff] %vm1388, %v1882
      %2139 = vst.msk [vmem:[%s177 + $0x98] sm:$0xff] %vm1388, %v1887
      %2140 = vst.msk [vmem:[%s177 + $0xa0] sm:$0xff] %vm1388, %v1892
      %2141 = vst.msk [vmem:[%s177 + $0xa8] sm:$0xff] %vm1388, %v1897
      %2142 = vst.msk [vmem:[%s177 + $0xb0] sm:$0xff] %vm1388, %v1902
      %2143 = vst.msk [vmem:[%s177 + $0xb8] sm:$0xff] %vm1388, %v1907
      %2144 = vst.msk [vmem:[%s177 + $0xc0] sm:$0xff] %vm1388, %v1912
      %2145 = vst.msk [vmem:[%s177 + $0xc8] sm:$0xff] %vm1388, %v1917
      %2146 = vst.msk [vmem:[%s177 + $0xd0] sm:$0xff] %vm1388, %v1922
      %2147 = vst.msk [vmem:[%s177 + $0xd8] sm:$0xff] %vm1388, %v1927
      %2148 = vst.msk [vmem:[%s177 + $0xe0] sm:$0xff] %vm1388, %v1932
      %2149 = vst.msk [vmem:[%s177 + $0xe8] sm:$0xff] %vm1388, %v1937
      %2150 = vst.msk [vmem:[%s177 + $0xf0] sm:$0xff] %vm1388, %v1942
      %2151 = vst.msk [vmem:[%s177 + $0xf8] sm:$0xff] %vm1388, %v1947
      %v2152 = vsel %vm247, %v2018, %v2119
      %vm2153 = vcmask 58368
      %2154 = vst.msk [vmem:[%s181] sm:$0x3] %vm2153, %v2152
      %p2155 = scmp.lt.s32.totalorder %s15, 1
      %s2156 = scalar_select %p2155, %s15, 1
      %s2157 = smul.addr %s2156, 32
      %s2158 = smul.addr %s2157, 8
      %s2159 = scalar_lea.vmem %s2, %s2158
      %p2160 = scmp.lt.s32.totalorder %s15, 1
      %s2161 = scalar_select %p2160, %s15, 1
      %s2162 = smul.addr %s2161, 2
      %s2163 = scalar_lea.vmem %s3, %s2162
      // Predicated region
      $region29: #{double_conv.3} parent=27 // pred_check
        %p2164 = pneg %p80
      $region30: #{double_conv.3} parent=27 // pred_check_branch
        %2166 = sbr.rel (%p2164) target = $region32
      $region31: #{double_conv.3} parent=27 // pred_region
        _
      $region32: #{double_conv.3} parent=27 // pred_fallthru
        _
      // Predicated region
      $region33: #{double_conv.3} parent=27 // pred_check
        %p2167 = pneg %p106
      $region34: #{double_conv.3} parent=27 // pred_check_branch
        %2169 = sbr.rel (%p2167) target = $region36
      $region35: #{double_conv.3} parent=27 // pred_region
        _
      $region36: #{double_conv.3} parent=27 // pred_fallthru
        _
    $region28: #{double_conv.3} parent=5 // pred_fallthru
      _
    %p2170 = scmp.le.s32.totalorder 2, %s10
    // Predicated region
    $region37: #{double_conv.3} parent=5 // pred_check
      %p2171 = pneg %p2170
    $region38: #{double_conv.3} parent=5 // pred_check_branch
      %2173 = sbr.rel (%p2171) target = $region40
    $region39: #{double_conv.3} parent=5 // pred_region
      %s2174 = ssub.s32 %s10, 2
      // Predicated region
      $region41: #{double_conv.3} parent=39 // pred_check
        %p2175 = pneg %p86
      $region42: #{double_conv.3} parent=39 // pred_check_branch
        %2177 = sbr.rel (%p2175) target = $region44
      $region43: #{double_conv.3} parent=39 // pred_region
        %p2178 = scmp.lt.s32.totalorder %s16, 1
        %s2179 = scalar_select %p2178, %s16, 1
        %s2180 = smul.addr %s2179, 32
        %s2181 = smul.addr %s2180, 8
        %s2182 = scalar_lea.vmem %s2, %s2181
      $region44: #{double_conv.3} parent=39 // pred_fallthru
        _
      // Predicated region
      $region45: #{double_conv.3} parent=39 // pred_check
        %p2183 = pneg %p112
      $region46: #{double_conv.3} parent=39 // pred_check_branch
        %2185 = sbr.rel (%p2183) target = $region48
      $region47: #{double_conv.3} parent=39 // pred_region
        %p2186 = scmp.lt.s32.totalorder %s16, 1
        %s2187 = scalar_select %p2186, %s16, 1
        %s2188 = smul.addr %s2187, 2
        %s2189 = scalar_lea.vmem %s3, %s2188
      $region48: #{double_conv.3} parent=39 // pred_fallthru
        _
    $region40: #{double_conv.3} parent=5 // pred_fallthru
      _
  $region6: #{double_conv.3} parent=0 // loop_footer
    %s14 = sadd.s32 1, %s10
  $region7: #{double_conv.3} parent=0 // loop_footer_branch
    %9 = sbr.rel target = $region3
  $region8: #{double_conv.3} parent=0 // loop_exit
    _

// kernel: double_conv.4
$region0: #{double_conv.4}
  #allocation0 [shape = 'u32[]', space=smem, size = 0x4, offset = 0x4, fixed_abs, tag = 'smem constant byte address 0x4 - core index']
  #allocation1 [shape = 'u32[144,128]{1,0:T(1,128)}', space=vmem, size = 0x12000, scoped, tag = 'internal scratch']
  %s0 = inlined_call_operand.vmem [shape: f32[2,16,16,8], index: 0, kind: input, shape index: {}]
  %s1 = inlined_call_operand.vmem [shape: f32[1,8], index: 1, kind: input, shape index: {}]
  %s2 = inlined_call_operand.vmem [shape: f32[1,8], index: 2, kind: input, shape index: {}]
  %s3 = inlined_call_operand.vmem [shape: f32[72,8], index: 3, kind: input, shape index: {}]
  %s4 = inlined_call_operand.vmem [shape: f32[2,16,16,8], index: 4, kind: output, shape index: {0}]
  %s5 = inlined_call_operand.vmem [shape: f32[2,2,8], index: 5, kind: output, shape index: {1}]
  %6 = xla_tuple %s4, %s5
  %s7 = sld [smem:[#allocation0]]
  $region57: #{double_conv.4} parent=0
    _
  %s9 = ssub.s32 1, %s7
  %s10 = scalar_select 0, %s9, %s7
  loop: start=0, step=1, limit=4
  $region2: #{double_conv.4} parent=0 // loop_pre_header
    _
  $region3: #{double_conv.4} parent=0 // loop_header
    %s12 = sphi 0, %s16
    %p13 = scmp.ge.s32.totalorder %s12, 4
    %s22 = sphi 0, %s24
    %s25 = sphi 0, %s22
    %s26 = sphi 0, %s25
    %s42 = sphi 0, %s26
    %s46 = sphi 0, %s46
    %s48 = sphi 0, %s46
    %s49 = sphi 0, %s48
    %s63 = sphi 0, %s49
    %s67 = sphi 0, %s67
    %s69 = sphi 0, %s67
    %s70 = sphi 0, %s69
    %s84 = sphi 0, %s70
    %s88 = sphi 0, %s88
    %s90 = sphi 0, %s88
    %s91 = sphi 0, %s90
    %s105 = sphi 0, %s91
    %s111 = sphi 0, %s113
    %s114 = sphi 0, %s111
    %s115 = sphi 0, %s114
    %s131 = sphi 0, %s115
    %s137 = sphi 0, %s139
    %s140 = sphi 0, %s137
    %s141 = sphi 0, %s140
    %s157 = sphi 0, %s141
  $region4: #{double_conv.4} parent=0 // loop_header_branch
    %15 = sbr.rel (%p13) target = $region8
  $region5: #{double_conv.4} parent=0 // loop_body
    %s17 = ssub.s32 %s12, 1
    %s18 = ssub.s32 %s12, 2
    %s19 = sadd.s32 %s12, 1
    %s20 = ssub.s32 %s12, %s19
    %p21 = scmp.eq.s32.totalorder %s20, 0
    %s23 = sadd.s32 %s22, 1
    %s24 = scalar_select %p21, %s22, %s23
    %p27 = pneg %p21
    %p28 = scmp.eq.s32.totalorder %s12, 1
    %p29 = por %p27, %p28
    %p30 = scmp.ne.s32.totalorder %s22, %s25
    %p31 = scmp.eq.s32.totalorder %s12, 0
    %p32 = por %p30, %p31
    %p33 = scmp.ne.s32.totalorder %s22, %s25
    %p34 = scmp.eq.s32.totalorder %s17, 1
    %p35 = por %p33, %p34
    %p36 = scmp.ne.s32.totalorder %s25, %s26
    %p37 = scmp.eq.s32.totalorder %s17, 0
    %p38 = por %p36, %p37
    %p39 = scmp.ne.s32.totalorder %s25, %s26
    %p40 = scmp.eq.s32.totalorder %s18, 1
    %p41 = por %p39, %p40
    %p43 = scmp.ne.s32.totalorder %s26, %s42
    %p44 = scmp.eq.s32.totalorder %s18, 0
    %p45 = por %p43, %p44
    %s47 = sadd.s32 %s46, 1
    %p50 = scmp.eq.s32.totalorder %s12, 1
    %p51 = scmp.ne.s32.totalorder %s46, %s48
    %p52 = scmp.eq.s32.totalorder %s12, 0
    %p53 = por %p51, %p52
    %p54 = scmp.ne.s32.totalorder %s46, %s48
    %p55 = scmp.eq.s32.totalorder %s17, 1
    %p56 = por %p54, %p55
    %p57 = scmp.ne.s32.totalorder %s48, %s49
    %p58 = scmp.eq.s32.totalorder %s17, 0
    %p59 = por %p57, %p58
    %p60 = scmp.ne.s32.totalorder %s48, %s49
    %p61 = scmp.eq.s32.totalorder %s18, 1
    %p62 = por %p60, %p61
    %p64 = scmp.ne.s32.totalorder %s49, %s63
    %p65 = scmp.eq.s32.totalorder %s18, 0
    %p66 = por %p64, %p65
    %s68 = sadd.s32 %s67, 1
    %p71 = scmp.eq.s32.totalorder %s12, 1
    %p72 = scmp.ne.s32.totalorder %s67, %s69
    %p73 = scmp.eq.s32.totalorder %s12, 0
    %p74 = por %p72, %p73
    %p75 = scmp.ne.s32.totalorder %s67, %s69
    %p76 = scmp.eq.s32.totalorder %s17, 1
    %p77 = por %p75, %p76
    %p78 = scmp.ne.s32.totalorder %s69, %s70
    %p79 = scmp.eq.s32.totalorder %s17, 0
    %p80 = por %p78, %p79
    %p81 = scmp.ne.s32.totalorder %s69, %s70
    %p82 = scmp.eq.s32.totalorder %s18, 1
    %p83 = por %p81, %p82
    %p85 = scmp.ne.s32.totalorder %s70, %s84
    %p86 = scmp.eq.s32.totalorder %s18, 0
    %p87 = por %p85, %p86
    %s89 = sadd.s32 %s88, 1
    %p92 = scmp.eq.s32.totalorder %s12, 1
    %p93 = scmp.ne.s32.totalorder %s88, %s90
    %p94 = scmp.eq.s32.totalorder %s12, 0
    %p95 = por %p93, %p94
    %p96 = scmp.ne.s32.totalorder %s88, %s90
    %p97 = scmp.eq.s32.totalorder %s17, 1
    %p98 = por %p96, %p97
    %p99 = scmp.ne.s32.totalorder %s90, %s91
    %p100 = scmp.eq.s32.totalorder %s17, 0
    %p101 = por %p99, %p100
    %p102 = scmp.ne.s32.totalorder %s90, %s91
    %p103 = scmp.eq.s32.totalorder %s18, 1
    %p104 = por %p102, %p103
    %p106 = scmp.ne.s32.totalorder %s91, %s105
    %p107 = scmp.eq.s32.totalorder %s18, 0
    %p108 = por %p106, %p107
    %s109 = ssub.s32 %s12, %s19
    %p110 = scmp.eq.s32.totalorder %s109, 0
    %s112 = sadd.s32 %s111, 1
    %s113 = scalar_select %p110, %s111, %s112
    %p116 = pneg %p110
    %p117 = scmp.eq.s32.totalorder %s12, 1
    %p118 = por %p116, %p117
    %p119 = scmp.ne.s32.totalorder %s111, %s114
    %p120 = scmp.eq.s32.totalorder %s12, 0
    %p121 = por %p119, %p120
    %p122 = scmp.ne.s32.totalorder %s111, %s114
    %p123 = scmp.eq.s32.totalorder %s17, 1
    %p124 = por %p122, %p123
    %p125 = scmp.ne.s32.totalorder %s114, %s115
    %p126 = scmp.eq.s32.totalorder %s17, 0
    %p127 = por %p125, %p126
    %p128 = scmp.ne.s32.totalorder %s114, %s115
    %p129 = scmp.eq.s32.totalorder %s18, 1
    %p130 = por %p128, %p129
    %p132 = scmp.ne.s32.totalorder %s115, %s131
    %p133 = scmp.eq.s32.totalorder %s18, 0
    %p134 = por %p132, %p133
    %s135 = ssub.s32 %s12, %s19
    %p136 = scmp.eq.s32.totalorder %s135, 0
    %s138 = sadd.s32 %s137, 1
    %s139 = scalar_select %p136, %s137, %s138
    %p142 = pneg %p136
    %p143 = scmp.eq.s32.totalorder %s12, 1
    %p144 = por %p142, %p143
    %p145 = scmp.ne.s32.totalorder %s137, %s140
    %p146 = scmp.eq.s32.totalorder %s12, 0
    %p147 = por %p145, %p146
    %p148 = scmp.ne.s32.totalorder %s137, %s140
    %p149 = scmp.eq.s32.totalorder %s17, 1
    %p150 = por %p148, %p149
    %p151 = scmp.ne.s32.totalorder %s140, %s141
    %p152 = scmp.eq.s32.totalorder %s17, 0
    %p153 = por %p151, %p152
    %p154 = scmp.ne.s32.totalorder %s140, %s141
    %p155 = scmp.eq.s32.totalorder %s18, 1
    %p156 = por %p154, %p155
    %p158 = scmp.ne.s32.totalorder %s141, %s157
    %p159 = scmp.eq.s32.totalorder %s18, 0
    %p160 = por %p158, %p159
    %p161 = scmp.le.s32.totalorder 1, %s12
    %p162 = scmp.lt.s32.totalorder %s12, 3
    %p163 = pnand %p161, %p162
    %p164 = pneg %p163
    // Predicated region
    $region9: #{double_conv.4} parent=5 // pred_check
      _
    $region10: #{double_conv.4} parent=5 // pred_check_branch
      %166 = sbr.rel (%p163) target = $region12
    $region11: #{double_conv.4} parent=5 // pred_region
      %s167 = ssub.s32 %s12, 1
      // Predicated region
      $region13: #{double_conv.4} parent=11 // pred_check
        %p168 = pneg %p59
      $region14: #{double_conv.4} parent=11 // pred_check_branch
        %170 = sbr.rel (%p168) target = $region16
      $region15: #{double_conv.4} parent=11 // pred_region
        _
      $region16: #{double_conv.4} parent=11 // pred_fallthru
        _
      // Predicated region
      $region17: #{double_conv.4} parent=11 // pred_check
        %p171 = pneg %p80
      $region18: #{double_conv.4} parent=11 // pred_check_branch
        %173 = sbr.rel (%p171) target = $region20
      $region19: #{double_conv.4} parent=11 // pred_region
        _
      $region20: #{double_conv.4} parent=11 // pred_fallthru
        _
      // Predicated region
      $region21: #{double_conv.4} parent=11 // pred_check
        %p174 = pneg %p101
      $region22: #{double_conv.4} parent=11 // pred_check_branch
        %176 = sbr.rel (%p174) target = $region24
      $region23: #{double_conv.4} parent=11 // pred_region
        _
      $region24: #{double_conv.4} parent=11 // pred_fallthru
        _
    $region12: #{double_conv.4} parent=5 // pred_fallthru
      _
    %p177 = scmp.lt.s32.totalorder %s12, 2
    // Predicated region
    $region25: #{double_conv.4} parent=5 // pred_check
      %p178 = pneg %p177
    $region26: #{double_conv.4} parent=5 // pred_check_branch
      %180 = sbr.rel (%p178) target = $region28
    $region27: #{double_conv.4} parent=5 // pred_region
      // Predicated region
      $region29: #{double_conv.4} parent=27 // pred_check
        %p181 = pneg %p32
      $region30: #{double_conv.4} parent=27 // pred_check_branch
        %183 = sbr.rel (%p181) target = $region32
      $region31: #{double_conv.4} parent=27 // pred_region
        %p184 = scmp.lt.s32.totalorder %s12, 1
        %s185 = scalar_select %p184, %s12, 1
        %s186 = smul.addr %s185, 32
        %s187 = smul.addr %s186, 8
        %s188 = scalar_lea.vmem %s0, %s187
      $region32: #{double_conv.4} parent=27 // pred_fallthru
        _
    $region28: #{double_conv.4} parent=5 // pred_fallthru
      _
    %p189 = scmp.le.s32.totalorder 1, %s12
    %p190 = scmp.lt.s32.totalorder %s12, 3
    %p191 = pnand %p189, %p190
    %p192 = pneg %p191
    // Predicated region
    $region33: #{double_conv.4} parent=5 // pred_check
      _
    $region34: #{double_conv.4} parent=5 // pred_check_branch
      %194 = sbr.rel (%p191) target = $region36
    $region35: #{double_conv.4} parent=5 // pred_region
      %s195 = ssub.s32 %s12, 1
      %p196 = scmp.lt.s32.totalorder %s17, 1
      %s197 = scalar_select %p196, %s17, 1
      %s198 = smul.addr %s197, 32
      %s199 = smul.addr %s198, 8
      %s200 = scalar_lea.vmem %s0, %s199
      %p201 = pneg %p38
      %p202 = pneg %p35
      %p203 = pneg %p59
      %p204 = pneg %p56
      %p205 = pneg %p80
      %p206 = pneg %p77
      %p207 = pneg %p101
      %p208 = pneg %p98
      %p209 = pneg %p127
      %p210 = pneg %p124
      %p211 = scmp.lt.s32.totalorder %s17, 1
      %s212 = scalar_select %p211, %s17, 1
      %s213 = smul.addr %s212, 32
      %s214 = smul.addr %s213, 8
      %s215 = scalar_lea.vmem %s4, %s214
      %p216 = pneg %p153
      %p217 = pneg %p150
      %p218 = scmp.lt.s32.totalorder %s17, 1
      %s219 = scalar_select %p218, %s17, 1
      %s220 = smul.addr %s219, 2
      %s221 = scalar_lea.vmem %s5, %s220
      %p222 = scmp.lt.s32.totalorder %s17, 1
      %s223 = scalar_select %p222, %s17, 1
      %s224 = smul.addr %s223, 32
      %s225 = smul.addr %s224, 8
      %s226 = scalar_lea.vmem %s0, %s225
      %p227 = scmp.lt.s32.totalorder %s17, 1
      %s228 = scalar_select %p227, %s17, 1
      %s229 = smul.addr %s228, 32
      %s230 = smul.addr %s229, 8
      %s231 = scalar_lea.vmem %s4, %s230
      %p232 = scmp.lt.s32.totalorder %s17, 1
      %s233 = scalar_select %p232, %s17, 1
      %s234 = smul.addr %s233, 2
      %s235 = scalar_lea.vmem %s5, %s234
      %v236 = vld [vmem:[%s226] sm:$0xff]
      %v237 = vld [vmem:[%s226 + $0x8] sm:$0xff]
      %v238 = vld [vmem:[%s226 + $0x10] sm:$0xff]
      %v239 = vld [vmem:[%s226 + $0x18] sm:$0xff]
      %v240 = vld [vmem:[%s226 + $0x20] sm:$0xff]
      %v241 = vld [vmem:[%s226 + $0x28] sm:$0xff]
      %v242 = vld [vmem:[%s226 + $0x30] sm:$0xff]
      %v243 = vld [vmem:[%s226 + $0x38] sm:$0xff]
      %v244 = vld [vmem:[%s226 + $0x40] sm:$0xff]
      %v245 = vld [vmem:[%s226 + $0x48] sm:$0xff]
      %v246 = vld [vmem:[%s226 + $0x50] sm:$0xff]
      %v247 = vld [vmem:[%s226 + $0x58] sm:$0xff]
      %v248 = vld [vmem:[%s226 + $0x60] sm:$0xff]
      %v249 = vld [vmem:[%s226 + $0x68] sm:$0xff]
      %v250 = vld [vmem:[%s226 + $0x70] sm:$0xff]
      %v251 = vld [vmem:[%s226 + $0x78] sm:$0xff]
      %v252 = vld [vmem:[%s226 + $0x80] sm:$0xff]
      %v253 = vld [vmem:[%s226 + $0x88] sm:$0xff]
      %v254 = vld [vmem:[%s226 + $0x90] sm:$0xff]
      %v255 = vld [vmem:[%s226 + $0x98] sm:$0xff]
      %v256 = vld [vmem:[%s226 + $0xa0] sm:$0xff]
      %v257 = vld [vmem:[%s226 + $0xa8] sm:$0xff]
      %v258 = vld [vmem:[%s226 + $0xb0] sm:$0xff]
      %v259 = vld [vmem:[%s226 + $0xb8] sm:$0xff]
      %v260 = vld [vmem:[%s226 + $0xc0] sm:$0xff]
      %v261 = vld [vmem:[%s226 + $0xc8] sm:$0xff]
      %v262 = vld [vmem:[%s226 + $0xd0] sm:$0xff]
      %v263 = vld [vmem:[%s226 + $0xd8] sm:$0xff]
      %v264 = vld [vmem:[%s226 + $0xe0] sm:$0xff]
      %v265 = vld [vmem:[%s226 + $0xe8] sm:$0xff]
      %v266 = vld [vmem:[%s226 + $0xf0] sm:$0xff]
      %v267 = vld [vmem:[%s226 + $0xf8] sm:$0xff]
      %v268 = vld [vmem:[%s1] sm:$0x1]
      %v270 = vlaneseq
      %v271 = vshrl.u32 %v270, 7
      %v272 = vsub.s32 0, %v271
      %v273 = vrot.slane %v268, %v272
      %v275 = vmul.f32 %v236, %v273
      %v276 = vmul.f32 %v237, %v273
      %v277 = vmul.f32 %v238, %v273
      %v278 = vmul.f32 %v239, %v273
      %v279 = vmul.f32 %v240, %v273
      %v280 = vmul.f32 %v241, %v273
      %v281 = vmul.f32 %v242, %v273
      %v282 = vmul.f32 %v243, %v273
      %v283 = vmul.f32 %v244, %v273
      %v284 = vmul.f32 %v245, %v273
      %v285 = vmul.f32 %v246, %v273
      %v286 = vmul.f32 %v247, %v273
      %v287 = vmul.f32 %v248, %v273
      %v288 = vmul.f32 %v249, %v273
      %v289 = vmul.f32 %v250, %v273
      %v290 = vmul.f32 %v251, %v273
      %v291 = vmul.f32 %v252, %v273
      %v292 = vmul.f32 %v253, %v273
      %v293 = vmul.f32 %v254, %v273
      %v294 = vmul.f32 %v255, %v273
      %v295 = vmul.f32 %v256, %v273
      %v296 = vmul.f32 %v257, %v273
      %v297 = vmul.f32 %v258, %v273
      %v298 = vmul.f32 %v259, %v273
      %v299 = vmul.f32 %v260, %v273
      %v300 = vmul.f32 %v261, %v273
      %v301 = vmul.f32 %v262, %v273
      %v302 = vmul.f32 %v263, %v273
      %v303 = vmul.f32 %v264, %v273
      %v304 = vmul.f32 %v265, %v273
      %v305 = vmul.f32 %v266, %v273
      %v306 = vmul.f32 %v267, %v273
      %v307 = vld [vmem:[%s2] sm:$0x1]
      %v309 = vlaneseq
      %v310 = vshrl.u32 %v309, 7
      %v311 = vsub.s32 0, %v310
      %v312 = vrot.slane %v307, %v311
      %v314 = vadd.f32 %v275, %v312
      %v315 = vadd.f32 %v276, %v312
      %v316 = vadd.f32 %v277, %v312
      %v317 = vadd.f32 %v278, %v312
      %v318 = vadd.f32 %v279, %v312
      %v319 = vadd.f32 %v280, %v312
      %v320 = vadd.f32 %v281, %v312
      %v321 = vadd.f32 %v282, %v312
      %v322 = vadd.f32 %v283, %v312
      %v323 = vadd.f32 %v284, %v312
      %v324 = vadd.f32 %v285, %v312
      %v325 = vadd.f32 %v286, %v312
      %v326 = vadd.f32 %v287, %v312
      %v327 = vadd.f32 %v288, %v312
      %v328 = vadd.f32 %v289, %v312
      %v329 = vadd.f32 %v290, %v312
      %v330 = vadd.f32 %v291, %v312
      %v331 = vadd.f32 %v292, %v312
      %v332 = vadd.f32 %v293, %v312
      %v333 = vadd.f32 %v294, %v312
      %v334 = vadd.f32 %v295, %v312
      %v335 = vadd.f32 %v296, %v312
      %v336 = vadd.f32 %v297, %v312
      %v337 = vadd.f32 %v298, %v312
      %v338 = vadd.f32 %v299, %v312
      %v339 = vadd.f32 %v300, %v312
      %v340 = vadd.f32 %v301, %v312
      %v341 = vadd.f32 %v302, %v312
      %v342 = vadd.f32 %v303, %v312
      %v343 = vadd.f32 %v304, %v312
      %v344 = vadd.f32 %v305, %v312
      %v345 = vadd.f32 %v306, %v312
      %v346 = vmax.f32 %v314, 0.0
      %v347 = vmax.f32 %v315, 0.0
      %v348 = vmax.f32 %v316, 0.0
      %v349 = vmax.f32 %v317, 0.0
      %v350 = vmax.f32 %v318, 0.0
      %v351 = vmax.f32 %v319, 0.0
      %v352 = vmax.f32 %v320, 0.0
      %v353 = vmax.f32 %v321, 0.0
      %v354 = vmax.f32 %v322, 0.0
      %v355 = vmax.f32 %v323, 0.0
      %v356 = vmax.f32 %v324, 0.0
      %v357 = vmax.f32 %v325, 0.0
      %v358 = vmax.f32 %v326, 0.0
      %v359 = vmax.f32 %v327, 0.0
      %v360 = vmax.f32 %v328, 0.0
      %v361 = vmax.f32 %v329, 0.0
      %v362 = vmax.f32 %v330, 0.0
      %v363 = vmax.f32 %v331, 0.0
      %v364 = vmax.f32 %v332, 0.0
      %v365 = vmax.f32 %v333, 0.0
      %v366 = vmax.f32 %v334, 0.0
      %v367 = vmax.f32 %v335, 0.0
      %v368 = vmax.f32 %v336, 0.0
      %v369 = vmax.f32 %v337, 0.0
      %v370 = vmax.f32 %v338, 0.0
      %v371 = vmax.f32 %v339, 0.0
      %v372 = vmax.f32 %v340, 0.0
      %v373 = vmax.f32 %v341, 0.0
      %v374 = vmax.f32 %v342, 0.0
      %v375 = vmax.f32 %v343, 0.0
      %v376 = vmax.f32 %v344, 0.0
      %v377 = vmax.f32 %v345, 0.0
      %vm411 = vcmask 1040384
      %v412 = vrot.slane 0.0, 7
      %v413 = vsel %vm411, %v412, %v412
      %v414 = vrot.slane %v346, 7
      %v415 = vrot.slane %v347, 7
      %v416 = vsel %vm411, %v414, %v415
      %v417 = vrot.slane %v348, 7
      %v418 = vrot.slane %v349, 7
      %v419 = vsel %vm411, %v417, %v418
      %v420 = vrot.slane %v350, 7
      %v421 = vrot.slane %v351, 7
      %v422 = vsel %vm411, %v420, %v421
      %v423 = vrot.slane %v352, 7
      %v424 = vrot.slane %v353, 7
      %v425 = vsel %vm411, %v423, %v424
      %v426 = vrot.slane %v354, 7
      %v427 = vrot.slane %v355, 7
      %v428 = vsel %vm411, %v426, %v427
      %v429 = vrot.slane %v356, 7
      %v430 = vrot.slane %v357, 7
      %v431 = vsel %vm411, %v429, %v430
      %v432 = vrot.slane %v358, 7
      %v433 = vrot.slane %v359, 7
      %v434 = vsel %vm411, %v432, %v433
      %v435 = vrot.slane %v360, 7
      %v436 = vrot.slane %v361, 7
      %v437 = vsel %vm411, %v435, %v436
      %v438 = vrot.slane %v362, 7
      %v439 = vrot.slane %v363, 7
      %v440 = vsel %vm411, %v438, %v439
      %v441 = vrot.slane %v364, 7
      %v442 = vrot.slane %v365, 7
      %v443 = vsel %vm411, %v441, %v442
      %v444 = vrot.slane %v366, 7
      %v445 = vrot.slane %v367, 7
      %v446 = vsel %vm411, %v444, %v445
      %v447 = vrot.slane %v368, 7
      %v448 = vrot.slane %v369, 7
      %v449 = vsel %vm411, %v447, %v448
      %v450 = vrot.slane %v370, 7
      %v451 = vrot.slane %v371, 7
      %v452 = vsel %vm411, %v450, %v451
      %v453 = vrot.slane %v372, 7
      %v454 = vrot.slane %v373, 7
      %v455 = vsel %vm411, %v453, %v454
      %v456 = vrot.slane %v374, 7
      %v457 = vrot.slane %v375, 7
      %v458 = vsel %vm411, %v456, %v457
      %v459 = vrot.slane %v376, 7
      %v460 = vrot.slane %v377, 7
      %v461 = vsel %vm411, %v459, %v460
      %v511 = vsel %vm411, 0.0, %v412
      %v512 = vsel %vm411, 0.0, %v414
      %v513 = vsel %vm411, 0.0, %v417
      %v514 = vsel %vm411, 0.0, %v420
      %v515 = vsel %vm411, 0.0, %v423
      %v516 = vsel %vm411, 0.0, %v426
      %v517 = vsel %vm411, 0.0, %v429
      %v518 = vsel %vm411, 0.0, %v432
      %v519 = vsel %vm411, 0.0, %v435
      %v520 = vsel %vm411, 0.0, %v438
      %v521 = vsel %vm411, 0.0, %v441
      %v522 = vsel %vm411, 0.0, %v444
      %v523 = vsel %vm411, 0.0, %v447
      %v524 = vsel %vm411, 0.0, %v450
      %v525 = vsel %vm411, 0.0, %v453
      %v526 = vsel %vm411, 0.0, %v456
      %v527 = vsel %vm411, 0.0, %v459
      %v528 = vsel %vm411, %v412, 0.0
      %v529 = vsel %vm411, %v415, 0.0
      %v530 = vsel %vm411, %v418, 0.0
      %v531 = vsel %vm411, %v421, 0.0
      %v532 = vsel %vm411, %v424, 0.0
      %v533 = vsel %vm411, %v427, 0.0
      %v534 = vsel %vm411, %v430, 0.0
      %v535 = vsel %vm411, %v433, 0.0
      %v536 = vsel %vm411, %v436, 0.0
      %v537 = vsel %vm411, %v439, 0.0
      %v538 = vsel %vm411, %v442, 0.0
      %v539 = vsel %vm411, %v445, 0.0
      %v540 = vsel %vm411, %v448, 0.0
      %v541 = vsel %vm411, %v451, 0.0
      %v542 = vsel %vm411, %v454, 0.0
      %v543 = vsel %vm411, %v457, 0.0
      %v544 = vsel %vm411, %v460, 0.0
      %vm577 = vcmask 1046528
      %v578 = vrot.slane %v511, 1
      %v579 = vrot.slane %v413, 1
      %v580 = vsel %vm577, %v578, %v579
      %v581 = vrot.slane %v528, 1
      %v582 = vsel %vm577, %v579, %v581
      %v583 = vrot.slane %v512, 1
      %v584 = vrot.slane %v416, 1
      %v585 = vsel %vm577, %v583, %v584
      %v586 = vrot.slane %v529, 1
      %v587 = vsel %vm577, %v584, %v586
      %v588 = vrot.slane %v513, 1
      %v589 = vrot.slane %v419, 1
      %v590 = vsel %vm577, %v588, %v589
      %v591 = vrot.slane %v530, 1
      %v592 = vsel %vm577, %v589, %v591
      %v593 = vrot.slane %v514, 1
      %v594 = vrot.slane %v422, 1
      %v595 = vsel %vm577, %v593, %v594
      %v596 = vrot.slane %v531, 1
      %v597 = vsel %vm577, %v594, %v596
      %v598 = vrot.slane %v515, 1
      %v599 = vrot.slane %v425, 1
      %v600 = vsel %vm577, %v598, %v599
      %v601 = vrot.slane %v532, 1
      %v602 = vsel %vm577, %v599, %v601
      %v603 = vrot.slane %v516, 1
      %v604 = vrot.slane %v428, 1
      %v605 = vsel %vm577, %v603, %v604
      %v606 = vrot.slane %v533, 1
      %v607 = vsel %vm577, %v604, %v606
      %v608 = vrot.slane %v517, 1
      %v609 = vrot.slane %v431, 1
      %v610 = vsel %vm577, %v608, %v609
      %v611 = vrot.slane %v534, 1
      %v612 = vsel %vm577, %v609, %v611
      %v613 = vrot.slane %v518, 1
      %v614 = vrot.slane %v434, 1
      %v615 = vsel %vm577, %v613, %v614
      %v616 = vrot.slane %v535, 1
      %v617 = vsel %vm577, %v614, %v616
      %v618 = vrot.slane %v519, 1
      %v619 = vrot.slane %v437, 1
      %v620 = vsel %vm577, %v618, %v619
      %v621 = vrot.slane %v536, 1
      %v622 = vsel %vm577, %v619, %v621
      %v623 = vrot.slane %v520, 1
      %v624 = vrot.slane %v440, 1
      %v625 = vsel %vm577, %v623, %v624
      %v626 = vrot.slane %v537, 1
      %v627 = vsel %vm577, %v624, %v626
      %v628 = vrot.slane %v521, 1
      %v629 = vrot.slane %v443, 1
      %v630 = vsel %vm577, %v628, %v629
      %v631 = vrot.slane %v538, 1
      %v632 = vsel %vm577, %v629, %v631
      %v633 = vrot.slane %v522, 1
      %v634 = vrot.slane %v446, 1
      %v635 = vsel %vm577, %v633, %v634
      %v636 = vrot.slane %v539, 1
      %v637 = vsel %vm577, %v634, %v636
      %v638 = vrot.slane %v523, 1
      %v639 = vrot.slane %v449, 1
      %v640 = vsel %vm577, %v638, %v639
      %v641 = vrot.slane %v540, 1
      %v642 = vsel %vm577, %v639, %v641
      %v643 = vrot.slane %v524, 1
      %v644 = vrot.slane %v452, 1
      %v645 = vsel %vm577, %v643, %v644
      %v646 = vrot.slane %v541, 1
      %v647 = vsel %vm577, %v644, %v646
      %v648 = vrot.slane %v525, 1
      %v649 = vrot.slane %v455, 1
      %v650 = vsel %vm577, %v648, %v649
      %v651 = vrot.slane %v542, 1
      %v652 = vsel %vm577, %v649, %v651
      %v653 = vrot.slane %v526, 1
      %v654 = vrot.slane %v458, 1
      %v655 = vsel %vm577, %v653, %v654
      %v656 = vrot.slane %v543, 1
      %v657 = vsel %vm577, %v654, %v656
      %658 = vrot.lane.b32.xlu0 %v580, 8
      %v659 = vpop.permute.xlu0 %658
      %660 = vrot.lane.b32.xlu0 %v582, 8
      %v661 = vpop.permute.xlu0 %660
      %662 = vrot.lane.b32.xlu0 %v585, 8
      %v663 = vpop.permute.xlu0 %662
      %664 = vrot.lane.b32.xlu0 %v587, 8
      %v665 = vpop.permute.xlu0 %664
      %666 = vrot.lane.b32.xlu0 %v590, 8
      %v667 = vpop.permute.xlu0 %666
      %668 = vrot.lane.b32.xlu0 %v592, 8
      %v669 = vpop.permute.xlu0 %668
      %670 = vrot.lane.b32.xlu0 %v595, 8
      %v671 = vpop.permute.xlu0 %670
      %672 = vrot.lane.b32.xlu0 %v597, 8
      %v673 = vpop.permute.xlu0 %672
      %674 = vrot.lane.b32.xlu0 %v600, 8
      %v675 = vpop.permute.xlu0 %674
      %676 = vrot.lane.b32.xlu0 %v602, 8
      %v677 = vpop.permute.xlu0 %676
      %678 = vrot.lane.b32.xlu0 %v605, 8
      %v679 = vpop.permute.xlu0 %678
      %680 = vrot.lane.b32.xlu0 %v607, 8
      %v681 = vpop.permute.xlu0 %680
      %682 = vrot.lane.b32.xlu0 %v610, 8
      %v683 = vpop.permute.xlu0 %682
      %684 = vrot.lane.b32.xlu0 %v612, 8
      %v685 = vpop.permute.xlu0 %684
      %686 = vrot.lane.b32.xlu0 %v615, 8
      %v687 = vpop.permute.xlu0 %686
      %688 = vrot.lane.b32.xlu0 %v617, 8
      %v689 = vpop.permute.xlu0 %688
      %690 = vrot.lane.b32.xlu0 %v620, 8
      %v691 = vpop.permute.xlu0 %690
      %692 = vrot.lane.b32.xlu0 %v622, 8
      %v693 = vpop.permute.xlu0 %692
      %694 = vrot.lane.b32.xlu0 %v625, 8
      %v695 = vpop.permute.xlu0 %694
      %696 = vrot.lane.b32.xlu0 %v627, 8
      %v697 = vpop.permute.xlu0 %696
      %698 = vrot.lane.b32.xlu0 %v630, 8
      %v699 = vpop.permute.xlu0 %698
      %700 = vrot.lane.b32.xlu0 %v632, 8
      %v701 = vpop.permute.xlu0 %700
      %702 = vrot.lane.b32.xlu0 %v635, 8
      %v703 = vpop.permute.xlu0 %702
      %704 = vrot.lane.b32.xlu0 %v637, 8
      %v705 = vpop.permute.xlu0 %704
      %706 = vrot.lane.b32.xlu0 %v640, 8
      %v707 = vpop.permute.xlu0 %706
      %708 = vrot.lane.b32.xlu0 %v642, 8
      %v709 = vpop.permute.xlu0 %708
      %710 = vrot.lane.b32.xlu0 %v645, 8
      %v711 = vpop.permute.xlu0 %710
      %712 = vrot.lane.b32.xlu0 %v647, 8
      %v713 = vpop.permute.xlu0 %712
      %714 = vrot.lane.b32.xlu0 %v650, 8
      %v715 = vpop.permute.xlu0 %714
      %716 = vrot.lane.b32.xlu0 %v652, 8
      %v717 = vpop.permute.xlu0 %716
      %718 = vrot.lane.b32.xlu0 %v655, 8
      %v719 = vpop.permute.xlu0 %718
      %720 = vrot.lane.b32.xlu0 %v657, 8
      %v721 = vpop.permute.xlu0 %720
      %vm754 = vcmask 1045504
      %v755 = vrot.slane %v511, 2
      %v756 = vrot.slane %v413, 2
      %v757 = vsel %vm754, %v755, %v756
      %v758 = vrot.slane %v528, 2
      %v759 = vsel %vm754, %v756, %v758
      %v760 = vrot.slane %v512, 2
      %v761 = vrot.slane %v416, 2
      %v762 = vsel %vm754, %v760, %v761
      %v763 = vrot.slane %v529, 2
      %v764 = vsel %vm754, %v761, %v763
      %v765 = vrot.slane %v513, 2
      %v766 = vrot.slane %v419, 2
      %v767 = vsel %vm754, %v765, %v766
      %v768 = vrot.slane %v530, 2
      %v769 = vsel %vm754, %v766, %v768
      %v770 = vrot.slane %v514, 2
      %v771 = vrot.slane %v422, 2
      %v772 = vsel %vm754, %v770, %v771
      %v773 = vrot.slane %v531, 2
      %v774 = vsel %vm754, %v771, %v773
      %v775 = vrot.slane %v515, 2
      %v776 = vrot.slane %v425, 2
      %v777 = vsel %vm754, %v775, %v776
      %v778 = vrot.slane %v532, 2
      %v779 = vsel %vm754, %v776, %v778
      %v780 = vrot.slane %v516, 2
      %v781 = vrot.slane %v428, 2
      %v782 = vsel %vm754, %v780, %v781
      %v783 = vrot.slane %v533, 2
      %v784 = vsel %vm754, %v781, %v783
      %v785 = vrot.slane %v517, 2
      %v786 = vrot.slane %v431, 2
      %v787 = vsel %vm754, %v785, %v786
      %v788 = vrot.slane %v534, 2
      %v789 = vsel %vm754, %v786, %v788
      %v790 = vrot.slane %v518, 2
      %v791 = vrot.slane %v434, 2
      %v792 = vsel %vm754, %v790, %v791
      %v793 = vrot.slane %v535, 2
      %v794 = vsel %vm754, %v791, %v793
      %v795 = vrot.slane %v519, 2
      %v796 = vrot.slane %v437, 2
      %v797 = vsel %vm754, %v795, %v796
      %v798 = vrot.slane %v536, 2
      %v799 = vsel %vm754, %v796, %v798
      %v800 = vrot.slane %v520, 2
      %v801 = vrot.slane %v440, 2
      %v802 = vsel %vm754, %v800, %v801
      %v803 = vrot.slane %v537, 2
      %v804 = vsel %vm754, %v801, %v803
      %v805 = vrot.slane %v521, 2
      %v806 = vrot.slane %v443, 2
      %v807 = vsel %vm754, %v805, %v806
      %v808 = vrot.slane %v538, 2
      %v809 = vsel %vm754, %v806, %v808
      %v810 = vrot.slane %v522, 2
      %v811 = vrot.slane %v446, 2
      %v812 = vsel %vm754, %v810, %v811
      %v813 = vrot.slane %v539, 2
      %v814 = vsel %vm754, %v811, %v813
      %v815 = vrot.slane %v523, 2
      %v816 = vrot.slane %v449, 2
      %v817 = vsel %vm754, %v815, %v816
      %v818 = vrot.slane %v540, 2
      %v819 = vsel %vm754, %v816, %v818
      %v820 = vrot.slane %v524, 2
      %v821 = vrot.slane %v452, 2
      %v822 = vsel %vm754, %v820, %v821
      %v823 = vrot.slane %v541, 2
      %v824 = vsel %vm754, %v821, %v823
      %v825 = vrot.slane %v525, 2
      %v826 = vrot.slane %v455, 2
      %v827 = vsel %vm754, %v825, %v826
      %v828 = vrot.slane %v542, 2
      %v829 = vsel %vm754, %v826, %v828
      %v830 = vrot.slane %v526, 2
      %v831 = vrot.slane %v458, 2
      %v832 = vsel %vm754, %v830, %v831
      %v833 = vrot.slane %v543, 2
      %v834 = vsel %vm754, %v831, %v833
      %835 = vrot.lane.b32.xlu0 %v757, 16
      %v836 = vpop.permute.xlu0 %835
      %837 = vrot.lane.b32.xlu0 %v759, 16
      %v838 = vpop.permute.xlu0 %837
      %839 = vrot.lane.b32.xlu0 %v762, 16
      %v840 = vpop.permute.xlu0 %839
      %841 = vrot.lane.b32.xlu0 %v764, 16
      %v842 = vpop.permute.xlu0 %841
      %843 = vrot.lane.b32.xlu0 %v767, 16
      %v844 = vpop.permute.xlu0 %843
      %845 = vrot.lane.b32.xlu0 %v769, 16
      %v846 = vpop.permute.xlu0 %845
      %847 = vrot.lane.b32.xlu0 %v772, 16
      %v848 = vpop.permute.xlu0 %847
      %849 = vrot.lane.b32.xlu0 %v774, 16
      %v850 = vpop.permute.xlu0 %849
      %851 = vrot.lane.b32.xlu0 %v777, 16
      %v852 = vpop.permute.xlu0 %851
      %853 = vrot.lane.b32.xlu0 %v779, 16
      %v854 = vpop.permute.xlu0 %853
      %855 = vrot.lane.b32.xlu0 %v782, 16
      %v856 = vpop.permute.xlu0 %855
      %857 = vrot.lane.b32.xlu0 %v784, 16
      %v858 = vpop.permute.xlu0 %857
      %859 = vrot.lane.b32.xlu0 %v787, 16
      %v860 = vpop.permute.xlu0 %859
      %861 = vrot.lane.b32.xlu0 %v789, 16
      %v862 = vpop.permute.xlu0 %861
      %863 = vrot.lane.b32.xlu0 %v792, 16
      %v864 = vpop.permute.xlu0 %863
      %865 = vrot.lane.b32.xlu0 %v794, 16
      %v866 = vpop.permute.xlu0 %865
      %867 = vrot.lane.b32.xlu0 %v797, 16
      %v868 = vpop.permute.xlu0 %867
      %869 = vrot.lane.b32.xlu0 %v799, 16
      %v870 = vpop.permute.xlu0 %869
      %871 = vrot.lane.b32.xlu0 %v802, 16
      %v872 = vpop.permute.xlu0 %871
      %873 = vrot.lane.b32.xlu0 %v804, 16
      %v874 = vpop.permute.xlu0 %873
      %875 = vrot.lane.b32.xlu0 %v807, 16
      %v876 = vpop.permute.xlu0 %875
      %877 = vrot.lane.b32.xlu0 %v809, 16
      %v878 = vpop.permute.xlu0 %877
      %879 = vrot.lane.b32.xlu0 %v812, 16
      %v880 = vpop.permute.xlu0 %879
      %881 = vrot.lane.b32.xlu0 %v814, 16
      %v882 = vpop.permute.xlu0 %881
      %883 = vrot.lane.b32.xlu0 %v817, 16
      %v884 = vpop.permute.xlu0 %883
      %885 = vrot.lane.b32.xlu0 %v819, 16
      %v886 = vpop.permute.xlu0 %885
      %887 = vrot.lane.b32.xlu0 %v822, 16
      %v888 = vpop.permute.xlu0 %887
      %889 = vrot.lane.b32.xlu0 %v824, 16
      %v890 = vpop.permute.xlu0 %889
      %891 = vrot.lane.b32.xlu0 %v827, 16
      %v892 = vpop.permute.xlu0 %891
      %893 = vrot.lane.b32.xlu0 %v829, 16
      %v894 = vpop.permute.xlu0 %893
      %895 = vrot.lane.b32.xlu0 %v832, 16
      %v896 = vpop.permute.xlu0 %895
      %897 = vrot.lane.b32.xlu0 %v834, 16
      %v898 = vpop.permute.xlu0 %897
      %932 = vrot.lane.b32.xlu0 %v512, 24
      %v933 = vpop.permute.xlu0 %932
      %934 = vrot.lane.b32.xlu0 %v416, 24
      %v935 = vpop.permute.xlu0 %934
      %936 = vrot.lane.b32.xlu0 %v513, 24
      %v937 = vpop.permute.xlu0 %936
      %938 = vrot.lane.b32.xlu0 %v419, 24
      %v939 = vpop.permute.xlu0 %938
      %940 = vrot.lane.b32.xlu0 %v514, 24
      %v941 = vpop.permute.xlu0 %940
      %942 = vrot.lane.b32.xlu0 %v422, 24
      %v943 = vpop.permute.xlu0 %942
      %944 = vrot.lane.b32.xlu0 %v515, 24
      %v945 = vpop.permute.xlu0 %944
      %946 = vrot.lane.b32.xlu0 %v425, 24
      %v947 = vpop.permute.xlu0 %946
      %948 = vrot.lane.b32.xlu0 %v516, 24
      %v949 = vpop.permute.xlu0 %948
      %950 = vrot.lane.b32.xlu0 %v428, 24
      %v951 = vpop.permute.xlu0 %950
      %952 = vrot.lane.b32.xlu0 %v517, 24
      %v953 = vpop.permute.xlu0 %952
      %954 = vrot.lane.b32.xlu0 %v431, 24
      %v955 = vpop.permute.xlu0 %954
      %956 = vrot.lane.b32.xlu0 %v518, 24
      %v957 = vpop.permute.xlu0 %956
      %958 = vrot.lane.b32.xlu0 %v434, 24
      %v959 = vpop.permute.xlu0 %958
      %960 = vrot.lane.b32.xlu0 %v519, 24
      %v961 = vpop.permute.xlu0 %960
      %962 = vrot.lane.b32.xlu0 %v437, 24
      %v963 = vpop.permute.xlu0 %962
      %964 = vrot.lane.b32.xlu0 %v520, 24
      %v965 = vpop.permute.xlu0 %964
      %966 = vrot.lane.b32.xlu0 %v440, 24
      %v967 = vpop.permute.xlu0 %966
      %968 = vrot.lane.b32.xlu0 %v521, 24
      %v969 = vpop.permute.xlu0 %968
      %970 = vrot.lane.b32.xlu0 %v443, 24
      %v971 = vpop.permute.xlu0 %970
      %972 = vrot.lane.b32.xlu0 %v522, 24
      %v973 = vpop.permute.xlu0 %972
      %974 = vrot.lane.b32.xlu0 %v446, 24
      %v975 = vpop.permute.xlu0 %974
      %976 = vrot.lane.b32.xlu0 %v523, 24
      %v977 = vpop.permute.xlu0 %976
      %978 = vrot.lane.b32.xlu0 %v449, 24
      %v979 = vpop.permute.xlu0 %978
      %980 = vrot.lane.b32.xlu0 %v524, 24
      %v981 = vpop.permute.xlu0 %980
      %982 = vrot.lane.b32.xlu0 %v452, 24
      %v983 = vpop.permute.xlu0 %982
      %984 = vrot.lane.b32.xlu0 %v525, 24
      %v985 = vpop.permute.xlu0 %984
      %986 = vrot.lane.b32.xlu0 %v455, 24
      %v987 = vpop.permute.xlu0 %986
      %988 = vrot.lane.b32.xlu0 %v526, 24
      %v989 = vpop.permute.xlu0 %988
      %990 = vrot.lane.b32.xlu0 %v458, 24
      %v991 = vpop.permute.xlu0 %990
      %992 = vrot.lane.b32.xlu0 %v527, 24
      %v993 = vpop.permute.xlu0 %992
      %994 = vrot.lane.b32.xlu0 %v461, 24
      %v995 = vpop.permute.xlu0 %994
      %v1029 = vrot.slane %v527, 1
      %v1030 = vrot.slane %v461, 1
      %v1031 = vsel %vm577, %v1029, %v1030
      %v1032 = vrot.slane %v544, 1
      %v1033 = vsel %vm577, %v1030, %v1032
      %1034 = vrot.lane.b32.xlu0 %v585, 32
      %v1035 = vpop.permute.xlu0 %1034
      %1036 = vrot.lane.b32.xlu0 %v587, 32
      %v1037 = vpop.permute.xlu0 %1036
      %1038 = vrot.lane.b32.xlu0 %v590, 32
      %v1039 = vpop.permute.xlu0 %1038
      %1040 = vrot.lane.b32.xlu0 %v592, 32
      %v1041 = vpop.permute.xlu0 %1040
      %1042 = vrot.lane.b32.xlu0 %v595, 32
      %v1043 = vpop.permute.xlu0 %1042
      %1044 = vrot.lane.b32.xlu0 %v597, 32
      %v1045 = vpop.permute.xlu0 %1044
      %1046 = vrot.lane.b32.xlu0 %v600, 32
      %v1047 = vpop.permute.xlu0 %1046
      %1048 = vrot.lane.b32.xlu0 %v602, 32
      %v1049 = vpop.permute.xlu0 %1048
      %1050 = vrot.lane.b32.xlu0 %v605, 32
      %v1051 = vpop.permute.xlu0 %1050
      %1052 = vrot.lane.b32.xlu0 %v607, 32
      %v1053 = vpop.permute.xlu0 %1052
      %1054 = vrot.lane.b32.xlu0 %v610, 32
      %v1055 = vpop.permute.xlu0 %1054
      %1056 = vrot.lane.b32.xlu0 %v612, 32
      %v1057 = vpop.permute.xlu0 %1056
      %1058 = vrot.lane.b32.xlu0 %v615, 32
      %v1059 = vpop.permute.xlu0 %1058
      %1060 = vrot.lane.b32.xlu0 %v617, 32
      %v1061 = vpop.permute.xlu0 %1060
      %1062 = vrot.lane.b32.xlu0 %v620, 32
      %v1063 = vpop.permute.xlu0 %1062
      %1064 = vrot.lane.b32.xlu0 %v622, 32
      %v1065 = vpop.permute.xlu0 %1064
      %1066 = vrot.lane.b32.xlu0 %v625, 32
      %v1067 = vpop.permute.xlu0 %1066
      %1068 = vrot.lane.b32.xlu0 %v627, 32
      %v1069 = vpop.permute.xlu0 %1068
      %1070 = vrot.lane.b32.xlu0 %v630, 32
      %v1071 = vpop.permute.xlu0 %1070
      %1072 = vrot.lane.b32.xlu0 %v632, 32
      %v1073 = vpop.permute.xlu0 %1072
      %1074 = vrot.lane.b32.xlu0 %v635, 32
      %v1075 = vpop.permute.xlu0 %1074
      %1076 = vrot.lane.b32.xlu0 %v637, 32
      %v1077 = vpop.permute.xlu0 %1076
      %1078 = vrot.lane.b32.xlu0 %v640, 32
      %v1079 = vpop.permute.xlu0 %1078
      %1080 = vrot.lane.b32.xlu0 %v642, 32
      %v1081 = vpop.permute.xlu0 %1080
      %1082 = vrot.lane.b32.xlu0 %v645, 32
      %v1083 = vpop.permute.xlu0 %1082
      %1084 = vrot.lane.b32.xlu0 %v647, 32
      %v1085 = vpop.permute.xlu0 %1084
      %1086 = vrot.lane.b32.xlu0 %v650, 32
      %v1087 = vpop.permute.xlu0 %1086
      %1088 = vrot.lane.b32.xlu0 %v652, 32
      %v1089 = vpop.permute.xlu0 %1088
      %1090 = vrot.lane.b32.xlu0 %v655, 32
      %v1091 = vpop.permute.xlu0 %1090
      %1092 = vrot.lane.b32.xlu0 %v657, 32
      %v1093 = vpop.permute.xlu0 %1092
      %1094 = vrot.lane.b32.xlu0 %v1031, 32
      %v1095 = vpop.permute.xlu0 %1094
      %1096 = vrot.lane.b32.xlu0 %v1033, 32
      %v1097 = vpop.permute.xlu0 %1096
      %v1130 = vrot.slane %v527, 2
      %v1131 = vrot.slane %v461, 2
      %v1132 = vsel %vm754, %v1130, %v1131
      %v1133 = vrot.slane %v544, 2
      %v1134 = vsel %vm754, %v1131, %v1133
      %1135 = vrot.lane.b32.xlu0 %v762, 40
      %v1136 = vpop.permute.xlu0 %1135
      %1137 = vrot.lane.b32.xlu0 %v764, 40
      %v1138 = vpop.permute.xlu0 %1137
      %1139 = vrot.lane.b32.xlu0 %v767, 40
      %v1140 = vpop.permute.xlu0 %1139
      %1141 = vrot.lane.b32.xlu0 %v769, 40
      %v1142 = vpop.permute.xlu0 %1141
      %1143 = vrot.lane.b32.xlu0 %v772, 40
      %v1144 = vpop.permute.xlu0 %1143
      %1145 = vrot.lane.b32.xlu0 %v774, 40
      %v1146 = vpop.permute.xlu0 %1145
      %1147 = vrot.lane.b32.xlu0 %v777, 40
      %v1148 = vpop.permute.xlu0 %1147
      %1149 = vrot.lane.b32.xlu0 %v779, 40
      %v1150 = vpop.permute.xlu0 %1149
      %1151 = vrot.lane.b32.xlu0 %v782, 40
      %v1152 = vpop.permute.xlu0 %1151
      %1153 = vrot.lane.b32.xlu0 %v784, 40
      %v1154 = vpop.permute.xlu0 %1153
      %1155 = vrot.lane.b32.xlu0 %v787, 40
      %v1156 = vpop.permute.xlu0 %1155
      %1157 = vrot.lane.b32.xlu0 %v789, 40
      %v1158 = vpop.permute.xlu0 %1157
      %1159 = vrot.lane.b32.xlu0 %v792, 40
      %v1160 = vpop.permute.xlu0 %1159
      %1161 = vrot.lane.b32.xlu0 %v794, 40
      %v1162 = vpop.permute.xlu0 %1161
      %1163 = vrot.lane.b32.xlu0 %v797, 40
      %v1164 = vpop.permute.xlu0 %1163
      %1165 = vrot.lane.b32.xlu0 %v799, 40
      %v1166 = vpop.permute.xlu0 %1165
      %1167 = vrot.lane.b32.xlu0 %v802, 40
      %v1168 = vpop.permute.xlu0 %1167
      %1169 = vrot.lane.b32.xlu0 %v804, 40
      %v1170 = vpop.permute.xlu0 %1169
      %1171 = vrot.lane.b32.xlu0 %v807, 40
      %v1172 = vpop.permute.xlu0 %1171
      %1173 = vrot.lane.b32.xlu0 %v809, 40
      %v1174 = vpop.permute.xlu0 %1173
      %1175 = vrot.lane.b32.xlu0 %v812, 40
      %v1176 = vpop.permute.xlu0 %1175
      %1177 = vrot.lane.b32.xlu0 %v814, 40
      %v1178 = vpop.permute.xlu0 %1177
      %1179 = vrot.lane.b32.xlu0 %v817, 40
      %v1180 = vpop.permute.xlu0 %1179
      %1181 = vrot.lane.b32.xlu0 %v819, 40
      %v1182 = vpop.permute.xlu0 %1181
      %1183 = vrot.lane.b32.xlu0 %v822, 40
      %v1184 = vpop.permute.xlu0 %1183
      %1185 = vrot.lane.b32.xlu0 %v824, 40
      %v1186 = vpop.permute.xlu0 %1185
      %1187 = vrot.lane.b32.xlu0 %v827, 40
      %v1188 = vpop.permute.xlu0 %1187
      %1189 = vrot.lane.b32.xlu0 %v829, 40
      %v1190 = vpop.permute.xlu0 %1189
      %1191 = vrot.lane.b32.xlu0 %v832, 40
      %v1192 = vpop.permute.xlu0 %1191
      %1193 = vrot.lane.b32.xlu0 %v834, 40
      %v1194 = vpop.permute.xlu0 %1193
      %1195 = vrot.lane.b32.xlu0 %v1132, 40
      %v1196 = vpop.permute.xlu0 %1195
      %1197 = vrot.lane.b32.xlu0 %v1134, 40
      %v1198 = vpop.permute.xlu0 %1197
      %1231 = vrot.lane.b32.xlu0 %v513, 48
      %v1232 = vpop.permute.xlu0 %1231
      %1233 = vrot.lane.b32.xlu0 %v419, 48
      %v1234 = vpop.permute.xlu0 %1233
      %1235 = vrot.lane.b32.xlu0 %v514, 48
      %v1236 = vpop.permute.xlu0 %1235
      %1237 = vrot.lane.b32.xlu0 %v422, 48
      %v1238 = vpop.permute.xlu0 %1237
      %1239 = vrot.lane.b32.xlu0 %v515, 48
      %v1240 = vpop.permute.xlu0 %1239
      %1241 = vrot.lane.b32.xlu0 %v425, 48
      %v1242 = vpop.permute.xlu0 %1241
      %1243 = vrot.lane.b32.xlu0 %v516, 48
      %v1244 = vpop.permute.xlu0 %1243
      %1245 = vrot.lane.b32.xlu0 %v428, 48
      %v1246 = vpop.permute.xlu0 %1245
      %1247 = vrot.lane.b32.xlu0 %v517, 48
      %v1248 = vpop.permute.xlu0 %1247
      %1249 = vrot.lane.b32.xlu0 %v431, 48
      %v1250 = vpop.permute.xlu0 %1249
      %1251 = vrot.lane.b32.xlu0 %v518, 48
      %v1252 = vpop.permute.xlu0 %1251
      %1253 = vrot.lane.b32.xlu0 %v434, 48
      %v1254 = vpop.permute.xlu0 %1253
      %1255 = vrot.lane.b32.xlu0 %v519, 48
      %v1256 = vpop.permute.xlu0 %1255
      %1257 = vrot.lane.b32.xlu0 %v437, 48
      %v1258 = vpop.permute.xlu0 %1257
      %1259 = vrot.lane.b32.xlu0 %v520, 48
      %v1260 = vpop.permute.xlu0 %1259
      %1261 = vrot.lane.b32.xlu0 %v440, 48
      %v1262 = vpop.permute.xlu0 %1261
      %1263 = vrot.lane.b32.xlu0 %v521, 48
      %v1264 = vpop.permute.xlu0 %1263
      %1265 = vrot.lane.b32.xlu0 %v443, 48
      %v1266 = vpop.permute.xlu0 %1265
      %1267 = vrot.lane.b32.xlu0 %v522, 48
      %v1268 = vpop.permute.xlu0 %1267
      %1269 = vrot.lane.b32.xlu0 %v446, 48
      %v1270 = vpop.permute.xlu0 %1269
      %1271 = vrot.lane.b32.xlu0 %v523, 48
      %v1272 = vpop.permute.xlu0 %1271
      %1273 = vrot.lane.b32.xlu0 %v449, 48
      %v1274 = vpop.permute.xlu0 %1273
      %1275 = vrot.lane.b32.xlu0 %v524, 48
      %v1276 = vpop.permute.xlu0 %1275
      %1277 = vrot.lane.b32.xlu0 %v452, 48
      %v1278 = vpop.permute.xlu0 %1277
      %1279 = vrot.lane.b32.xlu0 %v525, 48
      %v1280 = vpop.permute.xlu0 %1279
      %1281 = vrot.lane.b32.xlu0 %v455, 48
      %v1282 = vpop.permute.xlu0 %1281
      %1283 = vrot.lane.b32.xlu0 %v526, 48
      %v1284 = vpop.permute.xlu0 %1283
      %1285 = vrot.lane.b32.xlu0 %v458, 48
      %v1286 = vpop.permute.xlu0 %1285
      %1287 = vrot.lane.b32.xlu0 %v527, 48
      %v1288 = vpop.permute.xlu0 %1287
      %1289 = vrot.lane.b32.xlu0 %v461, 48
      %v1290 = vpop.permute.xlu0 %1289
      %1291 = vrot.lane.b32.xlu0 %v511, 48
      %v1292 = vpop.permute.xlu0 %1291
      %1293 = vrot.lane.b32.xlu0 %v413, 48
      %v1294 = vpop.permute.xlu0 %1293
      %1327 = vrot.lane.b32.xlu0 %v590, 56
      %v1328 = vpop.permute.xlu0 %1327
      %1329 = vrot.lane.b32.xlu0 %v592, 56
      %v1330 = vpop.permute.xlu0 %1329
      %1331 = vrot.lane.b32.xlu0 %v595, 56
      %v1332 = vpop.permute.xlu0 %1331
      %1333 = vrot.lane.b32.xlu0 %v597, 56
      %v1334 = vpop.permute.xlu0 %1333
      %1335 = vrot.lane.b32.xlu0 %v600, 56
      %v1336 = vpop.permute.xlu0 %1335
      %1337 = vrot.lane.b32.xlu0 %v602, 56
      %v1338 = vpop.permute.xlu0 %1337
      %1339 = vrot.lane.b32.xlu0 %v605, 56
      %v1340 = vpop.permute.xlu0 %1339
      %1341 = vrot.lane.b32.xlu0 %v607, 56
      %v1342 = vpop.permute.xlu0 %1341
      %1343 = vrot.lane.b32.xlu0 %v610, 56
      %v1344 = vpop.permute.xlu0 %1343
      %1345 = vrot.lane.b32.xlu0 %v612, 56
      %v1346 = vpop.permute.xlu0 %1345
      %1347 = vrot.lane.b32.xlu0 %v615, 56
      %v1348 = vpop.permute.xlu0 %1347
      %1349 = vrot.lane.b32.xlu0 %v617, 56
      %v1350 = vpop.permute.xlu0 %1349
      %1351 = vrot.lane.b32.xlu0 %v620, 56
      %v1352 = vpop.permute.xlu0 %1351
      %1353 = vrot.lane.b32.xlu0 %v622, 56
      %v1354 = vpop.permute.xlu0 %1353
      %1355 = vrot.lane.b32.xlu0 %v625, 56
      %v1356 = vpop.permute.xlu0 %1355
      %1357 = vrot.lane.b32.xlu0 %v627, 56
      %v1358 = vpop.permute.xlu0 %1357
      %1359 = vrot.lane.b32.xlu0 %v630, 56
      %v1360 = vpop.permute.xlu0 %1359
      %1361 = vrot.lane.b32.xlu0 %v632, 56
      %v1362 = vpop.permute.xlu0 %1361
      %1363 = vrot.lane.b32.xlu0 %v635, 56
      %v1364 = vpop.permute.xlu0 %1363
      %1365 = vrot.lane.b32.xlu0 %v637, 56
      %v1366 = vpop.permute.xlu0 %1365
      %1367 = vrot.lane.b32.xlu0 %v640, 56
      %v1368 = vpop.permute.xlu0 %1367
      %1369 = vrot.lane.b32.xlu0 %v642, 56
      %v1370 = vpop.permute.xlu0 %1369
      %1371 = vrot.lane.b32.xlu0 %v645, 56
      %v1372 = vpop.permute.xlu0 %1371
      %1373 = vrot.lane.b32.xlu0 %v647, 56
      %v1374 = vpop.permute.xlu0 %1373
      %1375 = vrot.lane.b32.xlu0 %v650, 56
      %v1376 = vpop.permute.xlu0 %1375
      %1377 = vrot.lane.b32.xlu0 %v652, 56
      %v1378 = vpop.permute.xlu0 %1377
      %1379 = vrot.lane.b32.xlu0 %v655, 56
      %v1380 = vpop.permute.xlu0 %1379
      %1381 = vrot.lane.b32.xlu0 %v657, 56
      %v1382 = vpop.permute.xlu0 %1381
      %1383 = vrot.lane.b32.xlu0 %v1031, 56
      %v1384 = vpop.permute.xlu0 %1383
      %1385 = vrot.lane.b32.xlu0 %v1033, 56
      %v1386 = vpop.permute.xlu0 %1385
      %1387 = vrot.lane.b32.xlu0 %v580, 56
      %v1388 = vpop.permute.xlu0 %1387
      %1389 = vrot.lane.b32.xlu0 %v582, 56
      %v1390 = vpop.permute.xlu0 %1389
      %1423 = vrot.lane.b32.xlu0 %v767, 64
      %v1424 = vpop.permute.xlu0 %1423
      %1425 = vrot.lane.b32.xlu0 %v769, 64
      %v1426 = vpop.permute.xlu0 %1425
      %1427 = vrot.lane.b32.xlu0 %v772, 64
      %v1428 = vpop.permute.xlu0 %1427
      %1429 = vrot.lane.b32.xlu0 %v774, 64
      %v1430 = vpop.permute.xlu0 %1429
      %1431 = vrot.lane.b32.xlu0 %v777, 64
      %v1432 = vpop.permute.xlu0 %1431
      %1433 = vrot.lane.b32.xlu0 %v779, 64
      %v1434 = vpop.permute.xlu0 %1433
      %1435 = vrot.lane.b32.xlu0 %v782, 64
      %v1436 = vpop.permute.xlu0 %1435
      %1437 = vrot.lane.b32.xlu0 %v784, 64
      %v1438 = vpop.permute.xlu0 %1437
      %1439 = vrot.lane.b32.xlu0 %v787, 64
      %v1440 = vpop.permute.xlu0 %1439
      %1441 = vrot.lane.b32.xlu0 %v789, 64
      %v1442 = vpop.permute.xlu0 %1441
      %1443 = vrot.lane.b32.xlu0 %v792, 64
      %v1444 = vpop.permute.xlu0 %1443
      %1445 = vrot.lane.b32.xlu0 %v794, 64
      %v1446 = vpop.permute.xlu0 %1445
      %1447 = vrot.lane.b32.xlu0 %v797, 64
      %v1448 = vpop.permute.xlu0 %1447
      %1449 = vrot.lane.b32.xlu0 %v799, 64
      %v1450 = vpop.permute.xlu0 %1449
      %1451 = vrot.lane.b32.xlu0 %v802, 64
      %v1452 = vpop.permute.xlu0 %1451
      %1453 = vrot.lane.b32.xlu0 %v804, 64
      %v1454 = vpop.permute.xlu0 %1453
      %1455 = vrot.lane.b32.xlu0 %v807, 64
      %v1456 = vpop.permute.xlu0 %1455
      %1457 = vrot.lane.b32.xlu0 %v809, 64
      %v1458 = vpop.permute.xlu0 %1457
      %1459 = vrot.lane.b32.xlu0 %v812, 64
      %v1460 = vpop.permute.xlu0 %1459
      %1461 = vrot.lane.b32.xlu0 %v814, 64
      %v1462 = vpop.permute.xlu0 %1461
      %1463 = vrot.lane.b32.xlu0 %v817, 64
      %v1464 = vpop.permute.xlu0 %1463
      %1465 = vrot.lane.b32.xlu0 %v819, 64
      %v1466 = vpop.permute.xlu0 %1465
      %1467 = vrot.lane.b32.xlu0 %v822, 64
      %v1468 = vpop.permute.xlu0 %1467
      %1469 = vrot.lane.b32.xlu0 %v824, 64
      %v1470 = vpop.permute.xlu0 %1469
      %1471 = vrot.lane.b32.xlu0 %v827, 64
      %v1472 = vpop.permute.xlu0 %1471
      %1473 = vrot.lane.b32.xlu0 %v829, 64
      %v1474 = vpop.permute.xlu0 %1473
      %1475 = vrot.lane.b32.xlu0 %v832, 64
      %v1476 = vpop.permute.xlu0 %1475
      %1477 = vrot.lane.b32.xlu0 %v834, 64
      %v1478 = vpop.permute.xlu0 %1477
      %1479 = vrot.lane.b32.xlu0 %v1132, 64
      %v1480 = vpop.permute.xlu0 %1479
      %1481 = vrot.lane.b32.xlu0 %v1134, 64
      %v1482 = vpop.permute.xlu0 %1481
      %1483 = vrot.lane.b32.xlu0 %v757, 64
      %v1484 = vpop.permute.xlu0 %1483
      %1485 = vrot.lane.b32.xlu0 %v759, 64
      %v1486 = vpop.permute.xlu0 %1485
      %vm1519 = vcmask 64512
      %v1520 = vsel %vm1519, %v511, %v659
      %v1521 = vsel %vm1519, %v413, %v661
      %v1522 = vsel %vm1519, %v512, %v663
      %v1523 = vsel %vm1519, %v416, %v665
      %v1524 = vsel %vm1519, %v513, %v667
      %v1525 = vsel %vm1519, %v419, %v669
      %v1526 = vsel %vm1519, %v514, %v671
      %v1527 = vsel %vm1519, %v422, %v673
      %v1528 = vsel %vm1519, %v515, %v675
      %v1529 = vsel %vm1519, %v425, %v677
      %v1530 = vsel %vm1519, %v516, %v679
      %v1531 = vsel %vm1519, %v428, %v681
      %v1532 = vsel %vm1519, %v517, %v683
      %v1533 = vsel %vm1519, %v431, %v685
      %v1534 = vsel %vm1519, %v518, %v687
      %v1535 = vsel %vm1519, %v434, %v689
      %v1536 = vsel %vm1519, %v519, %v691
      %v1537 = vsel %vm1519, %v437, %v693
      %v1538 = vsel %vm1519, %v520, %v695
      %v1539 = vsel %vm1519, %v440, %v697
      %v1540 = vsel %vm1519, %v521, %v699
      %v1541 = vsel %vm1519, %v443, %v701
      %v1542 = vsel %vm1519, %v522, %v703
      %v1543 = vsel %vm1519, %v446, %v705
      %v1544 = vsel %vm1519, %v523, %v707
      %v1545 = vsel %vm1519, %v449, %v709
      %v1546 = vsel %vm1519, %v524, %v711
      %v1547 = vsel %vm1519, %v452, %v713
      %v1548 = vsel %vm1519, %v525, %v715
      %v1549 = vsel %vm1519, %v455, %v717
      %v1550 = vsel %vm1519, %v526, %v719
      %v1551 = vsel %vm1519, %v458, %v721
      %vm1552 = vcmask 130048
      %v1553 = vsel %vm1552, %v1520, %v836
      %v1554 = vsel %vm1552, %v1521, %v838
      %v1555 = vsel %vm1552, %v1522, %v840
      %v1556 = vsel %vm1552, %v1523, %v842
      %v1557 = vsel %vm1552, %v1524, %v844
      %v1558 = vsel %vm1552, %v1525, %v846
      %v1559 = vsel %vm1552, %v1526, %v848
      %v1560 = vsel %vm1552, %v1527, %v850
      %v1561 = vsel %vm1552, %v1528, %v852
      %v1562 = vsel %vm1552, %v1529, %v854
      %v1563 = vsel %vm1552, %v1530, %v856
      %v1564 = vsel %vm1552, %v1531, %v858
      %v1565 = vsel %vm1552, %v1532, %v860
      %v1566 = vsel %vm1552, %v1533, %v862
      %v1567 = vsel %vm1552, %v1534, %v864
      %v1568 = vsel %vm1552, %v1535, %v866
      %v1569 = vsel %vm1552, %v1536, %v868
      %v1570 = vsel %vm1552, %v1537, %v870
      %v1571 = vsel %vm1552, %v1538, %v872
      %v1572 = vsel %vm1552, %v1539, %v874
      %v1573 = vsel %vm1552, %v1540, %v876
      %v1574 = vsel %vm1552, %v1541, %v878
      %v1575 = vsel %vm1552, %v1542, %v880
      %v1576 = vsel %vm1552, %v1543, %v882
      %v1577 = vsel %vm1552, %v1544, %v884
      %v1578 = vsel %vm1552, %v1545, %v886
      %v1579 = vsel %vm1552, %v1546, %v888
      %v1580 = vsel %vm1552, %v1547, %v890
      %v1581 = vsel %vm1552, %v1548, %v892
      %v1582 = vsel %vm1552, %v1549, %v894
      %v1583 = vsel %vm1552, %v1550, %v896
      %v1584 = vsel %vm1552, %v1551, %v898
      %vm1585 = vcmask 195584
      %v1586 = vsel %vm1585, %v1553, %v933
      %v1587 = vsel %vm1585, %v1554, %v935
      %v1588 = vsel %vm1585, %v1555, %v937
      %v1589 = vsel %vm1585, %v1556, %v939
      %v1590 = vsel %vm1585, %v1557, %v941
      %v1591 = vsel %vm1585, %v1558, %v943
      %v1592 = vsel %vm1585, %v1559, %v945
      %v1593 = vsel %vm1585, %v1560, %v947
      %v1594 = vsel %vm1585, %v1561, %v949
      %v1595 = vsel %vm1585, %v1562, %v951
      %v1596 = vsel %vm1585, %v1563, %v953
      %v1597 = vsel %vm1585, %v1564, %v955
      %v1598 = vsel %vm1585, %v1565, %v957
      %v1599 = vsel %vm1585, %v1566, %v959
      %v1600 = vsel %vm1585, %v1567, %v961
      %v1601 = vsel %vm1585, %v1568, %v963
      %v1602 = vsel %vm1585, %v1569, %v965
      %v1603 = vsel %vm1585, %v1570, %v967
      %v1604 = vsel %vm1585, %v1571, %v969
      %v1605 = vsel %vm1585, %v1572, %v971
      %v1606 = vsel %vm1585, %v1573, %v973
      %v1607 = vsel %vm1585, %v1574, %v975
      %v1608 = vsel %vm1585, %v1575, %v977
      %v1609 = vsel %vm1585, %v1576, %v979
      %v1610 = vsel %vm1585, %v1577, %v981
      %v1611 = vsel %vm1585, %v1578, %v983
      %v1612 = vsel %vm1585, %v1579, %v985
      %v1613 = vsel %vm1585, %v1580, %v987
      %v1614 = vsel %vm1585, %v1581, %v989
      %v1615 = vsel %vm1585, %v1582, %v991
      %v1616 = vsel %vm1585, %v1583, %v993
      %v1617 = vsel %vm1585, %v1584, %v995
      %vm1618 = vcmask 261120
      %v1619 = vsel %vm1618, %v1586, %v1035
      %v1620 = vsel %vm1618, %v1587, %v1037
      %v1621 = vsel %vm1618, %v1588, %v1039
      %v1622 = vsel %vm1618, %v1589, %v1041
      %v1623 = vsel %vm1618, %v1590, %v1043
      %v1624 = vsel %vm1618, %v1591, %v1045
      %v1625 = vsel %vm1618, %v1592, %v1047
      %v1626 = vsel %vm1618, %v1593, %v1049
      %v1627 = vsel %vm1618, %v1594, %v1051
      %v1628 = vsel %vm1618, %v1595, %v1053
      %v1629 = vsel %vm1618, %v1596, %v1055
      %v1630 = vsel %vm1618, %v1597, %v1057
      %v1631 = vsel %vm1618, %v1598, %v1059
      %v1632 = vsel %vm1618, %v1599, %v1061
      %v1633 = vsel %vm1618, %v1600, %v1063
      %v1634 = vsel %vm1618, %v1601, %v1065
      %v1635 = vsel %vm1618, %v1602, %v1067
      %v1636 = vsel %vm1618, %v1603, %v1069
      %v1637 = vsel %vm1618, %v1604, %v1071
      %v1638 = vsel %vm1618, %v1605, %v1073
      %v1639 = vsel %vm1618, %v1606, %v1075
      %v1640 = vsel %vm1618, %v1607, %v1077
      %v1641 = vsel %vm1618, %v1608, %v1079
      %v1642 = vsel %vm1618, %v1609, %v1081
      %v1643 = vsel %vm1618, %v1610, %v1083
      %v1644 = vsel %vm1618, %v1611, %v1085
      %v1645 = vsel %vm1618, %v1612, %v1087
      %v1646 = vsel %vm1618, %v1613, %v1089
      %v1647 = vsel %vm1618, %v1614, %v1091
      %v1648 = vsel %vm1618, %v1615, %v1093
      %v1649 = vsel %vm1618, %v1616, %v1095
      %v1650 = vsel %vm1618, %v1617, %v1097
      %vm1651 = vcmask 326656
      %v1652 = vsel %vm1651, %v1619, %v1136
      %v1653 = vsel %vm1651, %v1620, %v1138
      %v1654 = vsel %vm1651, %v1621, %v1140
      %v1655 = vsel %vm1651, %v1622, %v1142
      %v1656 = vsel %vm1651, %v1623, %v1144
      %v1657 = vsel %vm1651, %v1624, %v1146
      %v1658 = vsel %vm1651, %v1625, %v1148
      %v1659 = vsel %vm1651, %v1626, %v1150
      %v1660 = vsel %vm1651, %v1627, %v1152
      %v1661 = vsel %vm1651, %v1628, %v1154
      %v1662 = vsel %vm1651, %v1629, %v1156
      %v1663 = vsel %vm1651, %v1630, %v1158
      %v1664 = vsel %vm1651, %v1631, %v1160
      %v1665 = vsel %vm1651, %v1632, %v1162
      %v1666 = vsel %vm1651, %v1633, %v1164
      %v1667 = vsel %vm1651, %v1634, %v1166
      %v1668 = vsel %vm1651, %v1635, %v1168
      %v1669 = vsel %vm1651, %v1636, %v1170
      %v1670 = vsel %vm1651, %v1637, %v1172
      %v1671 = vsel %vm1651, %v1638, %v1174
      %v1672 = vsel %vm1651, %v1639, %v1176
      %v1673 = vsel %vm1651, %v1640, %v1178
      %v1674 = vsel %vm1651, %v1641, %v1180
      %v1675 = vsel %vm1651, %v1642, %v1182
      %v1676 = vsel %vm1651, %v1643, %v1184
      %v1677 = vsel %vm1651, %v1644, %v1186
      %v1678 = vsel %vm1651, %v1645, %v1188
      %v1679 = vsel %vm1651, %v1646, %v1190
      %v1680 = vsel %vm1651, %v1647, %v1192
      %v1681 = vsel %vm1651, %v1648, %v1194
      %v1682 = vsel %vm1651, %v1649, %v1196
      %v1683 = vsel %vm1651, %v1650, %v1198
      %vm1684 = vcmask 392192
      %v1685 = vsel %vm1684, %v1652, %v1232
      %v1686 = vsel %vm1684, %v1653, %v1234
      %v1687 = vsel %vm1684, %v1654, %v1236
      %v1688 = vsel %vm1684, %v1655, %v1238
      %v1689 = vsel %vm1684, %v1656, %v1240
      %v1690 = vsel %vm1684, %v1657, %v1242
      %v1691 = vsel %vm1684, %v1658, %v1244
      %v1692 = vsel %vm1684, %v1659, %v1246
      %v1693 = vsel %vm1684, %v1660, %v1248
      %v1694 = vsel %vm1684, %v1661, %v1250
      %v1695 = vsel %vm1684, %v1662, %v1252
      %v1696 = vsel %vm1684, %v1663, %v1254
      %v1697 = vsel %vm1684, %v1664, %v1256
      %v1698 = vsel %vm1684, %v1665, %v1258
      %v1699 = vsel %vm1684, %v1666, %v1260
      %v1700 = vsel %vm1684, %v1667, %v1262
      %v1701 = vsel %vm1684, %v1668, %v1264
      %v1702 = vsel %vm1684, %v1669, %v1266
      %v1703 = vsel %vm1684, %v1670, %v1268
      %v1704 = vsel %vm1684, %v1671, %v1270
      %v1705 = vsel %vm1684, %v1672, %v1272
      %v1706 = vsel %vm1684, %v1673, %v1274
      %v1707 = vsel %vm1684, %v1674, %v1276
      %v1708 = vsel %vm1684, %v1675, %v1278
      %v1709 = vsel %vm1684, %v1676, %v1280
      %v1710 = vsel %vm1684, %v1677, %v1282
      %v1711 = vsel %vm1684, %v1678, %v1284
      %v1712 = vsel %vm1684, %v1679, %v1286
      %v1713 = vsel %vm1684, %v1680, %v1288
      %v1714 = vsel %vm1684, %v1681, %v1290
      %v1715 = vsel %vm1684, %v1682, %v1292
      %v1716 = vsel %vm1684, %v1683, %v1294
      %vm1717 = vcmask 457728
      %v1718 = vsel %vm1717, %v1685, %v1328
      %v1719 = vsel %vm1717, %v1686, %v1330
      %v1720 = vsel %vm1717, %v1687, %v1332
      %v1721 = vsel %vm1717, %v1688, %v1334
      %v1722 = vsel %vm1717, %v1689, %v1336
      %v1723 = vsel %vm1717, %v1690, %v1338
      %v1724 = vsel %vm1717, %v1691, %v1340
      %v1725 = vsel %vm1717, %v1692, %v1342
      %v1726 = vsel %vm1717, %v1693, %v1344
      %v1727 = vsel %vm1717, %v1694, %v1346
      %v1728 = vsel %vm1717, %v1695, %v1348
      %v1729 = vsel %vm1717, %v1696, %v1350
      %v1730 = vsel %vm1717, %v1697, %v1352
      %v1731 = vsel %vm1717, %v1698, %v1354
      %v1732 = vsel %vm1717, %v1699, %v1356
      %v1733 = vsel %vm1717, %v1700, %v1358
      %v1734 = vsel %vm1717, %v1701, %v1360
      %v1735 = vsel %vm1717, %v1702, %v1362
      %v1736 = vsel %vm1717, %v1703, %v1364
      %v1737 = vsel %vm1717, %v1704, %v1366
      %v1738 = vsel %vm1717, %v1705, %v1368
      %v1739 = vsel %vm1717, %v1706, %v1370
      %v1740 = vsel %vm1717, %v1707, %v1372
      %v1741 = vsel %vm1717, %v1708, %v1374
      %v1742 = vsel %vm1717, %v1709, %v1376
      %v1743 = vsel %vm1717, %v1710, %v1378
      %v1744 = vsel %vm1717, %v1711, %v1380
      %v1745 = vsel %vm1717, %v1712, %v1382
      %v1746 = vsel %vm1717, %v1713, %v1384
      %v1747 = vsel %vm1717, %v1714, %v1386
      %v1748 = vsel %vm1717, %v1715, %v1388
      %v1749 = vsel %vm1717, %v1716, %v1390
      %vm1750 = vcmask 523264
      %v1751 = vsel %vm1750, %v1718, %v1424
      %v1752 = vsel %vm1750, %v1719, %v1426
      %v1753 = vsel %vm1750, %v1720, %v1428
      %v1754 = vsel %vm1750, %v1721, %v1430
      %v1755 = vsel %vm1750, %v1722, %v1432
      %v1756 = vsel %vm1750, %v1723, %v1434
      %v1757 = vsel %vm1750, %v1724, %v1436
      %v1758 = vsel %vm1750, %v1725, %v1438
      %v1759 = vsel %vm1750, %v1726, %v1440
      %v1760 = vsel %vm1750, %v1727, %v1442
      %v1761 = vsel %vm1750, %v1728, %v1444
      %v1762 = vsel %vm1750, %v1729, %v1446
      %v1763 = vsel %vm1750, %v1730, %v1448
      %v1764 = vsel %vm1750, %v1731, %v1450
      %v1765 = vsel %vm1750, %v1732, %v1452
      %v1766 = vsel %vm1750, %v1733, %v1454
      %v1767 = vsel %vm1750, %v1734, %v1456
      %v1768 = vsel %vm1750, %v1735, %v1458
      %v1769 = vsel %vm1750, %v1736, %v1460
      %v1770 = vsel %vm1750, %v1737, %v1462
      %v1771 = vsel %vm1750, %v1738, %v1464
      %v1772 = vsel %vm1750, %v1739, %v1466
      %v1773 = vsel %vm1750, %v1740, %v1468
      %v1774 = vsel %vm1750, %v1741, %v1470
      %v1775 = vsel %vm1750, %v1742, %v1472
      %v1776 = vsel %vm1750, %v1743, %v1474
      %v1777 = vsel %vm1750, %v1744, %v1476
      %v1778 = vsel %vm1750, %v1745, %v1478
      %v1779 = vsel %vm1750, %v1746, %v1480
      %v1780 = vsel %vm1750, %v1747, %v1482
      %v1781 = vsel %vm1750, %v1748, %v1484
      %v1782 = vsel %vm1750, %v1749, %v1486
      %v1783 = vld [vmem:[%s3] sm:$0xff]
      %v1784 = vld [vmem:[%s3 + $0x8] sm:$0xff]
      %v1785 = vld [vmem:[%s3 + $0x10] sm:$0xff]
      %v1786 = vld [vmem:[%s3 + $0x18] sm:$0xff]
      %v1787 = vld [vmem:[%s3 + $0x20] sm:$0xff]
      %v1788 = vld [vmem:[%s3 + $0x28] sm:$0xff]
      %v1789 = vld [vmem:[%s3 + $0x30] sm:$0xff]
      %v1790 = vld [vmem:[%s3 + $0x38] sm:$0xff]
      %v1791 = vld [vmem:[%s3 + $0x40] sm:$0xff]
      %vm1792 = vcmask 588800
      %v1794 = vsel %vm1792, %v1751, 0
      %v1797 = vsel %vm1792, %v1752, 0
      %v1800 = vsel %vm1792, %v1753, 0
      %v1803 = vsel %vm1792, %v1754, 0
      %v1806 = vsel %vm1792, %v1755, 0
      %v1809 = vsel %vm1792, %v1756, 0
      %v1812 = vsel %vm1792, %v1757, 0
      %v1815 = vsel %vm1792, %v1758, 0
      %v1818 = vsel %vm1792, %v1759, 0
      %v1821 = vsel %vm1792, %v1760, 0
      %v1824 = vsel %vm1792, %v1761, 0
      %v1827 = vsel %vm1792, %v1762, 0
      %v1830 = vsel %vm1792, %v1763, 0
      %v1833 = vsel %vm1792, %v1764, 0
      %v1836 = vsel %vm1792, %v1765, 0
      %v1839 = vsel %vm1792, %v1766, 0
      %v1842 = vsel %vm1792, %v1767, 0
      %v1845 = vsel %vm1792, %v1768, 0
      %v1848 = vsel %vm1792, %v1769, 0
      %v1851 = vsel %vm1792, %v1770, 0
      %v1854 = vsel %vm1792, %v1771, 0
      %v1857 = vsel %vm1792, %v1772, 0
      %v1860 = vsel %vm1792, %v1773, 0
      %v1863 = vsel %vm1792, %v1774, 0
      %v1866 = vsel %vm1792, %v1775, 0
      %v1869 = vsel %vm1792, %v1776, 0
      %v1872 = vsel %vm1792, %v1777, 0
      %v1875 = vsel %vm1792, %v1778, 0
      %v1878 = vsel %vm1792, %v1779, 0
      %v1881 = vsel %vm1792, %v1780, 0
      %v1884 = vsel %vm1792, %v1781, 0
      %v1887 = vsel %vm1792, %v1782, 0
      %1889 = vmatprep.subr.mxu0 0.0
      %1890 = vmatpush1.msra.mxu0 0.0
      %1891 = vmatprep.subr.mxu0 0.0
      %1892 = vmatpush1.msra.mxu0 0.0
      %1893 = vmatprep.subr.mxu0 0.0
      %1894 = vmatpush1.msra.mxu0 0.0
      %1895 = vmatprep.subr.mxu0 0.0
      %1896 = vmatpush1.msra.mxu0 0.0
      %1897 = vmatprep.subr.mxu0 0.0
      %1898 = vmatpush1.msra.mxu0 0.0
      %1899 = vmatprep.subr.mxu0 0.0
      %1900 = vmatpush1.msra.mxu0 0.0
      %1901 = vmatprep.subr.mxu0 0.0
      %1902 = vmatpush1.msra.mxu0 0.0
      %1903 = vmatprep.subr.mxu0 0.0
      %1904 = vmatpush1.msra.mxu0 %v1791
      %1905 = vmatprep.subr.mxu0 0.0
      %1906 = vmatpush1.msra.mxu0 %v1790
      %1907 = vmatprep.subr.mxu0 0.0
      %1908 = vmatpush1.msra.mxu0 %v1789
      %1909 = vmatprep.subr.mxu0 0.0
      %1910 = vmatpush1.msra.mxu0 %v1788
      %1911 = vmatprep.subr.mxu0 0.0
      %1912 = vmatpush1.msra.mxu0 %v1787
      %1913 = vmatprep.subr.mxu0 0.0
      %1914 = vmatpush1.msra.mxu0 %v1786
      %1915 = vmatprep.subr.mxu0 0.0
      %1916 = vmatpush1.msra.mxu0 %v1785
      %1917 = vmatprep.subr.mxu0 0.0
      %1918 = vmatpush1.msra.mxu0 %v1784
      %1919 = vmatprep.subr.mxu0 0.0
      %1920 = vmatpush1.msra.mxu0 %v1783
      %1921 = vmatprep.subr.mxu0 0.0
      %1922 = vmatpush2.msra.mxu0 0.0
      %1923 = vmatprep.subr.mxu0 0.0
      %1924 = vmatpush2.msra.mxu0 0.0
      %1925 = vmatprep.subr.mxu0 0.0
      %1926 = vmatpush2.msra.mxu0 0.0
      %1927 = vmatprep.subr.mxu0 0.0
      %1928 = vmatpush2.msra.mxu0 0.0
      %1929 = vmatprep.subr.mxu0 0.0
      %1930 = vmatpush2.msra.mxu0 0.0
      %1931 = vmatprep.subr.mxu0 0.0
      %1932 = vmatpush2.msra.mxu0 0.0
      %1933 = vmatprep.subr.mxu0 0.0
      %1934 = vmatpush2.msra.mxu0 0.0
      %1935 = vmatprep.subr.mxu0 0.0
      %1936 = vmatpush2.msra.mxu0 0.0
      %1937 = vmatprep.subr.mxu0 0.0
      %1938 = vmatpush2.msra.mxu0 0.0
      %1939 = vmatprep.subr.mxu0 0.0
      %1940 = vmatpush2.msra.mxu0 0.0
      %1941 = vmatprep.subr.mxu0 0.0
      %1942 = vmatpush2.msra.mxu0 0.0
      %1943 = vmatprep.subr.mxu0 0.0
      %1944 = vmatpush2.msra.mxu0 0.0
      %1945 = vmatprep.subr.mxu0 0.0
      %1946 = vmatpush2.msra.mxu0 0.0
      %1947 = vmatprep.subr.mxu0 0.0
      %1948 = vmatpush2.msra.mxu0 0.0
      %1949 = vmatprep.subr.mxu0 0.0
      %1950 = vmatpush2.msra.mxu0 0.0
      %1951 = vmatprep.subr.mxu0 0.0
      %1952 = vmatpush2.msra.mxu0 0.0
      %1953 = vmatprep.mubr.f32.mxu0 0.0
      %1954 = vmatmul.mubr.f32.gmra.mxu0 %v1794
      %v1955 = vpop.f32.mrf.mxu0
      %v1956 = vadd.f32 0.0, %v1955
      %v1957 = vpop.f32.mrf.mxu0
      %1958 = vmatprep.mubr.f32.mxu0 0.0
      %1959 = vmatmul.mubr.f32.gmra.mxu0 %v1797
      %v1960 = vpop.f32.mrf.mxu0
      %v1961 = vadd.f32 0.0, %v1960
      %v1962 = vpop.f32.mrf.mxu0
      %1963 = vmatprep.mubr.f32.mxu0 0.0
      %1964 = vmatmul.mubr.f32.gmra.mxu0 %v1800
      %v1965 = vpop.f32.mrf.mxu0
      %v1966 = vadd.f32 0.0, %v1965
      %v1967 = vpop.f32.mrf.mxu0
      %1968 = vmatprep.mubr.f32.mxu0 0.0
      %1969 = vmatmul.mubr.f32.gmra.mxu0 %v1803
      %v1970 = vpop.f32.mrf.mxu0
      %v1971 = vadd.f32 0.0, %v1970
      %v1972 = vpop.f32.mrf.mxu0
      %1973 = vmatprep.mubr.f32.mxu0 0.0
      %1974 = vmatmul.mubr.f32.gmra.mxu0 %v1806
      %v1975 = vpop.f32.mrf.mxu0
      %v1976 = vadd.f32 0.0, %v1975
      %v1977 = vpop.f32.mrf.mxu0
      %1978 = vmatprep.mubr.f32.mxu0 0.0
      %1979 = vmatmul.mubr.f32.gmra.mxu0 %v1809
      %v1980 = vpop.f32.mrf.mxu0
      %v1981 = vadd.f32 0.0, %v1980
      %v1982 = vpop.f32.mrf.mxu0
      %1983 = vmatprep.mubr.f32.mxu0 0.0
      %1984 = vmatmul.mubr.f32.gmra.mxu0 %v1812
      %v1985 = vpop.f32.mrf.mxu0
      %v1986 = vadd.f32 0.0, %v1985
      %v1987 = vpop.f32.mrf.mxu0
      %1988 = vmatprep.mubr.f32.mxu0 0.0
      %1989 = vmatmul.mubr.f32.gmra.mxu0 %v1815
      %v1990 = vpop.f32.mrf.mxu0
      %v1991 = vadd.f32 0.0, %v1990
      %v1992 = vpop.f32.mrf.mxu0
      %1993 = vmatprep.mubr.f32.mxu0 0.0
      %1994 = vmatmul.mubr.f32.gmra.mxu0 %v1818
      %v1995 = vpop.f32.mrf.mxu0
      %v1996 = vadd.f32 0.0, %v1995
      %v1997 = vpop.f32.mrf.mxu0
      %1998 = vmatprep.mubr.f32.mxu0 0.0
      %1999 = vmatmul.mubr.f32.gmra.mxu0 %v1821
      %v2000 = vpop.f32.mrf.mxu0
      %v2001 = vadd.f32 0.0, %v2000
      %v2002 = vpop.f32.mrf.mxu0
      %2003 = vmatprep.mubr.f32.mxu0 0.0
      %2004 = vmatmul.mubr.f32.gmra.mxu0 %v1824
      %v2005 = vpop.f32.mrf.mxu0
      %v2006 = vadd.f32 0.0, %v2005
      %v2007 = vpop.f32.mrf.mxu0
      %2008 = vmatprep.mubr.f32.mxu0 0.0
      %2009 = vmatmul.mubr.f32.gmra.mxu0 %v1827
      %v2010 = vpop.f32.mrf.mxu0
      %v2011 = vadd.f32 0.0, %v2010
      %v2012 = vpop.f32.mrf.mxu0
      %2013 = vmatprep.mubr.f32.mxu0 0.0
      %2014 = vmatmul.mubr.f32.gmra.mxu0 %v1830
      %v2015 = vpop.f32.mrf.mxu0
      %v2016 = vadd.f32 0.0, %v2015
      %v2017 = vpop.f32.mrf.mxu0
      %2018 = vmatprep.mubr.f32.mxu0 0.0
      %2019 = vmatmul.mubr.f32.gmra.mxu0 %v1833
      %v2020 = vpop.f32.mrf.mxu0
      %v2021 = vadd.f32 0.0, %v2020
      %v2022 = vpop.f32.mrf.mxu0
      %2023 = vmatprep.mubr.f32.mxu0 0.0
      %2024 = vmatmul.mubr.f32.gmra.mxu0 %v1836
      %v2025 = vpop.f32.mrf.mxu0
      %v2026 = vadd.f32 0.0, %v2025
      %v2027 = vpop.f32.mrf.mxu0
      %2028 = vmatprep.mubr.f32.mxu0 0.0
      %2029 = vmatmul.mubr.f32.gmra.mxu0 %v1839
      %v2030 = vpop.f32.mrf.mxu0
      %v2031 = vadd.f32 0.0, %v2030
      %v2032 = vpop.f32.mrf.mxu0
      %2033 = vmatprep.mubr.f32.mxu0 0.0
      %2034 = vmatmul.mubr.f32.gmra.mxu0 %v1842
      %v2035 = vpop.f32.mrf.mxu0
      %v2036 = vadd.f32 0.0, %v2035
      %v2037 = vpop.f32.mrf.mxu0
      %2038 = vmatprep.mubr.f32.mxu0 0.0
      %2039 = vmatmul.mubr.f32.gmra.mxu0 %v1845
      %v2040 = vpop.f32.mrf.mxu0
      %v2041 = vadd.f32 0.0, %v2040
      %v2042 = vpop.f32.mrf.mxu0
      %2043 = vmatprep.mubr.f32.mxu0 0.0
      %2044 = vmatmul.mubr.f32.gmra.mxu0 %v1848
      %v2045 = vpop.f32.mrf.mxu0
      %v2046 = vadd.f32 0.0, %v2045
      %v2047 = vpop.f32.mrf.mxu0
      %2048 = vmatprep.mubr.f32.mxu0 0.0
      %2049 = vmatmul.mubr.f32.gmra.mxu0 %v1851
      %v2050 = vpop.f32.mrf.mxu0
      %v2051 = vadd.f32 0.0, %v2050
      %v2052 = vpop.f32.mrf.mxu0
      %2053 = vmatprep.mubr.f32.mxu0 0.0
      %2054 = vmatmul.mubr.f32.gmra.mxu0 %v1854
      %v2055 = vpop.f32.mrf.mxu0
      %v2056 = vadd.f32 0.0, %v2055
      %v2057 = vpop.f32.mrf.mxu0
      %2058 = vmatprep.mubr.f32.mxu0 0.0
      %2059 = vmatmul.mubr.f32.gmra.mxu0 %v1857
      %v2060 = vpop.f32.mrf.mxu0
      %v2061 = vadd.f32 0.0, %v2060
      %v2062 = vpop.f32.mrf.mxu0
      %2063 = vmatprep.mubr.f32.mxu0 0.0
      %2064 = vmatmul.mubr.f32.gmra.mxu0 %v1860
      %v2065 = vpop.f32.mrf.mxu0
      %v2066 = vadd.f32 0.0, %v2065
      %v2067 = vpop.f32.mrf.mxu0
      %2068 = vmatprep.mubr.f32.mxu0 0.0
      %2069 = vmatmul.mubr.f32.gmra.mxu0 %v1863
      %v2070 = vpop.f32.mrf.mxu0
      %v2071 = vadd.f32 0.0, %v2070
      %v2072 = vpop.f32.mrf.mxu0
      %2073 = vmatprep.mubr.f32.mxu0 0.0
      %2074 = vmatmul.mubr.f32.gmra.mxu0 %v1866
      %v2075 = vpop.f32.mrf.mxu0
      %v2076 = vadd.f32 0.0, %v2075
      %v2077 = vpop.f32.mrf.mxu0
      %2078 = vmatprep.mubr.f32.mxu0 0.0
      %2079 = vmatmul.mubr.f32.gmra.mxu0 %v1869
      %v2080 = vpop.f32.mrf.mxu0
      %v2081 = vadd.f32 0.0, %v2080
      %v2082 = vpop.f32.mrf.mxu0
      %2083 = vmatprep.mubr.f32.mxu0 0.0
      %2084 = vmatmul.mubr.f32.gmra.mxu0 %v1872
      %v2085 = vpop.f32.mrf.mxu0
      %v2086 = vadd.f32 0.0, %v2085
      %v2087 = vpop.f32.mrf.mxu0
      %2088 = vmatprep.mubr.f32.mxu0 0.0
      %2089 = vmatmul.mubr.f32.gmra.mxu0 %v1875
      %v2090 = vpop.f32.mrf.mxu0
      %v2091 = vadd.f32 0.0, %v2090
      %v2092 = vpop.f32.mrf.mxu0
      %2093 = vmatprep.mubr.f32.mxu0 0.0
      %2094 = vmatmul.mubr.f32.gmra.mxu0 %v1878
      %v2095 = vpop.f32.mrf.mxu0
      %v2096 = vadd.f32 0.0, %v2095
      %v2097 = vpop.f32.mrf.mxu0
      %2098 = vmatprep.mubr.f32.mxu0 0.0
      %2099 = vmatmul.mubr.f32.gmra.mxu0 %v1881
      %v2100 = vpop.f32.mrf.mxu0
      %v2101 = vadd.f32 0.0, %v2100
      %v2102 = vpop.f32.mrf.mxu0
      %2103 = vmatprep.mubr.f32.mxu0 0.0
      %2104 = vmatmul.mubr.f32.gmra.mxu0 %v1884
      %v2105 = vpop.f32.mrf.mxu0
      %v2106 = vadd.f32 0.0, %v2105
      %v2107 = vpop.f32.mrf.mxu0
      %2108 = vmatprep.mubr.f32.mxu0 0.0
      %2109 = vmatmul.mubr.f32.gmra.mxu0 %v1887
      %v2110 = vpop.f32.mrf.mxu0
      %v2111 = vadd.f32 0.0, %v2110
      %v2112 = vpop.f32.mrf.mxu0
      %2113 = vdwg.mxu0
      %v2114 = vsel %vm1519, %v1956, 0.0
      %v2115 = vsel %vm1519, %v1961, 0.0
      %v2116 = vadd.f32 %v2114, %v2115
      %v2117 = vsel %vm1519, %v1966, 0.0
      %v2118 = vadd.f32 %v2116, %v2117
      %v2119 = vsel %vm1519, %v1971, 0.0
      %v2120 = vadd.f32 %v2118, %v2119
      %v2121 = vsel %vm1519, %v1976, 0.0
      %v2122 = vadd.f32 %v2120, %v2121
      %v2123 = vsel %vm1519, %v1981, 0.0
      %v2124 = vadd.f32 %v2122, %v2123
      %v2125 = vsel %vm1519, %v1986, 0.0
      %v2126 = vadd.f32 %v2124, %v2125
      %v2127 = vsel %vm1519, %v1991, 0.0
      %v2128 = vadd.f32 %v2126, %v2127
      %v2129 = vsel %vm1519, %v1996, 0.0
      %v2130 = vadd.f32 %v2128, %v2129
      %v2131 = vsel %vm1519, %v2001, 0.0
      %v2132 = vadd.f32 %v2130, %v2131
      %v2133 = vsel %vm1519, %v2006, 0.0
      %v2134 = vadd.f32 %v2132, %v2133
      %v2135 = vsel %vm1519, %v2011, 0.0
      %v2136 = vadd.f32 %v2134, %v2135
      %v2137 = vsel %vm1519, %v2016, 0.0
      %v2138 = vadd.f32 %v2136, %v2137
      %v2139 = vsel %vm1519, %v2021, 0.0
      %v2140 = vadd.f32 %v2138, %v2139
      %v2141 = vsel %vm1519, %v2026, 0.0
      %v2142 = vadd.f32 %v2140, %v2141
      %v2143 = vsel %vm1519, %v2031, 0.0
      %v2144 = vadd.f32 %v2142, %v2143
      %v2145 = vsel %vm1519, %v2036, 0.0
      %v2146 = vadd.f32 %v2144, %v2145
      %v2147 = vsel %vm1519, %v2041, 0.0
      %v2148 = vadd.f32 %v2146, %v2147
      %v2149 = vsel %vm1519, %v2046, 0.0
      %v2150 = vadd.f32 %v2148, %v2149
      %v2151 = vsel %vm1519, %v2051, 0.0
      %v2152 = vadd.f32 %v2150, %v2151
      %v2153 = vsel %vm1519, %v2056, 0.0
      %v2154 = vadd.f32 %v2152, %v2153
      %v2155 = vsel %vm1519, %v2061, 0.0
      %v2156 = vadd.f32 %v2154, %v2155
      %v2157 = vsel %vm1519, %v2066, 0.0
      %v2158 = vadd.f32 %v2156, %v2157
      %v2159 = vsel %vm1519, %v2071, 0.0
      %v2160 = vadd.f32 %v2158, %v2159
      %v2161 = vsel %vm1519, %v2076, 0.0
      %v2162 = vadd.f32 %v2160, %v2161
      %v2163 = vsel %vm1519, %v2081, 0.0
      %v2164 = vadd.f32 %v2162, %v2163
      %v2165 = vsel %vm1519, %v2086, 0.0
      %v2166 = vadd.f32 %v2164, %v2165
      %v2167 = vsel %vm1519, %v2091, 0.0
      %v2168 = vadd.f32 %v2166, %v2167
      %v2169 = vsel %vm1519, %v2096, 0.0
      %v2170 = vadd.f32 %v2168, %v2169
      %v2171 = vsel %vm1519, %v2101, 0.0
      %v2172 = vadd.f32 %v2170, %v2171
      %v2173 = vsel %vm1519, %v2106, 0.0
      %v2174 = vadd.f32 %v2172, %v2173
      %v2175 = vsel %vm1519, %v2111, 0.0
      %v2176 = vadd.f32 %v2174, %v2175
      %v2177 = vrot.slane %v2176, 4
      %v2178 = vadd.f32 %v2176, %v2177
      %v2179 = vrot.slane %v2178, 2
      %v2180 = vadd.f32 %v2178, %v2179
      %v2181 = vrot.slane %v2180, 1
      %v2182 = vadd.f32 %v2180, %v2181
      %v2183 = vmul.f32 %v1956, %v1956
      %v2184 = vmul.f32 %v1961, %v1961
      %v2185 = vmul.f32 %v1966, %v1966
      %v2186 = vmul.f32 %v1971, %v1971
      %v2187 = vmul.f32 %v1976, %v1976
      %v2188 = vmul.f32 %v1981, %v1981
      %v2189 = vmul.f32 %v1986, %v1986
      %v2190 = vmul.f32 %v1991, %v1991
      %v2191 = vmul.f32 %v1996, %v1996
      %v2192 = vmul.f32 %v2001, %v2001
      %v2193 = vmul.f32 %v2006, %v2006
      %v2194 = vmul.f32 %v2011, %v2011
      %v2195 = vmul.f32 %v2016, %v2016
      %v2196 = vmul.f32 %v2021, %v2021
      %v2197 = vmul.f32 %v2026, %v2026
      %v2198 = vmul.f32 %v2031, %v2031
      %v2199 = vmul.f32 %v2036, %v2036
      %v2200 = vmul.f32 %v2041, %v2041
      %v2201 = vmul.f32 %v2046, %v2046
      %v2202 = vmul.f32 %v2051, %v2051
      %v2203 = vmul.f32 %v2056, %v2056
      %v2204 = vmul.f32 %v2061, %v2061
      %v2205 = vmul.f32 %v2066, %v2066
      %v2206 = vmul.f32 %v2071, %v2071
      %v2207 = vmul.f32 %v2076, %v2076
      %v2208 = vmul.f32 %v2081, %v2081
      %v2209 = vmul.f32 %v2086, %v2086
      %v2210 = vmul.f32 %v2091, %v2091
      %v2211 = vmul.f32 %v2096, %v2096
      %v2212 = vmul.f32 %v2101, %v2101
      %v2213 = vmul.f32 %v2106, %v2106
      %v2214 = vmul.f32 %v2111, %v2111
      %v2215 = vsel %vm1519, %v2183, 0.0
      %v2216 = vsel %vm1519, %v2184, 0.0
      %v2217 = vadd.f32 %v2215, %v2216
      %v2218 = vsel %vm1519, %v2185, 0.0
      %v2219 = vadd.f32 %v2217, %v2218
      %v2220 = vsel %vm1519, %v2186, 0.0
      %v2221 = vadd.f32 %v2219, %v2220
      %v2222 = vsel %vm1519, %v2187, 0.0
      %v2223 = vadd.f32 %v2221, %v2222
      %v2224 = vsel %vm1519, %v2188, 0.0
      %v2225 = vadd.f32 %v2223, %v2224
      %v2226 = vsel %vm1519, %v2189, 0.0
      %v2227 = vadd.f32 %v2225, %v2226
      %v2228 = vsel %vm1519, %v2190, 0.0
      %v2229 = vadd.f32 %v2227, %v2228
      %v2230 = vsel %vm1519, %v2191, 0.0
      %v2231 = vadd.f32 %v2229, %v2230
      %v2232 = vsel %vm1519, %v2192, 0.0
      %v2233 = vadd.f32 %v2231, %v2232
      %v2234 = vsel %vm1519, %v2193, 0.0
      %v2235 = vadd.f32 %v2233, %v2234
      %v2236 = vsel %vm1519, %v2194, 0.0
      %v2237 = vadd.f32 %v2235, %v2236
      %v2238 = vsel %vm1519, %v2195, 0.0
      %v2239 = vadd.f32 %v2237, %v2238
      %v2240 = vsel %vm1519, %v2196, 0.0
      %v2241 = vadd.f32 %v2239, %v2240
      %v2242 = vsel %vm1519, %v2197, 0.0
      %v2243 = vadd.f32 %v2241, %v2242
      %v2244 = vsel %vm1519, %v2198, 0.0
      %v2245 = vadd.f32 %v2243, %v2244
      %v2246 = vsel %vm1519, %v2199, 0.0
      %v2247 = vadd.f32 %v2245, %v2246
      %v2248 = vsel %vm1519, %v2200, 0.0
      %v2249 = vadd.f32 %v2247, %v2248
      %v2250 = vsel %vm1519, %v2201, 0.0
      %v2251 = vadd.f32 %v2249, %v2250
      %v2252 = vsel %vm1519, %v2202, 0.0
      %v2253 = vadd.f32 %v2251, %v2252
      %v2254 = vsel %vm1519, %v2203, 0.0
      %v2255 = vadd.f32 %v2253, %v2254
      %v2256 = vsel %vm1519, %v2204, 0.0
      %v2257 = vadd.f32 %v2255, %v2256
      %v2258 = vsel %vm1519, %v2205, 0.0
      %v2259 = vadd.f32 %v2257, %v2258
      %v2260 = vsel %vm1519, %v2206, 0.0
      %v2261 = vadd.f32 %v2259, %v2260
      %v2262 = vsel %vm1519, %v2207, 0.0
      %v2263 = vadd.f32 %v2261, %v2262
      %v2264 = vsel %vm1519, %v2208, 0.0
      %v2265 = vadd.f32 %v2263, %v2264
      %v2266 = vsel %vm1519, %v2209, 0.0
      %v2267 = vadd.f32 %v2265, %v2266
      %v2268 = vsel %vm1519, %v2210, 0.0
      %v2269 = vadd.f32 %v2267, %v2268
      %v2270 = vsel %vm1519, %v2211, 0.0
      %v2271 = vadd.f32 %v2269, %v2270
      %v2272 = vsel %vm1519, %v2212, 0.0
      %v2273 = vadd.f32 %v2271, %v2272
      %v2274 = vsel %vm1519, %v2213, 0.0
      %v2275 = vadd.f32 %v2273, %v2274
      %v2276 = vsel %vm1519, %v2214, 0.0
      %v2277 = vadd.f32 %v2275, %v2276
      %v2278 = vrot.slane %v2277, 4
      %v2279 = vadd.f32 %v2277, %v2278
      %v2280 = vrot.slane %v2279, 2
      %v2281 = vadd.f32 %v2279, %v2280
      %v2282 = vrot.slane %v2281, 1
      %v2283 = vadd.f32 %v2281, %v2282
      %2284 = vst.msk [vmem:[%s231] sm:$0xff] %vm1519, %v1956
      %2285 = vst.msk [vmem:[%s231 + $0x8] sm:$0xff] %vm1519, %v1961
      %2286 = vst.msk [vmem:[%s231 + $0x10] sm:$0xff] %vm1519, %v1966
      %2287 = vst.msk [vmem:[%s231 + $0x18] sm:$0xff] %vm1519, %v1971
      %2288 = vst.msk [vmem:[%s231 + $0x20] sm:$0xff] %vm1519, %v1976
      %2289 = vst.msk [vmem:[%s231 + $0x28] sm:$0xff] %vm1519, %v1981
      %2290 = vst.msk [vmem:[%s231 + $0x30] sm:$0xff] %vm1519, %v1986
      %2291 = vst.msk [vmem:[%s231 + $0x38] sm:$0xff] %vm1519, %v1991
      %2292 = vst.msk [vmem:[%s231 + $0x40] sm:$0xff] %vm1519, %v1996
      %2293 = vst.msk [vmem:[%s231 + $0x48] sm:$0xff] %vm1519, %v2001
      %2294 = vst.msk [vmem:[%s231 + $0x50] sm:$0xff] %vm1519, %v2006
      %2295 = vst.msk [vmem:[%s231 + $0x58] sm:$0xff] %vm1519, %v2011
      %2296 = vst.msk [vmem:[%s231 + $0x60] sm:$0xff] %vm1519, %v2016
      %2297 = vst.msk [vmem:[%s231 + $0x68] sm:$0xff] %vm1519, %v2021
      %2298 = vst.msk [vmem:[%s231 + $0x70] sm:$0xff] %vm1519, %v2026
      %2299 = vst.msk [vmem:[%s231 + $0x78] sm:$0xff] %vm1519, %v2031
      %2300 = vst.msk [vmem:[%s231 + $0x80] sm:$0xff] %vm1519, %v2036
      %2301 = vst.msk [vmem:[%s231 + $0x88] sm:$0xff] %vm1519, %v2041
      %2302 = vst.msk [vmem:[%s231 + $0x90] sm:$0xff] %vm1519, %v2046
      %2303 = vst.msk [vmem:[%s231 + $0x98] sm:$0xff] %vm1519, %v2051
      %2304 = vst.msk [vmem:[%s231 + $0xa0] sm:$0xff] %vm1519, %v2056
      %2305 = vst.msk [vmem:[%s231 + $0xa8] sm:$0xff] %vm1519, %v2061
      %2306 = vst.msk [vmem:[%s231 + $0xb0] sm:$0xff] %vm1519, %v2066
      %2307 = vst.msk [vmem:[%s231 + $0xb8] sm:$0xff] %vm1519, %v2071
      %2308 = vst.msk [vmem:[%s231 + $0xc0] sm:$0xff] %vm1519, %v2076
      %2309 = vst.msk [vmem:[%s231 + $0xc8] sm:$0xff] %vm1519, %v2081
      %2310 = vst.msk [vmem:[%s231 + $0xd0] sm:$0xff] %vm1519, %v2086
      %2311 = vst.msk [vmem:[%s231 + $0xd8] sm:$0xff] %vm1519, %v2091
      %2312 = vst.msk [vmem:[%s231 + $0xe0] sm:$0xff] %vm1519, %v2096
      %2313 = vst.msk [vmem:[%s231 + $0xe8] sm:$0xff] %vm1519, %v2101
      %2314 = vst.msk [vmem:[%s231 + $0xf0] sm:$0xff] %vm1519, %v2106
      %2315 = vst.msk [vmem:[%s231 + $0xf8] sm:$0xff] %vm1519, %v2111
      %v2316 = vsel %vm411, %v2182, %v2283
      %vm2317 = vcmask 58368
      %2318 = vst.msk [vmem:[%s235] sm:$0x3] %vm2317, %v2316
      %p2319 = scmp.lt.s32.totalorder %s17, 1
      %s2320 = scalar_select %p2319, %s17, 1
      %s2321 = smul.addr %s2320, 32
      %s2322 = smul.addr %s2321, 8
      %s2323 = scalar_lea.vmem %s4, %s2322
      %p2324 = scmp.lt.s32.totalorder %s17, 1
      %s2325 = scalar_select %p2324, %s17, 1
      %s2326 = smul.addr %s2325, 2
      %s2327 = scalar_lea.vmem %s5, %s2326
      // Predicated region
      $region37: #{double_conv.4} parent=35 // pred_check
        %p2328 = pneg %p124
      $region38: #{double_conv.4} parent=35 // pred_check_branch
        %2330 = sbr.rel (%p2328) target = $region40
      $region39: #{double_conv.4} parent=35 // pred_region
        _
      $region40: #{double_conv.4} parent=35 // pred_fallthru
        _
      // Predicated region
      $region41: #{double_conv.4} parent=35 // pred_check
        %p2331 = pneg %p150
      $region42: #{double_conv.4} parent=35 // pred_check_branch
        %2333 = sbr.rel (%p2331) target = $region44
      $region43: #{double_conv.4} parent=35 // pred_region
        _
      $region44: #{double_conv.4} parent=35 // pred_fallthru
        _
    $region36: #{double_conv.4} parent=5 // pred_fallthru
      _
    %p2334 = scmp.le.s32.totalorder 2, %s12
    // Predicated region
    $region45: #{double_conv.4} parent=5 // pred_check
      %p2335 = pneg %p2334
    $region46: #{double_conv.4} parent=5 // pred_check_branch
      %2337 = sbr.rel (%p2335) target = $region48
    $region47: #{double_conv.4} parent=5 // pred_region
      %s2338 = ssub.s32 %s12, 2
      // Predicated region
      $region49: #{double_conv.4} parent=47 // pred_check
        %p2339 = pneg %p130
      $region50: #{double_conv.4} parent=47 // pred_check_branch
        %2341 = sbr.rel (%p2339) target = $region52
      $region51: #{double_conv.4} parent=47 // pred_region
        %p2342 = scmp.lt.s32.totalorder %s18, 1
        %s2343 = scalar_select %p2342, %s18, 1
        %s2344 = smul.addr %s2343, 32
        %s2345 = smul.addr %s2344, 8
        %s2346 = scalar_lea.vmem %s4, %s2345
      $region52: #{double_conv.4} parent=47 // pred_fallthru
        _
      // Predicated region
      $region53: #{double_conv.4} parent=47 // pred_check
        %p2347 = pneg %p156
      $region54: #{double_conv.4} parent=47 // pred_check_branch
        %2349 = sbr.rel (%p2347) target = $region56
      $region55: #{double_conv.4} parent=47 // pred_region
        %p2350 = scmp.lt.s32.totalorder %s18, 1
        %s2351 = scalar_select %p2350, %s18, 1
        %s2352 = smul.addr %s2351, 2
        %s2353 = scalar_lea.vmem %s5, %s2352
      $region56: #{double_conv.4} parent=47 // pred_fallthru
        _
    $region48: #{double_conv.4} parent=5 // pred_fallthru
      _
  $region6: #{double_conv.4} parent=0 // loop_footer
    %s16 = sadd.s32 1, %s12
  $region7: #{double_conv.4} parent=0 // loop_footer_branch
    %11 = sbr.rel target = $region3
  $region8: #{double_conv.4} parent=0 // loop_exit
    _

</llo_original>
